<compile_context>
chip_gen: v5e
topology: v5e:2x2
jax: 0.10.0
libtpu: 0.0.40
codegen_flags: <defaults>
</compile_context>

<pallas_src>
import functools

import jax
import jax.numpy as jnp
from jax import lax
from jax.experimental import pallas as pl
from jax.experimental.pallas import tpu as pltpu

RELU6_MAX = 6.0
BN_EPS = 1e-5
MXU_MIN_K = 32   # below this contraction width, do the 1x1 conv on the VPU


def _vmem_limit_bytes():
    """Scoped-VMEM limit sized per generation (64 MiB physical on v7x,
    128 MiB on v5e/v6e), with a conservative fallback that is safe on all."""
    try:
        phys = pltpu.get_tpu_info().vmem_capacity_bytes
        return int(min(phys * 3 // 4, 100 * 1024 * 1024))
    except Exception:  # info query is best-effort
        return 48 * 1024 * 1024


# --------------------------------------------------------------------------
# Kernel
# --------------------------------------------------------------------------
def _conv1x1(x3d, w_ref):
    """Pointwise conv: (A, B, K) f32  x  (K, C)  ->  (A, B, C) f32.

    Wide K  -> bf16 MXU matmul with f32 accumulation.
    Tiny K  -> VPU broadcast-MAC (a K=4..8 contraction would use <4% of the
               systolic array and pay full MXU push/pop latency).
    """
    K, C = w_ref.shape
    if w_ref.dtype == jnp.bfloat16:
        A, B, _ = x3d.shape
        y = jnp.dot(x3d.reshape(A * B, K).astype(jnp.bfloat16), w_ref[...],
                    preferred_element_type=jnp.float32)
        return y.reshape(A, B, C)
    w = w_ref[...]
    acc = x3d[:, :, 0:1] * w[0, :]
    for k in range(1, K):
        acc = acc + x3d[:, :, k:k + 1] * w[k, :]
    return acc


def _fused_block_kernel(xa_ref, xb_ref, w1_ref, s1_ref, b1_ref, wdw_ref,
                        b2_ref, w3_ref, s3_ref, b3_ref, o_ref, xwin_ref, *,
                        stride, tho, thi, H, W, Wo, use_res):
    """One (batch, row-tile) step of the fused InvertedResidual block.

    xa_ref:   (1, thi, W+2, cin)  rows [i*thi, (i+1)*thi) of the padded input
    xb_ref:   (1, 2,   W+2, cin)  the 2-row halo just below this tile
    o_ref:    (1, tho, Wo,  cout) output rows [i*tho, (i+1)*tho)
    xwin_ref: (thi+2, W+2, cin)   VMEM scratch: assembled halo window
    """
    Wp = W + 2
    rows = thi + 2
    hidden = w1_ref.shape[1]

    # ---- assemble the input window (tile + 2-row bottom halo) in VMEM ----
    xwin_ref[0:thi] = xa_ref[0]
    xwin_ref[thi:rows] = xb_ref[0]
    xw = xwin_ref[...]                                    # (rows, Wp, cin)

    # ---- stage 1: 1x1 expand + BN + ReLU6 (stays in VMEM) ----
    h = _conv1x1(xw, w1_ref)                              # (rows, Wp, hidden)
    h = jnp.clip(h * s1_ref[0] + b1_ref[0], 0.0, RELU6_MAX)

    # Zero the positions that correspond to the depthwise conv's zero padding
    # (the BN bias would otherwise leak nonzero values into the halo).
    row0 = pl.program_id(1) * thi
    gr = lax.broadcasted_iota(jnp.int32, (rows, Wp, 1), 0) + row0
    gc = lax.broadcasted_iota(jnp.int32, (rows, Wp, 1), 1)
    inside = (gr >= 1) & (gr <= H) & (gc >= 1) & (gc <= W)
    h = jnp.where(inside, h, 0.0)

    # ---- stage 2: 3x3 depthwise (stride applied here) + BN + ReLU6 ----
    # wdw_ref already carries the BN scale (w * s2); only the bias remains.
    w_dw = wdw_ref[...]                                   # (3, 3, hidden)
    acc = jnp.zeros((tho, Wo, hidden), jnp.float32)
    for dy in range(3):
        for dx in range(3):
            if stride == 1:
                tap = h[dy:dy + tho, dx:dx + Wo, :]
            else:
                tap = h[dy:dy + (tho - 1) * stride + 1:stride,
                        dx:dx + (Wo - 1) * stride + 1:stride, :]
            # TODO(synk): the dx shifts could use pltpu.roll (XLU slot) instead
            # of shifted sublane slices once the roll direction is pinned down.
            acc = acc + tap * w_dw[dy, dx, :]
    g = jnp.clip(acc + b2_ref[0], 0.0, RELU6_MAX)         # (tho, Wo, hidden)

    # ---- stage 3: 1x1 project + BN (+ residual) ----
    y = _conv1x1(g, w3_ref)                               # (tho, Wo, cout)
    y = y * s3_ref[0] + b3_ref[0]
    if use_res:   # stride == 1 and cin == cout: residual comes from the window
        y = y + xw[1:1 + tho, 1:1 + W, :]
    o_ref[0] = y


# --------------------------------------------------------------------------
# Wrapper
# --------------------------------------------------------------------------
def inverted_residual_forward(x_nchw, params, *, stride, inp, oup, row_tile=8):
    """Forward pass of the InvertedResidual block.  x_nchw: (N, inp, H, W)."""
    N, cin, H, W = x_nchw.shape
    assert cin == inp
    hidden = params["w1"].shape[1]
    use_res = (stride == 1) and (inp == oup)

    x = jnp.transpose(x_nchw, (0, 2, 3, 1)).astype(jnp.float32)     # -> NHWC

    Ho = (H - 1) // stride + 1       # k=3, pad=1 output extent
    Wo = (W - 1) // stride + 1
    Wp = W + 2

    # Output-row tile (kept even so the 2-row halo fetch lands on a block
    # boundary); ragged Ho is handled by padding output rows and slicing.
    tho = max(2, min(row_tile, Ho))
    tho += tho % 2
    thi = tho * stride               # input rows consumed per output tile
    nt = pl.cdiv(Ho, tho)

    # Pad only the narrow input x (cheap): 1 halo row/col of zeros plus enough
    # extra bottom rows that every tile's halo fetch stays in range.  The wide
    # `hidden` activation is never padded nor written to HBM.
    Hp = max(nt * thi + 2, H + 2)
    Hp = ((Hp + thi - 1) // thi) * thi
    xp = jnp.pad(x, ((0, 0), (1, Hp - H - 1), (1, 1), (0, 0)))

    # Fold BN into scale/bias; fold the depthwise BN scale into its weights.
    s1 = params["s1"].reshape(1, hidden)
    b1 = params["b1"].reshape(1, hidden)
    wdw = params["w_dw"] * params["s2"].reshape(1, 1, hidden)
    b2 = params["b2"].reshape(1, hidden)
    s3 = params["s3"].reshape(1, oup)
    b3 = params["b3"].reshape(1, oup)
    # bf16 weights (MXU path) only when the contraction is wide enough.
    w1 = params["w1"].astype(jnp.bfloat16) if cin >= MXU_MIN_K else params["w1"]
    w3 = params["w3"].astype(jnp.bfloat16) if hidden >= MXU_MIN_K else params["w3"]

    kernel = functools.partial(
        _fused_block_kernel, stride=stride, tho=tho, thi=thi, H=H, W=W, Wo=Wo,
        use_res=use_res)

    rep2 = lambda n, i: (0, 0)
    rep3 = lambda n, i: (0, 0, 0)

    out = pl.pallas_call(
        kernel,
        out_shape=jax.ShapeDtypeStruct((N, nt * tho, Wo, oup), jnp.float32),
        grid=(N, nt),
        in_specs=[
            # main row tile of the padded input
            pl.BlockSpec((1, thi, Wp, cin), lambda n, i: (n, i, 0, 0)),
            # 2-row halo just below the tile (same array, 2-row blocking)
            pl.BlockSpec((1, 2, Wp, cin),
                         lambda n, i: (n, (i + 1) * (thi // 2), 0, 0)),
            pl.BlockSpec((cin, hidden), rep2),       # w1
            pl.BlockSpec((1, hidden), rep2),         # s1
            pl.BlockSpec((1, hidden), rep2),         # b1
            pl.BlockSpec((3, 3, hidden), rep3),      # w_dw * s2
            pl.BlockSpec((1, hidden), rep2),         # b2
            pl.BlockSpec((hidden, oup), rep2),       # w3
            pl.BlockSpec((1, oup), rep2),            # s3
            pl.BlockSpec((1, oup), rep2),            # b3
        ],
        out_specs=pl.BlockSpec((1, tho, Wo, oup), lambda n, i: (n, i, 0, 0)),
        scratch_shapes=[pltpu.VMEM((thi + 2, Wp, cin), jnp.float32)],
        compiler_params=pltpu.CompilerParams(
            dimension_semantics=("parallel", "parallel"),
            vmem_limit_bytes=_vmem_limit_bytes()),
    )(xp, xp, w1, s1, b1, wdw, b2, w3, s3, b3)

    out = out[:, :Ho]                                  # drop padded tile rows
    return jnp.transpose(out, (0, 3, 1, 2))            # NHWC -> NCHW


# --------------------------------------------------------------------------
# Parameters (deterministic) and pure-JAX reference (mirrors PyTorch eval mode)
# --------------------------------------------------------------------------
def make_params(key, inp, oup, expand_ratio):
    hidden = inp * expand_ratio
    keys = jax.random.split(key, 6)

    def bn(k, c):
        k1, k2, k3, k4 = jax.random.split(k, 4)
        gamma = 1.0 + 0.1 * jax.random.normal(k1, (c,), jnp.float32)
        beta = 0.1 * jax.random.normal(k2, (c,), jnp.float32)
        mean = 0.1 * jax.random.normal(k3, (c,), jnp.float32)
        var = jax.random.uniform(k4, (c,), jnp.float32, minval=0.5, maxval=1.5)
        scale = gamma / jnp.sqrt(var + BN_EPS)
        bias = beta - mean * scale
        return scale, bias

    w1 = 0.5 * jax.random.normal(keys[0], (inp, hidden), jnp.float32)      # 1x1 expand
    w_dw = 0.5 * jax.random.normal(keys[1], (3, 3, hidden), jnp.float32)   # depthwise 3x3
    w3 = 0.5 * jax.random.normal(keys[2], (hidden, oup), jnp.float32)      # 1x1 project
    s1, b1 = bn(keys[3], hidden)
    s2, b2 = bn(keys[4], hidden)
    s3, b3 = bn(keys[5], oup)
    return dict(w1=w1, w_dw=w_dw, w3=w3, s1=s1, b1=b1, s2=s2, b2=b2, s3=s3, b3=b3)


def ref_forward(x, params, *, stride, inp, oup):
    hidden = params["w1"].shape[1]
    w1 = params["w1"].T[:, :, None, None]                                  # (hidden, inp, 1, 1)
    w_dw = jnp.transpose(params["w_dw"], (2, 0, 1))[:, None, :, :]         # (hidden, 1, 3, 3)
    w3 = params["w3"].T[:, :, None, None]                                  # (oup, hidden, 1, 1)

    def conv(a, w, s, p, groups):
        return lax.conv_general_dilated(
            a, w, (s, s), [(p, p), (p, p)],
            feature_group_count=groups,
            dimension_numbers=("NCHW", "OIHW", "NCHW"))

    def bn(a, s, b):
        return a * s[None, :, None, None] + b[None, :, None, None]

    h = jnp.clip(bn(conv(x, w1, 1, 0, 1), params["s1"], params["b1"]), 0.0, 6.0)
    h = jnp.clip(bn(conv(h, w_dw, stride, 1, hidden), params["s2"], params["b2"]), 0.0, 6.0)
    h = bn(conv(h, w3, 1, 0, 1), params["s3"], params["b3"])
    if stride == 1 and inp == oup:
        h = x + h
    return h


# --------------------------------------------------------------------------
if __name__ == "__main__":
    inp, oup, stride, expand_ratio, block_size = 4, 4, 1, 2, 4  # block_size unused (see TODO)
    N, H, W = 2, 16, 16

    key = jax.random.PRNGKey(0)
    kx, kp = jax.random.split(key)
    x = jax.random.normal(kx, (N, inp, H, W), jnp.float32)      # NCHW, like PyTorch
    params = make_params(kp, inp, oup, expand_ratio)

    fwd = jax.jit(functools.partial(inverted_residual_forward,
                                    stride=stride, inp=inp, oup=oup))
    out = jax.block_until_ready(fwd(x, params))

    ref = jax.block_until_ready(ref_forward(x, params, stride=stride, inp=inp, oup=oup))
    assert out.shape == ref.shape, (out.shape, ref.shape)
    err = float(jnp.max(jnp.abs(out - ref)))
    assert jnp.allclose(out, ref, atol=1e-4, rtol=1e-4), err

    print("KERNEL_OK")
</pallas_src>

<mosaic_0001>
module attributes {stable_mosaic.version = 11 : i64} {
  func.func @_fused_block_kernel(%arg0: i32, %arg1: i32, %arg2: memref<1x8x18x4xf32, #tpu.memory_space<vmem>>, %arg3: memref<1x2x18x4xf32, #tpu.memory_space<vmem>>, %arg4: memref<4x8xf32, #tpu.memory_space<vmem>>, %arg5: memref<1x8xf32, #tpu.memory_space<vmem>>, %arg6: memref<1x8xf32, #tpu.memory_space<vmem>>, %arg7: memref<3x3x8xf32, #tpu.memory_space<vmem>>, %arg8: memref<1x8xf32, #tpu.memory_space<vmem>>, %arg9: memref<8x4xf32, #tpu.memory_space<vmem>>, %arg10: memref<1x4xf32, #tpu.memory_space<vmem>>, %arg11: memref<1x4xf32, #tpu.memory_space<vmem>>, %arg12: memref<1x8x16x4xf32, #tpu.memory_space<vmem>>, %arg13: memref<10x18x4xf32, #tpu.memory_space<vmem>>) attributes {dimension_semantics = [#tpu.dimension_semantics<parallel>, #tpu.dimension_semantics<parallel>], iteration_bounds = array<i64: 2, 2>, scalar_prefetch = 0 : i64, scratch_operands = 1 : i64, tpu.core_type = #tpu.core_type<tc>, window_params = [{transform_indices = @transform_0, window_bounds = array<i64: 1, 8, 18, 4>}, {transform_indices = @transform_1, window_bounds = array<i64: 1, 2, 18, 4>}, {pipeline_mode = #tpu.pipeline_mode<synchronous>, transform_indices = @transform_2, window_bounds = array<i64: 4, 8>}, {pipeline_mode = #tpu.pipeline_mode<synchronous>, transform_indices = @transform_3, window_bounds = array<i64: 1, 8>}, {pipeline_mode = #tpu.pipeline_mode<synchronous>, transform_indices = @transform_4, window_bounds = array<i64: 1, 8>}, {pipeline_mode = #tpu.pipeline_mode<synchronous>, transform_indices = @transform_5, window_bounds = array<i64: 3, 3, 8>}, {pipeline_mode = #tpu.pipeline_mode<synchronous>, transform_indices = @transform_6, window_bounds = array<i64: 1, 8>}, {pipeline_mode = #tpu.pipeline_mode<synchronous>, transform_indices = @transform_7, window_bounds = array<i64: 8, 4>}, {pipeline_mode = #tpu.pipeline_mode<synchronous>, transform_indices = @transform_8, window_bounds = array<i64: 1, 4>}, {pipeline_mode = #tpu.pipeline_mode<synchronous>, transform_indices = @transform_9, window_bounds = array<i64: 1, 4>}, {transform_indices = @transform_10, window_bounds = array<i64: 1, 8, 16, 4>}]} {
    %c0 = arith.constant 0 : index
    %c0_0 = arith.constant 0 : index
    %c0_1 = arith.constant 0 : index
    %c0_2 = arith.constant 0 : index
    %0 = vector.load %arg2[%c0, %c0_0, %c0_1, %c0_2] : memref<1x8x18x4xf32, #tpu.memory_space<vmem>>, vector<1x8x18x4xf32>
    %1 = vector.shape_cast %0 : vector<1x8x18x4xf32> to vector<8x18x4xf32>
    %c0_3 = arith.constant 0 : index
    %c0_4 = arith.constant 0 : index
    %c0_5 = arith.constant 0 : index
    %2 = vector.load %arg13[%c0_3, %c0_4, %c0_5] : memref<10x18x4xf32, #tpu.memory_space<vmem>>, vector<8x18x4xf32>
    tpu.vector_store %arg13[%c0_3, %c0_4, %c0_5], %1 {strides = array<i32>} : memref<10x18x4xf32, #tpu.memory_space<vmem>>, vector<8x18x4xf32>,
    %c0_6 = arith.constant 0 : index
    %c0_7 = arith.constant 0 : index
    %c0_8 = arith.constant 0 : index
    %c0_9 = arith.constant 0 : index
    %3 = vector.load %arg3[%c0_6, %c0_7, %c0_8, %c0_9] : memref<1x2x18x4xf32, #tpu.memory_space<vmem>>, vector<1x2x18x4xf32>
    %4 = vector.shape_cast %3 : vector<1x2x18x4xf32> to vector<2x18x4xf32>
    %c8 = arith.constant 8 : index
    %c0_10 = arith.constant 0 : index
    %c0_11 = arith.constant 0 : index
    %5 = vector.load %arg13[%c8, %c0_10, %c0_11] : memref<10x18x4xf32, #tpu.memory_space<vmem>>, vector<2x18x4xf32>
    tpu.vector_store %arg13[%c8, %c0_10, %c0_11], %4 {strides = array<i32>} : memref<10x18x4xf32, #tpu.memory_space<vmem>>, vector<2x18x4xf32>,
    %c0_12 = arith.constant 0 : index
    %c0_13 = arith.constant 0 : index
    %c0_14 = arith.constant 0 : index
    %6 = vector.load %arg13[%c0_12, %c0_13, %c0_14] : memref<10x18x4xf32, #tpu.memory_space<vmem>>, vector<10x18x4xf32>
    %c0_15 = arith.constant 0 : index
    %c0_16 = arith.constant 0 : index
    %7 = vector.load %arg4[%c0_15, %c0_16] : memref<4x8xf32, #tpu.memory_space<vmem>>, vector<4x8xf32>
    %8 = vector.extract_strided_slice %6 {offsets = [0, 0, 0], sizes = [10, 18, 1], strides = [1, 1, 1]} : vector<10x18x4xf32> to vector<10x18x1xf32>
    %9 = vector.extract_strided_slice %7 {offsets = [0, 0], sizes = [1, 8], strides = [1, 1]} : vector<4x8xf32> to vector<1x8xf32>
    %10 = vector.shape_cast %9 : vector<1x8xf32> to vector<8xf32>
    %11 = vector.shape_cast %10 : vector<8xf32> to vector<1x1x8xf32>
    %12 = vector.broadcast %8 : vector<10x18x1xf32> to vector<10x18x8xf32>
    %13 = vector.broadcast %11 : vector<1x1x8xf32> to vector<10x18x8xf32>
    %14 = arith.mulf %12, %13 : vector<10x18x8xf32>
    %15 = vector.extract_strided_slice %6 {offsets = [0, 0, 1], sizes = [10, 18, 1], strides = [1, 1, 1]} : vector<10x18x4xf32> to vector<10x18x1xf32>
    %16 = vector.extract_strided_slice %7 {offsets = [1, 0], sizes = [1, 8], strides = [1, 1]} : vector<4x8xf32> to vector<1x8xf32>
    %17 = vector.shape_cast %16 : vector<1x8xf32> to vector<8xf32>
    %18 = vector.shape_cast %17 : vector<8xf32> to vector<1x1x8xf32>
    %19 = vector.broadcast %15 : vector<10x18x1xf32> to vector<10x18x8xf32>
    %20 = vector.broadcast %18 : vector<1x1x8xf32> to vector<10x18x8xf32>
    %21 = arith.mulf %19, %20 : vector<10x18x8xf32>
    %22 = arith.addf %14, %21 : vector<10x18x8xf32>
    %23 = vector.extract_strided_slice %6 {offsets = [0, 0, 2], sizes = [10, 18, 1], strides = [1, 1, 1]} : vector<10x18x4xf32> to vector<10x18x1xf32>
    %24 = vector.extract_strided_slice %7 {offsets = [2, 0], sizes = [1, 8], strides = [1, 1]} : vector<4x8xf32> to vector<1x8xf32>
    %25 = vector.shape_cast %24 : vector<1x8xf32> to vector<8xf32>
    %26 = vector.shape_cast %25 : vector<8xf32> to vector<1x1x8xf32>
    %27 = vector.broadcast %23 : vector<10x18x1xf32> to vector<10x18x8xf32>
    %28 = vector.broadcast %26 : vector<1x1x8xf32> to vector<10x18x8xf32>
    %29 = arith.mulf %27, %28 : vector<10x18x8xf32>
    %30 = arith.addf %22, %29 : vector<10x18x8xf32>
    %31 = vector.extract_strided_slice %6 {offsets = [0, 0, 3], sizes = [10, 18, 1], strides = [1, 1, 1]} : vector<10x18x4xf32> to vector<10x18x1xf32>
    %32 = vector.extract_strided_slice %7 {offsets = [3, 0], sizes = [1, 8], strides = [1, 1]} : vector<4x8xf32> to vector<1x8xf32>
    %33 = vector.shape_cast %32 : vector<1x8xf32> to vector<8xf32>
    %34 = vector.shape_cast %33 : vector<8xf32> to vector<1x1x8xf32>
    %35 = vector.broadcast %31 : vector<10x18x1xf32> to vector<10x18x8xf32>
    %36 = vector.broadcast %34 : vector<1x1x8xf32> to vector<10x18x8xf32>
    %37 = arith.mulf %35, %36 : vector<10x18x8xf32>
    %38 = arith.addf %30, %37 : vector<10x18x8xf32>
    %c0_17 = arith.constant 0 : index
    %c0_18 = arith.constant 0 : index
    %39 = vector.load %arg5[%c0_17, %c0_18] : memref<1x8xf32, #tpu.memory_space<vmem>>, vector<1x8xf32>
    %40 = vector.shape_cast %39 : vector<1x8xf32> to vector<8xf32>
    %41 = vector.shape_cast %40 : vector<8xf32> to vector<1x1x8xf32>
    %42 = vector.broadcast %41 : vector<1x1x8xf32> to vector<10x18x8xf32>
    %43 = arith.mulf %38, %42 : vector<10x18x8xf32>
    %c0_19 = arith.constant 0 : index
    %c0_20 = arith.constant 0 : index
    %44 = vector.load %arg6[%c0_19, %c0_20] : memref<1x8xf32, #tpu.memory_space<vmem>>, vector<1x8xf32>
    %45 = vector.shape_cast %44 : vector<1x8xf32> to vector<8xf32>
    %46 = vector.shape_cast %45 : vector<8xf32> to vector<1x1x8xf32>
    %47 = vector.broadcast %46 : vector<1x1x8xf32> to vector<10x18x8xf32>
    %48 = arith.addf %43, %47 : vector<10x18x8xf32>
    %cst = arith.constant 0.000000e+00 : f32
    %cst_21 = arith.constant 6.000000e+00 : f32
    %49 = vector.broadcast %cst : f32 to vector<10x18x8xf32>
    %50 = arith.maximumf %49, %48 : vector<10x18x8xf32>
    %51 = vector.broadcast %cst_21 : f32 to vector<10x18x8xf32>
    %52 = arith.minimumf %51, %50 : vector<10x18x8xf32>
    %c8_i32 = arith.constant 8 : i32
    %53 = arith.muli %arg1, %c8_i32 : i32
    %54 = tpu.iota {dimensions = array<i32: 0>} : vector<10x18x1xi32>
    %55 = vector.broadcast %53 : i32 to vector<10x18x1xi32>
    %56 = arith.addi %54, %55 : vector<10x18x1xi32>
    %57 = tpu.iota {dimensions = array<i32: 1>} : vector<10x18x1xi32>
    %c1_i32 = arith.constant 1 : i32
    %58 = vector.broadcast %c1_i32 : i32 to vector<10x18x1xi32>
    %59 = arith.cmpi sge, %56, %58 : vector<10x18x1xi32>
    %c16_i32 = arith.constant 16 : i32
    %60 = vector.broadcast %c16_i32 : i32 to vector<10x18x1xi32>
    %61 = arith.cmpi sle, %56, %60 : vector<10x18x1xi32>
    %62 = arith.andi %59, %61 : vector<10x18x1xi1>
    %c1_i32_22 = arith.constant 1 : i32
    %63 = vector.broadcast %c1_i32_22 : i32 to vector<10x18x1xi32>
    %64 = arith.cmpi sge, %57, %63 : vector<10x18x1xi32>
    %65 = arith.andi %62, %64 : vector<10x18x1xi1>
    %c16_i32_23 = arith.constant 16 : i32
    %66 = vector.broadcast %c16_i32_23 : i32 to vector<10x18x1xi32>
    %67 = arith.cmpi sle, %57, %66 : vector<10x18x1xi32>
    %68 = arith.andi %65, %67 : vector<10x18x1xi1>
    %cst_24 = arith.constant 0.000000e+00 : f32
    %69 = vector.shape_cast %68 : vector<10x18x1xi1> to vector<10x18x1xi1>
    %70 = vector.broadcast %69 : vector<10x18x1xi1> to vector<10x18x8xi1>
    %71 = vector.broadcast %cst_24 : f32 to vector<10x18x8xf32>
    %72 = arith.select %70, %52, %71 : vector<10x18x8xi1>, vector<10x18x8xf32>
    %c0_25 = arith.constant 0 : index
    %c0_26 = arith.constant 0 : index
    %c0_27 = arith.constant 0 : index
    %73 = vector.load %arg7[%c0_25, %c0_26, %c0_27] : memref<3x3x8xf32, #tpu.memory_space<vmem>>, vector<3x3x8xf32>
    %cst_28 = arith.constant 0.000000e+00 : f32
    %74 = vector.broadcast %cst_28 : f32 to vector<8x16x8xf32>
    %75 = vector.extract_strided_slice %72 {offsets = [0, 0, 0], sizes = [8, 16, 8], strides = [1, 1, 1]} : vector<10x18x8xf32> to vector<8x16x8xf32>
    %76 = vector.extract_strided_slice %73 {offsets = [0, 0, 0], sizes = [1, 1, 8], strides = [1, 1, 1]} : vector<3x3x8xf32> to vector<1x1x8xf32>
    %77 = vector.shape_cast %76 : vector<1x1x8xf32> to vector<8xf32>
    %78 = vector.shape_cast %77 : vector<8xf32> to vector<1x1x8xf32>
    %79 = vector.broadcast %78 : vector<1x1x8xf32> to vector<8x16x8xf32>
    %80 = arith.mulf %75, %79 : vector<8x16x8xf32>
    %81 = arith.addf %74, %80 : vector<8x16x8xf32>
    %82 = vector.extract_strided_slice %72 {offsets = [0, 1, 0], sizes = [8, 16, 8], strides = [1, 1, 1]} : vector<10x18x8xf32> to vector<8x16x8xf32>
    %83 = vector.extract_strided_slice %73 {offsets = [0, 1, 0], sizes = [1, 1, 8], strides = [1, 1, 1]} : vector<3x3x8xf32> to vector<1x1x8xf32>
    %84 = vector.shape_cast %83 : vector<1x1x8xf32> to vector<8xf32>
    %85 = vector.shape_cast %84 : vector<8xf32> to vector<1x1x8xf32>
    %86 = vector.broadcast %85 : vector<1x1x8xf32> to vector<8x16x8xf32>
    %87 = arith.mulf %82, %86 : vector<8x16x8xf32>
    %88 = arith.addf %81, %87 : vector<8x16x8xf32>
    %89 = vector.extract_strided_slice %72 {offsets = [0, 2, 0], sizes = [8, 16, 8], strides = [1, 1, 1]} : vector<10x18x8xf32> to vector<8x16x8xf32>
    %90 = vector.extract_strided_slice %73 {offsets = [0, 2, 0], sizes = [1, 1, 8], strides = [1, 1, 1]} : vector<3x3x8xf32> to vector<1x1x8xf32>
    %91 = vector.shape_cast %90 : vector<1x1x8xf32> to vector<8xf32>
    %92 = vector.shape_cast %91 : vector<8xf32> to vector<1x1x8xf32>
    %93 = vector.broadcast %92 : vector<1x1x8xf32> to vector<8x16x8xf32>
    %94 = arith.mulf %89, %93 : vector<8x16x8xf32>
    %95 = arith.addf %88, %94 : vector<8x16x8xf32>
    %96 = vector.extract_strided_slice %72 {offsets = [1, 0, 0], sizes = [8, 16, 8], strides = [1, 1, 1]} : vector<10x18x8xf32> to vector<8x16x8xf32>
    %97 = vector.extract_strided_slice %73 {offsets = [1, 0, 0], sizes = [1, 1, 8], strides = [1, 1, 1]} : vector<3x3x8xf32> to vector<1x1x8xf32>
    %98 = vector.shape_cast %97 : vector<1x1x8xf32> to vector<8xf32>
    %99 = vector.shape_cast %98 : vector<8xf32> to vector<1x1x8xf32>
    %100 = vector.broadcast %99 : vector<1x1x8xf32> to vector<8x16x8xf32>
    %101 = arith.mulf %96, %100 : vector<8x16x8xf32>
    %102 = arith.addf %95, %101 : vector<8x16x8xf32>
    %103 = vector.extract_strided_slice %72 {offsets = [1, 1, 0], sizes = [8, 16, 8], strides = [1, 1, 1]} : vector<10x18x8xf32> to vector<8x16x8xf32>
    %104 = vector.extract_strided_slice %73 {offsets = [1, 1, 0], sizes = [1, 1, 8], strides = [1, 1, 1]} : vector<3x3x8xf32> to vector<1x1x8xf32>
    %105 = vector.shape_cast %104 : vector<1x1x8xf32> to vector<8xf32>
    %106 = vector.shape_cast %105 : vector<8xf32> to vector<1x1x8xf32>
    %107 = vector.broadcast %106 : vector<1x1x8xf32> to vector<8x16x8xf32>
    %108 = arith.mulf %103, %107 : vector<8x16x8xf32>
    %109 = arith.addf %102, %108 : vector<8x16x8xf32>
    %110 = vector.extract_strided_slice %72 {offsets = [1, 2, 0], sizes = [8, 16, 8], strides = [1, 1, 1]} : vector<10x18x8xf32> to vector<8x16x8xf32>
    %111 = vector.extract_strided_slice %73 {offsets = [1, 2, 0], sizes = [1, 1, 8], strides = [1, 1, 1]} : vector<3x3x8xf32> to vector<1x1x8xf32>
    %112 = vector.shape_cast %111 : vector<1x1x8xf32> to vector<8xf32>
    %113 = vector.shape_cast %112 : vector<8xf32> to vector<1x1x8xf32>
    %114 = vector.broadcast %113 : vector<1x1x8xf32> to vector<8x16x8xf32>
    %115 = arith.mulf %110, %114 : vector<8x16x8xf32>
    %116 = arith.addf %109, %115 : vector<8x16x8xf32>
    %117 = vector.extract_strided_slice %72 {offsets = [2, 0, 0], sizes = [8, 16, 8], strides = [1, 1, 1]} : vector<10x18x8xf32> to vector<8x16x8xf32>
    %118 = vector.extract_strided_slice %73 {offsets = [2, 0, 0], sizes = [1, 1, 8], strides = [1, 1, 1]} : vector<3x3x8xf32> to vector<1x1x8xf32>
    %119 = vector.shape_cast %118 : vector<1x1x8xf32> to vector<8xf32>
    %120 = vector.shape_cast %119 : vector<8xf32> to vector<1x1x8xf32>
    %121 = vector.broadcast %120 : vector<1x1x8xf32> to vector<8x16x8xf32>
    %122 = arith.mulf %117, %121 : vector<8x16x8xf32>
    %123 = arith.addf %116, %122 : vector<8x16x8xf32>
    %124 = vector.extract_strided_slice %72 {offsets = [2, 1, 0], sizes = [8, 16, 8], strides = [1, 1, 1]} : vector<10x18x8xf32> to vector<8x16x8xf32>
    %125 = vector.extract_strided_slice %73 {offsets = [2, 1, 0], sizes = [1, 1, 8], strides = [1, 1, 1]} : vector<3x3x8xf32> to vector<1x1x8xf32>
    %126 = vector.shape_cast %125 : vector<1x1x8xf32> to vector<8xf32>
    %127 = vector.shape_cast %126 : vector<8xf32> to vector<1x1x8xf32>
    %128 = vector.broadcast %127 : vector<1x1x8xf32> to vector<8x16x8xf32>
    %129 = arith.mulf %124, %128 : vector<8x16x8xf32>
    %130 = arith.addf %123, %129 : vector<8x16x8xf32>
    %131 = vector.extract_strided_slice %72 {offsets = [2, 2, 0], sizes = [8, 16, 8], strides = [1, 1, 1]} : vector<10x18x8xf32> to vector<8x16x8xf32>
    %132 = vector.extract_strided_slice %73 {offsets = [2, 2, 0], sizes = [1, 1, 8], strides = [1, 1, 1]} : vector<3x3x8xf32> to vector<1x1x8xf32>
    %133 = vector.shape_cast %132 : vector<1x1x8xf32> to vector<8xf32>
    %134 = vector.shape_cast %133 : vector<8xf32> to vector<1x1x8xf32>
    %135 = vector.broadcast %134 : vector<1x1x8xf32> to vector<8x16x8xf32>
    %136 = arith.mulf %131, %135 : vector<8x16x8xf32>
    %137 = arith.addf %130, %136 : vector<8x16x8xf32>
    %c0_29 = arith.constant 0 : index
    %c0_30 = arith.constant 0 : index
    %138 = vector.load %arg8[%c0_29, %c0_30] : memref<1x8xf32, #tpu.memory_space<vmem>>, vector<1x8xf32>
    %139 = vector.shape_cast %138 : vector<1x8xf32> to vector<8xf32>
    %140 = vector.shape_cast %139 : vector<8xf32> to vector<1x1x8xf32>
    %141 = vector.broadcast %140 : vector<1x1x8xf32> to vector<8x16x8xf32>
    %142 = arith.addf %137, %141 : vector<8x16x8xf32>
    %cst_31 = arith.constant 0.000000e+00 : f32
    %cst_32 = arith.constant 6.000000e+00 : f32
    %143 = vector.broadcast %cst_31 : f32 to vector<8x16x8xf32>
    %144 = arith.maximumf %143, %142 : vector<8x16x8xf32>
    %145 = vector.broadcast %cst_32 : f32 to vector<8x16x8xf32>
    %146 = arith.minimumf %145, %144 : vector<8x16x8xf32>
    %c0_33 = arith.constant 0 : index
    %c0_34 = arith.constant 0 : index
    %147 = vector.load %arg9[%c0_33, %c0_34] : memref<8x4xf32, #tpu.memory_space<vmem>>, vector<8x4xf32>
    %148 = vector.extract_strided_slice %146 {offsets = [0, 0, 0], sizes = [8, 16, 1], strides = [1, 1, 1]} : vector<8x16x8xf32> to vector<8x16x1xf32>
    %149 = vector.extract_strided_slice %147 {offsets = [0, 0], sizes = [1, 4], strides = [1, 1]} : vector<8x4xf32> to vector<1x4xf32>
    %150 = vector.shape_cast %149 : vector<1x4xf32> to vector<4xf32>
    %151 = vector.shape_cast %150 : vector<4xf32> to vector<1x1x4xf32>
    %152 = vector.broadcast %148 : vector<8x16x1xf32> to vector<8x16x4xf32>
    %153 = vector.broadcast %151 : vector<1x1x4xf32> to vector<8x16x4xf32>
    %154 = arith.mulf %152, %153 : vector<8x16x4xf32>
    %155 = vector.extract_strided_slice %146 {offsets = [0, 0, 1], sizes = [8, 16, 1], strides = [1, 1, 1]} : vector<8x16x8xf32> to vector<8x16x1xf32>
    %156 = vector.extract_strided_slice %147 {offsets = [1, 0], sizes = [1, 4], strides = [1, 1]} : vector<8x4xf32> to vector<1x4xf32>
    %157 = vector.shape_cast %156 : vector<1x4xf32> to vector<4xf32>
    %158 = vector.shape_cast %157 : vector<4xf32> to vector<1x1x4xf32>
    %159 = vector.broadcast %155 : vector<8x16x1xf32> to vector<8x16x4xf32>
    %160 = vector.broadcast %158 : vector<1x1x4xf32> to vector<8x16x4xf32>
    %161 = arith.mulf %159, %160 : vector<8x16x4xf32>
    %162 = arith.addf %154, %161 : vector<8x16x4xf32>
    %163 = vector.extract_strided_slice %146 {offsets = [0, 0, 2], sizes = [8, 16, 1], strides = [1, 1, 1]} : vector<8x16x8xf32> to vector<8x16x1xf32>
    %164 = vector.extract_strided_slice %147 {offsets = [2, 0], sizes = [1, 4], strides = [1, 1]} : vector<8x4xf32> to vector<1x4xf32>
    %165 = vector.shape_cast %164 : vector<1x4xf32> to vector<4xf32>
    %166 = vector.shape_cast %165 : vector<4xf32> to vector<1x1x4xf32>
    %167 = vector.broadcast %163 : vector<8x16x1xf32> to vector<8x16x4xf32>
    %168 = vector.broadcast %166 : vector<1x1x4xf32> to vector<8x16x4xf32>
    %169 = arith.mulf %167, %168 : vector<8x16x4xf32>
    %170 = arith.addf %162, %169 : vector<8x16x4xf32>
    %171 = vector.extract_strided_slice %146 {offsets = [0, 0, 3], sizes = [8, 16, 1], strides = [1, 1, 1]} : vector<8x16x8xf32> to vector<8x16x1xf32>
    %172 = vector.extract_strided_slice %147 {offsets = [3, 0], sizes = [1, 4], strides = [1, 1]} : vector<8x4xf32> to vector<1x4xf32>
    %173 = vector.shape_cast %172 : vector<1x4xf32> to vector<4xf32>
    %174 = vector.shape_cast %173 : vector<4xf32> to vector<1x1x4xf32>
    %175 = vector.broadcast %171 : vector<8x16x1xf32> to vector<8x16x4xf32>
    %176 = vector.broadcast %174 : vector<1x1x4xf32> to vector<8x16x4xf32>
    %177 = arith.mulf %175, %176 : vector<8x16x4xf32>
    %178 = arith.addf %170, %177 : vector<8x16x4xf32>
    %179 = vector.extract_strided_slice %146 {offsets = [0, 0, 4], sizes = [8, 16, 1], strides = [1, 1, 1]} : vector<8x16x8xf32> to vector<8x16x1xf32>
    %180 = vector.extract_strided_slice %147 {offsets = [4, 0], sizes = [1, 4], strides = [1, 1]} : vector<8x4xf32> to vector<1x4xf32>
    %181 = vector.shape_cast %180 : vector<1x4xf32> to vector<4xf32>
    %182 = vector.shape_cast %181 : vector<4xf32> to vector<1x1x4xf32>
    %183 = vector.broadcast %179 : vector<8x16x1xf32> to vector<8x16x4xf32>
    %184 = vector.broadcast %182 : vector<1x1x4xf32> to vector<8x16x4xf32>
    %185 = arith.mulf %183, %184 : vector<8x16x4xf32>
    %186 = arith.addf %178, %185 : vector<8x16x4xf32>
    %187 = vector.extract_strided_slice %146 {offsets = [0, 0, 5], sizes = [8, 16, 1], strides = [1, 1, 1]} : vector<8x16x8xf32> to vector<8x16x1xf32>
    %188 = vector.extract_strided_slice %147 {offsets = [5, 0], sizes = [1, 4], strides = [1, 1]} : vector<8x4xf32> to vector<1x4xf32>
    %189 = vector.shape_cast %188 : vector<1x4xf32> to vector<4xf32>
    %190 = vector.shape_cast %189 : vector<4xf32> to vector<1x1x4xf32>
    %191 = vector.broadcast %187 : vector<8x16x1xf32> to vector<8x16x4xf32>
    %192 = vector.broadcast %190 : vector<1x1x4xf32> to vector<8x16x4xf32>
    %193 = arith.mulf %191, %192 : vector<8x16x4xf32>
    %194 = arith.addf %186, %193 : vector<8x16x4xf32>
    %195 = vector.extract_strided_slice %146 {offsets = [0, 0, 6], sizes = [8, 16, 1], strides = [1, 1, 1]} : vector<8x16x8xf32> to vector<8x16x1xf32>
    %196 = vector.extract_strided_slice %147 {offsets = [6, 0], sizes = [1, 4], strides = [1, 1]} : vector<8x4xf32> to vector<1x4xf32>
    %197 = vector.shape_cast %196 : vector<1x4xf32> to vector<4xf32>
    %198 = vector.shape_cast %197 : vector<4xf32> to vector<1x1x4xf32>
    %199 = vector.broadcast %195 : vector<8x16x1xf32> to vector<8x16x4xf32>
    %200 = vector.broadcast %198 : vector<1x1x4xf32> to vector<8x16x4xf32>
    %201 = arith.mulf %199, %200 : vector<8x16x4xf32>
    %202 = arith.addf %194, %201 : vector<8x16x4xf32>
    %203 = vector.extract_strided_slice %146 {offsets = [0, 0, 7], sizes = [8, 16, 1], strides = [1, 1, 1]} : vector<8x16x8xf32> to vector<8x16x1xf32>
    %204 = vector.extract_strided_slice %147 {offsets = [7, 0], sizes = [1, 4], strides = [1, 1]} : vector<8x4xf32> to vector<1x4xf32>
    %205 = vector.shape_cast %204 : vector<1x4xf32> to vector<4xf32>
    %206 = vector.shape_cast %205 : vector<4xf32> to vector<1x1x4xf32>
    %207 = vector.broadcast %203 : vector<8x16x1xf32> to vector<8x16x4xf32>
    %208 = vector.broadcast %206 : vector<1x1x4xf32> to vector<8x16x4xf32>
    %209 = arith.mulf %207, %208 : vector<8x16x4xf32>
    %210 = arith.addf %202, %209 : vector<8x16x4xf32>
    %c0_35 = arith.constant 0 : index
    %c0_36 = arith.constant 0 : index
    %211 = vector.load %arg10[%c0_35, %c0_36] : memref<1x4xf32, #tpu.memory_space<vmem>>, vector<1x4xf32>
    %212 = vector.shape_cast %211 : vector<1x4xf32> to vector<4xf32>
    %213 = vector.shape_cast %212 : vector<4xf32> to vector<1x1x4xf32>
    %214 = vector.broadcast %213 : vector<1x1x4xf32> to vector<8x16x4xf32>
    %215 = arith.mulf %210, %214 : vector<8x16x4xf32>
    %c0_37 = arith.constant 0 : index
    %c0_38 = arith.constant 0 : index
    %216 = vector.load %arg11[%c0_37, %c0_38] : memref<1x4xf32, #tpu.memory_space<vmem>>, vector<1x4xf32>
    %217 = vector.shape_cast %216 : vector<1x4xf32> to vector<4xf32>
    %218 = vector.shape_cast %217 : vector<4xf32> to vector<1x1x4xf32>
    %219 = vector.broadcast %218 : vector<1x1x4xf32> to vector<8x16x4xf32>
    %220 = arith.addf %215, %219 : vector<8x16x4xf32>
    %221 = vector.extract_strided_slice %6 {offsets = [1, 1, 0], sizes = [8, 16, 4], strides = [1, 1, 1]} : vector<10x18x4xf32> to vector<8x16x4xf32>
    %222 = arith.addf %220, %221 : vector<8x16x4xf32>
    %c0_39 = arith.constant 0 : index
    %c0_40 = arith.constant 0 : index
    %c0_41 = arith.constant 0 : index
    %c0_42 = arith.constant 0 : index
    %223 = vector.load %arg12[%c0_39, %c0_40, %c0_41, %c0_42] : memref<1x8x16x4xf32, #tpu.memory_space<vmem>>, vector<1x8x16x4xf32>
    %224 = vector.shape_cast %223 : vector<1x8x16x4xf32> to vector<8x16x4xf32>
    %225 = vector.shape_cast %222 : vector<8x16x4xf32> to vector<1x8x16x4xf32>
    tpu.vector_store %arg12[%c0_39, %c0_40, %c0_41, %c0_42], %225 {strides = array<i32>} : memref<1x8x16x4xf32, #tpu.memory_space<vmem>>, vector<1x8x16x4xf32>,
    return
  }
  func.func @transform_0(%arg0: i32, %arg1: i32) -> (i32, i32, i32, i32) {
    %c0_i32 = arith.constant 0 : i32
    %c0_i32_0 = arith.constant 0 : i32
    %c0_i32_1 = arith.constant 0 : i32
    return %arg0, %arg1, %c0_i32, %c0_i32_0 : i32, i32, i32, i32
  }
  func.func @transform_1(%arg0: i32, %arg1: i32) -> (i32, i32, i32, i32) {
    %c1_i32 = arith.constant 1 : i32
    %0 = arith.addi %arg1, %c1_i32 : i32
    %c4_i32 = arith.constant 4 : i32
    %1 = arith.muli %0, %c4_i32 : i32
    %c0_i32 = arith.constant 0 : i32
    %c0_i32_0 = arith.constant 0 : i32
    %c0_i32_1 = arith.constant 0 : i32
    return %arg0, %1, %c0_i32, %c0_i32_0 : i32, i32, i32, i32
  }
  func.func @transform_2(%arg0: i32, %arg1: i32) -> (i32, i32) {
    %c0_i32 = arith.constant 0 : i32
    %c0_i32_0 = arith.constant 0 : i32
    %c0_i32_1 = arith.constant 0 : i32
    return %c0_i32, %c0_i32_0 : i32, i32
  }
  func.func @transform_3(%arg0: i32, %arg1: i32) -> (i32, i32) {
    %c0_i32 = arith.constant 0 : i32
    %c0_i32_0 = arith.constant 0 : i32
    %c0_i32_1 = arith.constant 0 : i32
    return %c0_i32, %c0_i32_0 : i32, i32
  }
  func.func @transform_4(%arg0: i32, %arg1: i32) -> (i32, i32) {
    %c0_i32 = arith.constant 0 : i32
    %c0_i32_0 = arith.constant 0 : i32
    %c0_i32_1 = arith.constant 0 : i32
    return %c0_i32, %c0_i32_0 : i32, i32
  }
  func.func @transform_5(%arg0: i32, %arg1: i32) -> (i32, i32, i32) {
    %c0_i32 = arith.constant 0 : i32
    %c0_i32_0 = arith.constant 0 : i32
    %c0_i32_1 = arith.constant 0 : i32
    %c0_i32_2 = arith.constant 0 : i32
    return %c0_i32, %c0_i32_0, %c0_i32_1 : i32, i32, i32
  }
  func.func @transform_6(%arg0: i32, %arg1: i32) -> (i32, i32) {
    %c0_i32 = arith.constant 0 : i32
    %c0_i32_0 = arith.constant 0 : i32
    %c0_i32_1 = arith.constant 0 : i32
    return %c0_i32, %c0_i32_0 : i32, i32
  }
  func.func @transform_7(%arg0: i32, %arg1: i32) -> (i32, i32) {
    %c0_i32 = arith.constant 0 : i32
    %c0_i32_0 = arith.constant 0 : i32
    %c0_i32_1 = arith.constant 0 : i32
    return %c0_i32, %c0_i32_0 : i32, i32
  }
  func.func @transform_8(%arg0: i32, %arg1: i32) -> (i32, i32) {
    %c0_i32 = arith.constant 0 : i32
    %c0_i32_0 = arith.constant 0 : i32
    %c0_i32_1 = arith.constant 0 : i32
    return %c0_i32, %c0_i32_0 : i32, i32
  }
  func.func @transform_9(%arg0: i32, %arg1: i32) -> (i32, i32) {
    %c0_i32 = arith.constant 0 : i32
    %c0_i32_0 = arith.constant 0 : i32
    %c0_i32_1 = arith.constant 0 : i32
    return %c0_i32, %c0_i32_0 : i32, i32
  }
  func.func @transform_10(%arg0: i32, %arg1: i32) -> (i32, i32, i32, i32) {
    %c0_i32 = arith.constant 0 : i32
    %c0_i32_0 = arith.constant 0 : i32
    %c0_i32_1 = arith.constant 0 : i32
    return %arg0, %arg1, %c0_i32, %c0_i32_0 : i32, i32, i32, i32
  }
}

</mosaic_0001>

<llo_original>
// kernel: inverted_residual_forward.1
$region0: #{inverted_residual_forward.1}
  #allocation0 [shape = 'u32[]', space=smem, size = 0x4, offset = 0x4, fixed_abs, tag = 'smem constant byte address 0x4 - core index']
  #allocation1 [shape = 'u32[72,128]{1,0:T(1,128)}', space=vmem, size = 0x9000, scoped, tag = 'internal scratch']
  #allocation2 [shape = 'f32[10,18,4]{2,1,0:T(8,128)}', space=vmem, size = 0x1e000, scoped, tag = 'scratch operand']
  %s0 = inlined_call_operand.vmem [shape: f32[2,24,18,4], index: 0, kind: input, shape index: {}, may-alias: {0,1}]
  %s1 = inlined_call_operand.vmem [shape: f32[2,24,18,4], index: 1, kind: input, shape index: {}, may-alias: {0,1}]
  %s2 = inlined_call_operand.vmem [shape: f32[4,8], index: 2, kind: input, shape index: {}]
  %s3 = inlined_call_operand.vmem [shape: f32[1,8], index: 3, kind: input, shape index: {}]
  %s4 = inlined_call_operand.vmem [shape: f32[1,8], index: 4, kind: input, shape index: {}]
  %s5 = inlined_call_operand.vmem [shape: f32[3,3,8], index: 5, kind: input, shape index: {}]
  %s6 = inlined_call_operand.vmem [shape: f32[1,8], index: 6, kind: input, shape index: {}]
  %s7 = inlined_call_operand.vmem [shape: f32[8,4], index: 7, kind: input, shape index: {}]
  %s8 = inlined_call_operand.vmem [shape: f32[1,4], index: 8, kind: input, shape index: {}]
  %s9 = inlined_call_operand.vmem [shape: f32[1,4], index: 9, kind: input, shape index: {}]
  %s10 = inlined_call_operand.vmem [shape: f32[2,16,16,4], index: 10, kind: output, shape index: {}]
  %s11 = sld [smem:[#allocation0]]
  $region73: #{inverted_residual_forward.1} parent=0
    _
  %s13 = ssub.s32 1, %s11
  %s14 = scalar_select 0, %s13, %s11
  loop: start=0, step=1, limit=6
  $region2: #{inverted_residual_forward.1} parent=0 // loop_pre_header
    _
  $region3: #{inverted_residual_forward.1} parent=0 // loop_header
    %s16 = sphi 0, %s20
    %p17 = scmp.ge.s32.totalorder %s16, 6
    %s23 = sphi 0, %s35
    %s24 = sphi 0, %s31
    %s25 = sphi 0, %s23
    %s26 = sphi 0, %s24
    %s27 = sphi 0, %s25
    %s28 = sphi 0, %s26
    %s40 = sphi 0, %s42
    %s43 = sphi 0, %s40
    %s44 = sphi 0, %s43
    %s60 = sphi 0, %s44
    %s72 = sphi 0, %s74
    %s75 = sphi 0, %s72
    %s76 = sphi 0, %s75
    %s92 = sphi 0, %s76
    %s96 = sphi 0, %s96
    %s98 = sphi 0, %s96
    %s99 = sphi 0, %s98
    %s113 = sphi 0, %s99
    %s117 = sphi 0, %s117
    %s119 = sphi 0, %s117
    %s120 = sphi 0, %s119
    %s134 = sphi 0, %s120
    %s138 = sphi 0, %s138
    %s140 = sphi 0, %s138
    %s141 = sphi 0, %s140
    %s155 = sphi 0, %s141
    %s159 = sphi 0, %s159
    %s161 = sphi 0, %s159
    %s162 = sphi 0, %s161
    %s176 = sphi 0, %s162
    %s180 = sphi 0, %s180
    %s182 = sphi 0, %s180
    %s183 = sphi 0, %s182
    %s197 = sphi 0, %s183
    %s201 = sphi 0, %s201
    %s203 = sphi 0, %s201
    %s204 = sphi 0, %s203
    %s218 = sphi 0, %s204
    %s222 = sphi 0, %s222
    %s224 = sphi 0, %s222
    %s225 = sphi 0, %s224
    %s239 = sphi 0, %s225
    %s243 = sphi 0, %s243
    %s245 = sphi 0, %s243
    %s246 = sphi 0, %s245
    %s260 = sphi 0, %s246
    %s268 = sphi 0, %s270
    %s271 = sphi 0, %s268
    %s272 = sphi 0, %s271
    %s288 = sphi 0, %s272
  $region4: #{inverted_residual_forward.1} parent=0 // loop_header_branch
    %19 = sbr.rel (%p17) target = $region8
  $region5: #{inverted_residual_forward.1} parent=0 // loop_body
    %s21 = ssub.s32 %s16, 1
    %s22 = ssub.s32 %s16, 2
    %s29 = sadd.s32 1, %s24
    %p30 = scmp.ge.s32.totalorder %s29, 2
    %s31 = scalar_select %p30, 0, %s29
    %s32 = sadd.s32 1, %s23
    %s33 = scalar_select %p30, %s32, %s23
    %p34 = scmp.ge.s32.totalorder %s33, 2
    %s35 = scalar_select %p34, 0, %s33
    %s36 = ssub.s32 %s23, %s35
    %s37 = ssub.s32 %s24, %s31
    %s38 = sor.u32 %s36, %s37
    %p39 = scmp.eq.s32.totalorder %s38, 0
    %s41 = sadd.s32 %s40, 1
    %s42 = scalar_select %p39, %s40, %s41
    %p45 = pneg %p39
    %p46 = scmp.eq.s32.totalorder %s16, 3
    %p47 = por %p45, %p46
    %p48 = scmp.ne.s32.totalorder %s40, %s43
    %p49 = scmp.eq.s32.totalorder %s16, 0
    %p50 = por %p48, %p49
    %p51 = scmp.ne.s32.totalorder %s40, %s43
    %p52 = scmp.eq.s32.totalorder %s21, 3
    %p53 = por %p51, %p52
    %p54 = scmp.ne.s32.totalorder %s43, %s44
    %p55 = scmp.eq.s32.totalorder %s21, 0
    %p56 = por %p54, %p55
    %p57 = scmp.ne.s32.totalorder %s43, %s44
    %p58 = scmp.eq.s32.totalorder %s22, 3
    %p59 = por %p57, %p58
    %p61 = scmp.ne.s32.totalorder %s44, %s60
    %p62 = scmp.eq.s32.totalorder %s22, 0
    %p63 = por %p61, %p62
    %s64 = sadd.s32 %s24, 1
    %s65 = smul.u32 %s64, 4
    %s66 = sadd.s32 %s31, 1
    %s67 = smul.u32 %s66, 4
    %s68 = ssub.s32 %s23, %s35
    %s69 = ssub.s32 %s65, %s67
    %s70 = sor.u32 %s68, %s69
    %p71 = scmp.eq.s32.totalorder %s70, 0
    %s73 = sadd.s32 %s72, 1
    %s74 = scalar_select %p71, %s72, %s73
    %p77 = pneg %p71
    %p78 = scmp.eq.s32.totalorder %s16, 3
    %p79 = por %p77, %p78
    %p80 = scmp.ne.s32.totalorder %s72, %s75
    %p81 = scmp.eq.s32.totalorder %s16, 0
    %p82 = por %p80, %p81
    %p83 = scmp.ne.s32.totalorder %s72, %s75
    %p84 = scmp.eq.s32.totalorder %s21, 3
    %p85 = por %p83, %p84
    %p86 = scmp.ne.s32.totalorder %s75, %s76
    %p87 = scmp.eq.s32.totalorder %s21, 0
    %p88 = por %p86, %p87
    %p89 = scmp.ne.s32.totalorder %s75, %s76
    %p90 = scmp.eq.s32.totalorder %s22, 3
    %p91 = por %p89, %p90
    %p93 = scmp.ne.s32.totalorder %s76, %s92
    %p94 = scmp.eq.s32.totalorder %s22, 0
    %p95 = por %p93, %p94
    %s97 = sadd.s32 %s96, 1
    %p100 = scmp.eq.s32.totalorder %s16, 3
    %p101 = scmp.ne.s32.totalorder %s96, %s98
    %p102 = scmp.eq.s32.totalorder %s16, 0
    %p103 = por %p101, %p102
    %p104 = scmp.ne.s32.totalorder %s96, %s98
    %p105 = scmp.eq.s32.totalorder %s21, 3
    %p106 = por %p104, %p105
    %p107 = scmp.ne.s32.totalorder %s98, %s99
    %p108 = scmp.eq.s32.totalorder %s21, 0
    %p109 = por %p107, %p108
    %p110 = scmp.ne.s32.totalorder %s98, %s99
    %p111 = scmp.eq.s32.totalorder %s22, 3
    %p112 = por %p110, %p111
    %p114 = scmp.ne.s32.totalorder %s99, %s113
    %p115 = scmp.eq.s32.totalorder %s22, 0
    %p116 = por %p114, %p115
    %s118 = sadd.s32 %s117, 1
    %p121 = scmp.eq.s32.totalorder %s16, 3
    %p122 = scmp.ne.s32.totalorder %s117, %s119
    %p123 = scmp.eq.s32.totalorder %s16, 0
    %p124 = por %p122, %p123
    %p125 = scmp.ne.s32.totalorder %s117, %s119
    %p126 = scmp.eq.s32.totalorder %s21, 3
    %p127 = por %p125, %p126
    %p128 = scmp.ne.s32.totalorder %s119, %s120
    %p129 = scmp.eq.s32.totalorder %s21, 0
    %p130 = por %p128, %p129
    %p131 = scmp.ne.s32.totalorder %s119, %s120
    %p132 = scmp.eq.s32.totalorder %s22, 3
    %p133 = por %p131, %p132
    %p135 = scmp.ne.s32.totalorder %s120, %s134
    %p136 = scmp.eq.s32.totalorder %s22, 0
    %p137 = por %p135, %p136
    %s139 = sadd.s32 %s138, 1
    %p142 = scmp.eq.s32.totalorder %s16, 3
    %p143 = scmp.ne.s32.totalorder %s138, %s140
    %p144 = scmp.eq.s32.totalorder %s16, 0
    %p145 = por %p143, %p144
    %p146 = scmp.ne.s32.totalorder %s138, %s140
    %p147 = scmp.eq.s32.totalorder %s21, 3
    %p148 = por %p146, %p147
    %p149 = scmp.ne.s32.totalorder %s140, %s141
    %p150 = scmp.eq.s32.totalorder %s21, 0
    %p151 = por %p149, %p150
    %p152 = scmp.ne.s32.totalorder %s140, %s141
    %p153 = scmp.eq.s32.totalorder %s22, 3
    %p154 = por %p152, %p153
    %p156 = scmp.ne.s32.totalorder %s141, %s155
    %p157 = scmp.eq.s32.totalorder %s22, 0
    %p158 = por %p156, %p157
    %s160 = sadd.s32 %s159, 1
    %p163 = scmp.eq.s32.totalorder %s16, 3
    %p164 = scmp.ne.s32.totalorder %s159, %s161
    %p165 = scmp.eq.s32.totalorder %s16, 0
    %p166 = por %p164, %p165
    %p167 = scmp.ne.s32.totalorder %s159, %s161
    %p168 = scmp.eq.s32.totalorder %s21, 3
    %p169 = por %p167, %p168
    %p170 = scmp.ne.s32.totalorder %s161, %s162
    %p171 = scmp.eq.s32.totalorder %s21, 0
    %p172 = por %p170, %p171
    %p173 = scmp.ne.s32.totalorder %s161, %s162
    %p174 = scmp.eq.s32.totalorder %s22, 3
    %p175 = por %p173, %p174
    %p177 = scmp.ne.s32.totalorder %s162, %s176
    %p178 = scmp.eq.s32.totalorder %s22, 0
    %p179 = por %p177, %p178
    %s181 = sadd.s32 %s180, 1
    %p184 = scmp.eq.s32.totalorder %s16, 3
    %p185 = scmp.ne.s32.totalorder %s180, %s182
    %p186 = scmp.eq.s32.totalorder %s16, 0
    %p187 = por %p185, %p186
    %p188 = scmp.ne.s32.totalorder %s180, %s182
    %p189 = scmp.eq.s32.totalorder %s21, 3
    %p190 = por %p188, %p189
    %p191 = scmp.ne.s32.totalorder %s182, %s183
    %p192 = scmp.eq.s32.totalorder %s21, 0
    %p193 = por %p191, %p192
    %p194 = scmp.ne.s32.totalorder %s182, %s183
    %p195 = scmp.eq.s32.totalorder %s22, 3
    %p196 = por %p194, %p195
    %p198 = scmp.ne.s32.totalorder %s183, %s197
    %p199 = scmp.eq.s32.totalorder %s22, 0
    %p200 = por %p198, %p199
    %s202 = sadd.s32 %s201, 1
    %p205 = scmp.eq.s32.totalorder %s16, 3
    %p206 = scmp.ne.s32.totalorder %s201, %s203
    %p207 = scmp.eq.s32.totalorder %s16, 0
    %p208 = por %p206, %p207
    %p209 = scmp.ne.s32.totalorder %s201, %s203
    %p210 = scmp.eq.s32.totalorder %s21, 3
    %p211 = por %p209, %p210
    %p212 = scmp.ne.s32.totalorder %s203, %s204
    %p213 = scmp.eq.s32.totalorder %s21, 0
    %p214 = por %p212, %p213
    %p215 = scmp.ne.s32.totalorder %s203, %s204
    %p216 = scmp.eq.s32.totalorder %s22, 3
    %p217 = por %p215, %p216
    %p219 = scmp.ne.s32.totalorder %s204, %s218
    %p220 = scmp.eq.s32.totalorder %s22, 0
    %p221 = por %p219, %p220
    %s223 = sadd.s32 %s222, 1
    %p226 = scmp.eq.s32.totalorder %s16, 3
    %p227 = scmp.ne.s32.totalorder %s222, %s224
    %p228 = scmp.eq.s32.totalorder %s16, 0
    %p229 = por %p227, %p228
    %p230 = scmp.ne.s32.totalorder %s222, %s224
    %p231 = scmp.eq.s32.totalorder %s21, 3
    %p232 = por %p230, %p231
    %p233 = scmp.ne.s32.totalorder %s224, %s225
    %p234 = scmp.eq.s32.totalorder %s21, 0
    %p235 = por %p233, %p234
    %p236 = scmp.ne.s32.totalorder %s224, %s225
    %p237 = scmp.eq.s32.totalorder %s22, 3
    %p238 = por %p236, %p237
    %p240 = scmp.ne.s32.totalorder %s225, %s239
    %p241 = scmp.eq.s32.totalorder %s22, 0
    %p242 = por %p240, %p241
    %s244 = sadd.s32 %s243, 1
    %p247 = scmp.eq.s32.totalorder %s16, 3
    %p248 = scmp.ne.s32.totalorder %s243, %s245
    %p249 = scmp.eq.s32.totalorder %s16, 0
    %p250 = por %p248, %p249
    %p251 = scmp.ne.s32.totalorder %s243, %s245
    %p252 = scmp.eq.s32.totalorder %s21, 3
    %p253 = por %p251, %p252
    %p254 = scmp.ne.s32.totalorder %s245, %s246
    %p255 = scmp.eq.s32.totalorder %s21, 0
    %p256 = por %p254, %p255
    %p257 = scmp.ne.s32.totalorder %s245, %s246
    %p258 = scmp.eq.s32.totalorder %s22, 3
    %p259 = por %p257, %p258
    %p261 = scmp.ne.s32.totalorder %s246, %s260
    %p262 = scmp.eq.s32.totalorder %s22, 0
    %p263 = por %p261, %p262
    %s264 = ssub.s32 %s23, %s35
    %s265 = ssub.s32 %s24, %s31
    %s266 = sor.u32 %s264, %s265
    %p267 = scmp.eq.s32.totalorder %s266, 0
    %s269 = sadd.s32 %s268, 1
    %s270 = scalar_select %p267, %s268, %s269
    %p273 = pneg %p267
    %p274 = scmp.eq.s32.totalorder %s16, 3
    %p275 = por %p273, %p274
    %p276 = scmp.ne.s32.totalorder %s268, %s271
    %p277 = scmp.eq.s32.totalorder %s16, 0
    %p278 = por %p276, %p277
    %p279 = scmp.ne.s32.totalorder %s268, %s271
    %p280 = scmp.eq.s32.totalorder %s21, 3
    %p281 = por %p279, %p280
    %p282 = scmp.ne.s32.totalorder %s271, %s272
    %p283 = scmp.eq.s32.totalorder %s21, 0
    %p284 = por %p282, %p283
    %p285 = scmp.ne.s32.totalorder %s271, %s272
    %p286 = scmp.eq.s32.totalorder %s22, 3
    %p287 = por %p285, %p286
    %p289 = scmp.ne.s32.totalorder %s272, %s288
    %p290 = scmp.eq.s32.totalorder %s22, 0
    %p291 = por %p289, %p290
    %p292 = scmp.le.s32.totalorder 1, %s16
    %p293 = scmp.lt.s32.totalorder %s16, 5
    %p294 = pnand %p292, %p293
    %p295 = pneg %p294
    // Predicated region
    $region9: #{inverted_residual_forward.1} parent=5 // pred_check
      _
    $region10: #{inverted_residual_forward.1} parent=5 // pred_check_branch
      %297 = sbr.rel (%p294) target = $region12
    $region11: #{inverted_residual_forward.1} parent=5 // pred_region
      %s298 = ssub.s32 %s16, 1
      // Predicated region
      $region13: #{inverted_residual_forward.1} parent=11 // pred_check
        %p299 = pneg %p109
      $region14: #{inverted_residual_forward.1} parent=11 // pred_check_branch
        %301 = sbr.rel (%p299) target = $region16
      $region15: #{inverted_residual_forward.1} parent=11 // pred_region
        _
      $region16: #{inverted_residual_forward.1} parent=11 // pred_fallthru
        _
      // Predicated region
      $region17: #{inverted_residual_forward.1} parent=11 // pred_check
        %p302 = pneg %p130
      $region18: #{inverted_residual_forward.1} parent=11 // pred_check_branch
        %304 = sbr.rel (%p302) target = $region20
      $region19: #{inverted_residual_forward.1} parent=11 // pred_region
        _
      $region20: #{inverted_residual_forward.1} parent=11 // pred_fallthru
        _
      // Predicated region
      $region21: #{inverted_residual_forward.1} parent=11 // pred_check
        %p305 = pneg %p151
      $region22: #{inverted_residual_forward.1} parent=11 // pred_check_branch
        %307 = sbr.rel (%p305) target = $region24
      $region23: #{inverted_residual_forward.1} parent=11 // pred_region
        _
      $region24: #{inverted_residual_forward.1} parent=11 // pred_fallthru
        _
      // Predicated region
      $region25: #{inverted_residual_forward.1} parent=11 // pred_check
        %p308 = pneg %p172
      $region26: #{inverted_residual_forward.1} parent=11 // pred_check_branch
        %310 = sbr.rel (%p308) target = $region28
      $region27: #{inverted_residual_forward.1} parent=11 // pred_region
        _
      $region28: #{inverted_residual_forward.1} parent=11 // pred_fallthru
        _
      // Predicated region
      $region29: #{inverted_residual_forward.1} parent=11 // pred_check
        %p311 = pneg %p193
      $region30: #{inverted_residual_forward.1} parent=11 // pred_check_branch
        %313 = sbr.rel (%p311) target = $region32
      $region31: #{inverted_residual_forward.1} parent=11 // pred_region
        _
      $region32: #{inverted_residual_forward.1} parent=11 // pred_fallthru
        _
      // Predicated region
      $region33: #{inverted_residual_forward.1} parent=11 // pred_check
        %p314 = pneg %p214
      $region34: #{inverted_residual_forward.1} parent=11 // pred_check_branch
        %316 = sbr.rel (%p314) target = $region36
      $region35: #{inverted_residual_forward.1} parent=11 // pred_region
        _
      $region36: #{inverted_residual_forward.1} parent=11 // pred_fallthru
        _
      // Predicated region
      $region37: #{inverted_residual_forward.1} parent=11 // pred_check
        %p317 = pneg %p235
      $region38: #{inverted_residual_forward.1} parent=11 // pred_check_branch
        %319 = sbr.rel (%p317) target = $region40
      $region39: #{inverted_residual_forward.1} parent=11 // pred_region
        _
      $region40: #{inverted_residual_forward.1} parent=11 // pred_fallthru
        _
      // Predicated region
      $region41: #{inverted_residual_forward.1} parent=11 // pred_check
        %p320 = pneg %p256
      $region42: #{inverted_residual_forward.1} parent=11 // pred_check_branch
        %322 = sbr.rel (%p320) target = $region44
      $region43: #{inverted_residual_forward.1} parent=11 // pred_region
        _
      $region44: #{inverted_residual_forward.1} parent=11 // pred_fallthru
        _
    $region12: #{inverted_residual_forward.1} parent=5 // pred_fallthru
      _
    %p323 = scmp.lt.s32.totalorder %s16, 4
    // Predicated region
    $region45: #{inverted_residual_forward.1} parent=5 // pred_check
      %p324 = pneg %p323
    $region46: #{inverted_residual_forward.1} parent=5 // pred_check_branch
      %326 = sbr.rel (%p324) target = $region48
    $region47: #{inverted_residual_forward.1} parent=5 // pred_region
      // Predicated region
      $region49: #{inverted_residual_forward.1} parent=47 // pred_check
        %p327 = pneg %p50
      $region50: #{inverted_residual_forward.1} parent=47 // pred_check_branch
        %329 = sbr.rel (%p327) target = $region52
      $region51: #{inverted_residual_forward.1} parent=47 // pred_region
        %s330 = smul.u32 8, %s24
        %p331 = scmp.lt.s32.totalorder %s23, 1
        %s332 = scalar_select %p331, %s23, 1
        %p333 = scmp.lt.s32.totalorder %s330, 23
        %s334 = scalar_select %p333, %s330, 23
        %s335 = smul.addr %s334, 3
        %s336 = smul.addr %s332, 72
        %s337 = sadd.s32 %s335, %s336
        %s338 = smul.addr %s337, 8
        %s339 = scalar_lea.vmem %s0, %s338
        %s340 = smul.u32 8, %s24
      $region52: #{inverted_residual_forward.1} parent=47 // pred_fallthru
        _
      // Predicated region
      $region53: #{inverted_residual_forward.1} parent=47 // pred_check
        %p341 = pneg %p82
      $region54: #{inverted_residual_forward.1} parent=47 // pred_check_branch
        %343 = sbr.rel (%p341) target = $region56
      $region55: #{inverted_residual_forward.1} parent=47 // pred_region
        %s344 = sadd.s32 %s24, 1
        %s345 = smul.u32 %s344, 4
        %s346 = smul.u32 2, %s345
        %p347 = scmp.lt.s32.totalorder %s23, 1
        %s348 = scalar_select %p347, %s23, 1
        %p349 = scmp.lt.s32.totalorder %s346, 23
        %s350 = scalar_select %p349, %s346, 23
        %s351 = smul.addr %s350, 3
        %s352 = smul.addr %s348, 72
        %s353 = sadd.s32 %s351, %s352
        %s354 = smul.addr %s353, 8
        %s355 = scalar_lea.vmem %s1, %s354
        %s356 = sadd.s32 %s24, 1
        %s357 = smul.u32 %s356, 4
        %s358 = smul.u32 2, %s357
      $region56: #{inverted_residual_forward.1} parent=47 // pred_fallthru
        _
    $region48: #{inverted_residual_forward.1} parent=5 // pred_fallthru
      _
    %p359 = scmp.le.s32.totalorder 1, %s16
    %p360 = scmp.lt.s32.totalorder %s16, 5
    %p361 = pnand %p359, %p360
    %p362 = pneg %p361
    // Predicated region
    $region57: #{inverted_residual_forward.1} parent=5 // pred_check
      _
    $region58: #{inverted_residual_forward.1} parent=5 // pred_check_branch
      %364 = sbr.rel (%p361) target = $region60
    $region59: #{inverted_residual_forward.1} parent=5 // pred_region
      %s365 = ssub.s32 %s16, 1
      %s366 = smul.u32 8, %s26
      %p367 = scmp.lt.s32.totalorder %s25, 1
      %s368 = scalar_select %p367, %s25, 1
      %p369 = scmp.lt.s32.totalorder %s366, 23
      %s370 = scalar_select %p369, %s366, 23
      %s371 = smul.addr %s370, 3
      %s372 = smul.addr %s368, 72
      %s373 = sadd.s32 %s371, %s372
      %s374 = smul.addr %s373, 8
      %s375 = scalar_lea.vmem %s0, %s374
      %p376 = pneg %p56
      %p377 = pneg %p53
      %s378 = sadd.s32 %s26, 1
      %s379 = smul.u32 %s378, 4
      %s380 = smul.u32 2, %s379
      %p381 = scmp.lt.s32.totalorder %s25, 1
      %s382 = scalar_select %p381, %s25, 1
      %p383 = scmp.lt.s32.totalorder %s380, 23
      %s384 = scalar_select %p383, %s380, 23
      %s385 = smul.addr %s384, 3
      %s386 = smul.addr %s382, 72
      %s387 = sadd.s32 %s385, %s386
      %s388 = smul.addr %s387, 8
      %s389 = scalar_lea.vmem %s1, %s388
      %p390 = pneg %p88
      %p391 = pneg %p85
      %p392 = pneg %p109
      %p393 = pneg %p106
      %p394 = pneg %p130
      %p395 = pneg %p127
      %p396 = pneg %p151
      %p397 = pneg %p148
      %p398 = pneg %p172
      %p399 = pneg %p169
      %p400 = pneg %p193
      %p401 = pneg %p190
      %p402 = pneg %p214
      %p403 = pneg %p211
      %p404 = pneg %p235
      %p405 = pneg %p232
      %p406 = pneg %p256
      %p407 = pneg %p253
      %p408 = pneg %p284
      %p409 = pneg %p281
      %s410 = smul.u32 8, %s26
      %p411 = scmp.lt.s32.totalorder %s25, 1
      %s412 = scalar_select %p411, %s25, 1
      %p413 = scmp.lt.s32.totalorder %s410, 15
      %s414 = scalar_select %p413, %s410, 15
      %s415 = smul.addr %s414, 2
      %s416 = smul.addr %s412, 32
      %s417 = sadd.s32 %s415, %s416
      %s418 = smul.addr %s417, 8
      %s419 = scalar_lea.vmem %s10, %s418
      %s420 = smul.u32 8, %s26
      %p421 = scmp.lt.s32.totalorder %s25, 1
      %s422 = scalar_select %p421, %s25, 1
      %p423 = scmp.lt.s32.totalorder %s420, 23
      %s424 = scalar_select %p423, %s420, 23
      %s425 = smul.addr %s424, 3
      %s426 = smul.addr %s422, 72
      %s427 = sadd.s32 %s425, %s426
      %s428 = smul.addr %s427, 8
      %s429 = scalar_lea.vmem %s0, %s428
      %s430 = smul.u32 8, %s26
      %s431 = sadd.s32 %s26, 1
      %s432 = smul.u32 %s431, 4
      %s433 = smul.u32 2, %s432
      %p434 = scmp.lt.s32.totalorder %s25, 1
      %s435 = scalar_select %p434, %s25, 1
      %p436 = scmp.lt.s32.totalorder %s433, 23
      %s437 = scalar_select %p436, %s433, 23
      %s438 = smul.addr %s437, 3
      %s439 = smul.addr %s435, 72
      %s440 = sadd.s32 %s438, %s439
      %s441 = smul.addr %s440, 8
      %s442 = scalar_lea.vmem %s1, %s441
      %s443 = sadd.s32 %s26, 1
      %s444 = smul.u32 %s443, 4
      %s445 = smul.u32 2, %s444
      %s446 = smul.u32 8, %s26
      %p447 = scmp.lt.s32.totalorder %s25, 1
      %s448 = scalar_select %p447, %s25, 1
      %p449 = scmp.lt.s32.totalorder %s446, 15
      %s450 = scalar_select %p449, %s446, 15
      %s451 = smul.addr %s450, 2
      %s452 = smul.addr %s448, 32
      %s453 = sadd.s32 %s451, %s452
      %s454 = smul.addr %s453, 8
      %s455 = scalar_lea.vmem %s10, %s454
      %s456 = smul.u32 8, %s26
      %v457 = vld [vmem:[%s429] sm:$0xff]
      %v458 = vld [vmem:[%s429 + $0x8] sm:$0xff]
      %v459 = vld [vmem:[%s429 + $0x10] sm:$0x3]
      %v460 = vld [vmem:[%s429 + $0x18] sm:$0xff]
      %v461 = vld [vmem:[%s429 + $0x20] sm:$0xff]
      %v462 = vld [vmem:[%s429 + $0x28] sm:$0x3]
      %v463 = vld [vmem:[%s429 + $0x30] sm:$0xff]
      %v464 = vld [vmem:[%s429 + $0x38] sm:$0xff]
      %v465 = vld [vmem:[%s429 + $0x40] sm:$0x3]
      %v466 = vld [vmem:[%s429 + $0x48] sm:$0xff]
      %v467 = vld [vmem:[%s429 + $0x50] sm:$0xff]
      %v468 = vld [vmem:[%s429 + $0x58] sm:$0x3]
      %v469 = vld [vmem:[%s429 + $0x60] sm:$0xff]
      %v470 = vld [vmem:[%s429 + $0x68] sm:$0xff]
      %v471 = vld [vmem:[%s429 + $0x70] sm:$0x3]
      %v472 = vld [vmem:[%s429 + $0x78] sm:$0xff]
      %v473 = vld [vmem:[%s429 + $0x80] sm:$0xff]
      %v474 = vld [vmem:[%s429 + $0x88] sm:$0x3]
      %v475 = vld [vmem:[%s429 + $0x90] sm:$0xff]
      %v476 = vld [vmem:[%s429 + $0x98] sm:$0xff]
      %v477 = vld [vmem:[%s429 + $0xa0] sm:$0x3]
      %v478 = vld [vmem:[%s429 + $0xa8] sm:$0xff]
      %v479 = vld [vmem:[%s429 + $0xb0] sm:$0xff]
      %v480 = vld [vmem:[%s429 + $0xb8] sm:$0x3]
      %vm481 = vcmask 31744
      %482 = vst.msk [vmem:[#allocation2] sm:$0xff] %vm481, %v457
      %483 = vst.msk [vmem:[#allocation2 + $0x8] sm:$0xff] %vm481, %v458
      %vm484 = vcmask 25600
      %485 = vst.msk [vmem:[#allocation2 + $0x10] sm:$0x3] %vm484, %v459
      %486 = vst.msk [vmem:[#allocation2 + $0x18] sm:$0xff] %vm481, %v460
      %487 = vst.msk [vmem:[#allocation2 + $0x20] sm:$0xff] %vm481, %v461
      %488 = vst.msk [vmem:[#allocation2 + $0x28] sm:$0x3] %vm484, %v462
      %489 = vst.msk [vmem:[#allocation2 + $0x30] sm:$0xff] %vm481, %v463
      %490 = vst.msk [vmem:[#allocation2 + $0x38] sm:$0xff] %vm481, %v464
      %491 = vst.msk [vmem:[#allocation2 + $0x40] sm:$0x3] %vm484, %v465
      %492 = vst.msk [vmem:[#allocation2 + $0x48] sm:$0xff] %vm481, %v466
      %493 = vst.msk [vmem:[#allocation2 + $0x50] sm:$0xff] %vm481, %v467
      %494 = vst.msk [vmem:[#allocation2 + $0x58] sm:$0x3] %vm484, %v468
      %495 = vst.msk [vmem:[#allocation2 + $0x60] sm:$0xff] %vm481, %v469
      %496 = vst.msk [vmem:[#allocation2 + $0x68] sm:$0xff] %vm481, %v470
      %497 = vst.msk [vmem:[#allocation2 + $0x70] sm:$0x3] %vm484, %v471
      %498 = vst.msk [vmem:[#allocation2 + $0x78] sm:$0xff] %vm481, %v472
      %499 = vst.msk [vmem:[#allocation2 + $0x80] sm:$0xff] %vm481, %v473
      %500 = vst.msk [vmem:[#allocation2 + $0x88] sm:$0x3] %vm484, %v474
      %501 = vst.msk [vmem:[#allocation2 + $0x90] sm:$0xff] %vm481, %v475
      %502 = vst.msk [vmem:[#allocation2 + $0x98] sm:$0xff] %vm481, %v476
      %503 = vst.msk [vmem:[#allocation2 + $0xa0] sm:$0x3] %vm484, %v477
      %504 = vst.msk [vmem:[#allocation2 + $0xa8] sm:$0xff] %vm481, %v478
      %505 = vst.msk [vmem:[#allocation2 + $0xb0] sm:$0xff] %vm481, %v479
      %506 = vst.msk [vmem:[#allocation2 + $0xb8] sm:$0x3] %vm484, %v480
      %v507 = vld [vmem:[%s442] sm:$0xff]
      %v508 = vld [vmem:[%s442 + $0x8] sm:$0xff]
      %v509 = vld [vmem:[%s442 + $0x10] sm:$0x3]
      %v510 = vld [vmem:[%s442 + $0x18] sm:$0xff]
      %v511 = vld [vmem:[%s442 + $0x20] sm:$0xff]
      %v512 = vld [vmem:[%s442 + $0x28] sm:$0x3]
      %s513 = scalar_lea.vmem [#allocation2], 192
      %514 = vst.msk [vmem:[%s513] sm:$0xff] %vm481, %v507
      %515 = vst.msk [vmem:[%s513 + $0x8] sm:$0xff] %vm481, %v508
      %516 = vst.msk [vmem:[%s513 + $0x10] sm:$0x3] %vm484, %v509
      %517 = vst.msk [vmem:[%s513 + $0x18] sm:$0xff] %vm481, %v510
      %518 = vst.msk [vmem:[%s513 + $0x20] sm:$0xff] %vm481, %v511
      %519 = vst.msk [vmem:[%s513 + $0x28] sm:$0x3] %vm484, %v512
      %v520 = vld [vmem:[#allocation2] sm:$0xff]
      %v521 = vld [vmem:[#allocation2 + $0x8] sm:$0xff]
      %v522 = vld [vmem:[#allocation2 + $0x10] sm:$0x3]
      %v523 = vld [vmem:[#allocation2 + $0x18] sm:$0xff]
      %v524 = vld [vmem:[#allocation2 + $0x20] sm:$0xff]
      %v525 = vld [vmem:[#allocation2 + $0x28] sm:$0x3]
      %v526 = vld [vmem:[#allocation2 + $0x30] sm:$0xff]
      %v527 = vld [vmem:[#allocation2 + $0x38] sm:$0xff]
      %v528 = vld [vmem:[#allocation2 + $0x40] sm:$0x3]
      %v529 = vld [vmem:[#allocation2 + $0x48] sm:$0xff]
      %v530 = vld [vmem:[#allocation2 + $0x50] sm:$0xff]
      %v531 = vld [vmem:[#allocation2 + $0x58] sm:$0x3]
      %v532 = vld [vmem:[#allocation2 + $0x60] sm:$0xff]
      %v533 = vld [vmem:[#allocation2 + $0x68] sm:$0xff]
      %v534 = vld [vmem:[#allocation2 + $0x70] sm:$0x3]
      %v535 = vld [vmem:[#allocation2 + $0x78] sm:$0xff]
      %v536 = vld [vmem:[#allocation2 + $0x80] sm:$0xff]
      %v537 = vld [vmem:[#allocation2 + $0x88] sm:$0x3]
      %v538 = vld [vmem:[#allocation2 + $0x90] sm:$0xff]
      %v539 = vld [vmem:[#allocation2 + $0x98] sm:$0xff]
      %v540 = vld [vmem:[#allocation2 + $0xa0] sm:$0x3]
      %v541 = vld [vmem:[#allocation2 + $0xa8] sm:$0xff]
      %v542 = vld [vmem:[#allocation2 + $0xb0] sm:$0xff]
      %v543 = vld [vmem:[#allocation2 + $0xb8] sm:$0x3]
      %v544 = vld [vmem:[#allocation2 + $0xc0] sm:$0xff]
      %v545 = vld [vmem:[#allocation2 + $0xc8] sm:$0xff]
      %v546 = vld [vmem:[#allocation2 + $0xd0] sm:$0x3]
      %v547 = vld [vmem:[#allocation2 + $0xd8] sm:$0xff]
      %v548 = vld [vmem:[#allocation2 + $0xe0] sm:$0xff]
      %v549 = vld [vmem:[#allocation2 + $0xe8] sm:$0x3]
      %v550 = vld [vmem:[%s2] sm:$0xf]
      %552 = vset.pattern.permute.xlu0 0
      %553 = vperm.xlu0 %552, %v520
      %v554 = vpop.permute.xlu0 %553
      %557 = vset.pattern.permute.xlu0 0
      %558 = vperm.xlu0 %557, %v521
      %v559 = vpop.permute.xlu0 %558
      %562 = vset.pattern.permute.xlu0 0
      %563 = vperm.xlu0 %562, %v522
      %v564 = vpop.permute.xlu0 %563
      %567 = vset.pattern.permute.xlu0 0
      %568 = vperm.xlu0 %567, %v523
      %v569 = vpop.permute.xlu0 %568
      %572 = vset.pattern.permute.xlu0 0
      %573 = vperm.xlu0 %572, %v524
      %v574 = vpop.permute.xlu0 %573
      %577 = vset.pattern.permute.xlu0 0
      %578 = vperm.xlu0 %577, %v525
      %v579 = vpop.permute.xlu0 %578
      %582 = vset.pattern.permute.xlu0 0
      %583 = vperm.xlu0 %582, %v526
      %v584 = vpop.permute.xlu0 %583
      %587 = vset.pattern.permute.xlu0 0
      %588 = vperm.xlu0 %587, %v527
      %v589 = vpop.permute.xlu0 %588
      %592 = vset.pattern.permute.xlu0 0
      %593 = vperm.xlu0 %592, %v528
      %v594 = vpop.permute.xlu0 %593
      %597 = vset.pattern.permute.xlu0 0
      %598 = vperm.xlu0 %597, %v529
      %v599 = vpop.permute.xlu0 %598
      %602 = vset.pattern.permute.xlu0 0
      %603 = vperm.xlu0 %602, %v530
      %v604 = vpop.permute.xlu0 %603
      %607 = vset.pattern.permute.xlu0 0
      %608 = vperm.xlu0 %607, %v531
      %v609 = vpop.permute.xlu0 %608
      %612 = vset.pattern.permute.xlu0 0
      %613 = vperm.xlu0 %612, %v532
      %v614 = vpop.permute.xlu0 %613
      %617 = vset.pattern.permute.xlu0 0
      %618 = vperm.xlu0 %617, %v533
      %v619 = vpop.permute.xlu0 %618
      %622 = vset.pattern.permute.xlu0 0
      %623 = vperm.xlu0 %622, %v534
      %v624 = vpop.permute.xlu0 %623
      %627 = vset.pattern.permute.xlu0 0
      %628 = vperm.xlu0 %627, %v535
      %v629 = vpop.permute.xlu0 %628
      %632 = vset.pattern.permute.xlu0 0
      %633 = vperm.xlu0 %632, %v536
      %v634 = vpop.permute.xlu0 %633
      %637 = vset.pattern.permute.xlu0 0
      %638 = vperm.xlu0 %637, %v537
      %v639 = vpop.permute.xlu0 %638
      %642 = vset.pattern.permute.xlu0 0
      %643 = vperm.xlu0 %642, %v538
      %v644 = vpop.permute.xlu0 %643
      %647 = vset.pattern.permute.xlu0 0
      %648 = vperm.xlu0 %647, %v539
      %v649 = vpop.permute.xlu0 %648
      %652 = vset.pattern.permute.xlu0 0
      %653 = vperm.xlu0 %652, %v540
      %v654 = vpop.permute.xlu0 %653
      %657 = vset.pattern.permute.xlu0 0
      %658 = vperm.xlu0 %657, %v541
      %v659 = vpop.permute.xlu0 %658
      %662 = vset.pattern.permute.xlu0 0
      %663 = vperm.xlu0 %662, %v542
      %v664 = vpop.permute.xlu0 %663
      %667 = vset.pattern.permute.xlu0 0
      %668 = vperm.xlu0 %667, %v543
      %v669 = vpop.permute.xlu0 %668
      %672 = vset.pattern.permute.xlu0 0
      %673 = vperm.xlu0 %672, %v544
      %v674 = vpop.permute.xlu0 %673
      %677 = vset.pattern.permute.xlu0 0
      %678 = vperm.xlu0 %677, %v545
      %v679 = vpop.permute.xlu0 %678
      %682 = vset.pattern.permute.xlu0 0
      %683 = vperm.xlu0 %682, %v546
      %v684 = vpop.permute.xlu0 %683
      %687 = vset.pattern.permute.xlu0 0
      %688 = vperm.xlu0 %687, %v547
      %v689 = vpop.permute.xlu0 %688
      %692 = vset.pattern.permute.xlu0 0
      %693 = vperm.xlu0 %692, %v548
      %v694 = vpop.permute.xlu0 %693
      %697 = vset.pattern.permute.xlu0 0
      %698 = vperm.xlu0 %697, %v549
      %v699 = vpop.permute.xlu0 %698
      %v701 = vperm.slane %v550, 0
      %v702 = vmul.f32 %v554, %v701
      %v703 = vmul.f32 %v559, %v701
      %v704 = vmul.f32 %v564, %v701
      %v705 = vmul.f32 %v569, %v701
      %v706 = vmul.f32 %v574, %v701
      %v707 = vmul.f32 %v579, %v701
      %v708 = vmul.f32 %v584, %v701
      %v709 = vmul.f32 %v589, %v701
      %v710 = vmul.f32 %v594, %v701
      %v711 = vmul.f32 %v599, %v701
      %v712 = vmul.f32 %v604, %v701
      %v713 = vmul.f32 %v609, %v701
      %v714 = vmul.f32 %v614, %v701
      %v715 = vmul.f32 %v619, %v701
      %v716 = vmul.f32 %v624, %v701
      %v717 = vmul.f32 %v629, %v701
      %v718 = vmul.f32 %v634, %v701
      %v719 = vmul.f32 %v639, %v701
      %v720 = vmul.f32 %v644, %v701
      %v721 = vmul.f32 %v649, %v701
      %v722 = vmul.f32 %v654, %v701
      %v723 = vmul.f32 %v659, %v701
      %v724 = vmul.f32 %v664, %v701
      %v725 = vmul.f32 %v669, %v701
      %v726 = vmul.f32 %v674, %v701
      %v727 = vmul.f32 %v679, %v701
      %v728 = vmul.f32 %v684, %v701
      %v729 = vmul.f32 %v689, %v701
      %v730 = vmul.f32 %v694, %v701
      %v731 = vmul.f32 %v699, %v701
      %732 = vset.pattern.permute.xlu0 1
      %733 = vperm.xlu0 %732, %v520
      %v734 = vpop.permute.xlu0 %733
      %736 = vset.pattern.permute.xlu0 1
      %737 = vperm.xlu0 %736, %v521
      %v738 = vpop.permute.xlu0 %737
      %740 = vset.pattern.permute.xlu0 1
      %741 = vperm.xlu0 %740, %v522
      %v742 = vpop.permute.xlu0 %741
      %744 = vset.pattern.permute.xlu0 1
      %745 = vperm.xlu0 %744, %v523
      %v746 = vpop.permute.xlu0 %745
      %748 = vset.pattern.permute.xlu0 1
      %749 = vperm.xlu0 %748, %v524
      %v750 = vpop.permute.xlu0 %749
      %752 = vset.pattern.permute.xlu0 1
      %753 = vperm.xlu0 %752, %v525
      %v754 = vpop.permute.xlu0 %753
      %756 = vset.pattern.permute.xlu0 1
      %757 = vperm.xlu0 %756, %v526
      %v758 = vpop.permute.xlu0 %757
      %760 = vset.pattern.permute.xlu0 1
      %761 = vperm.xlu0 %760, %v527
      %v762 = vpop.permute.xlu0 %761
      %764 = vset.pattern.permute.xlu0 1
      %765 = vperm.xlu0 %764, %v528
      %v766 = vpop.permute.xlu0 %765
      %768 = vset.pattern.permute.xlu0 1
      %769 = vperm.xlu0 %768, %v529
      %v770 = vpop.permute.xlu0 %769
      %772 = vset.pattern.permute.xlu0 1
      %773 = vperm.xlu0 %772, %v530
      %v774 = vpop.permute.xlu0 %773
      %776 = vset.pattern.permute.xlu0 1
      %777 = vperm.xlu0 %776, %v531
      %v778 = vpop.permute.xlu0 %777
      %780 = vset.pattern.permute.xlu0 1
      %781 = vperm.xlu0 %780, %v532
      %v782 = vpop.permute.xlu0 %781
      %784 = vset.pattern.permute.xlu0 1
      %785 = vperm.xlu0 %784, %v533
      %v786 = vpop.permute.xlu0 %785
      %788 = vset.pattern.permute.xlu0 1
      %789 = vperm.xlu0 %788, %v534
      %v790 = vpop.permute.xlu0 %789
      %792 = vset.pattern.permute.xlu0 1
      %793 = vperm.xlu0 %792, %v535
      %v794 = vpop.permute.xlu0 %793
      %796 = vset.pattern.permute.xlu0 1
      %797 = vperm.xlu0 %796, %v536
      %v798 = vpop.permute.xlu0 %797
      %800 = vset.pattern.permute.xlu0 1
      %801 = vperm.xlu0 %800, %v537
      %v802 = vpop.permute.xlu0 %801
      %804 = vset.pattern.permute.xlu0 1
      %805 = vperm.xlu0 %804, %v538
      %v806 = vpop.permute.xlu0 %805
      %808 = vset.pattern.permute.xlu0 1
      %809 = vperm.xlu0 %808, %v539
      %v810 = vpop.permute.xlu0 %809
      %812 = vset.pattern.permute.xlu0 1
      %813 = vperm.xlu0 %812, %v540
      %v814 = vpop.permute.xlu0 %813
      %816 = vset.pattern.permute.xlu0 1
      %817 = vperm.xlu0 %816, %v541
      %v818 = vpop.permute.xlu0 %817
      %820 = vset.pattern.permute.xlu0 1
      %821 = vperm.xlu0 %820, %v542
      %v822 = vpop.permute.xlu0 %821
      %824 = vset.pattern.permute.xlu0 1
      %825 = vperm.xlu0 %824, %v543
      %v826 = vpop.permute.xlu0 %825
      %828 = vset.pattern.permute.xlu0 1
      %829 = vperm.xlu0 %828, %v544
      %v830 = vpop.permute.xlu0 %829
      %832 = vset.pattern.permute.xlu0 1
      %833 = vperm.xlu0 %832, %v545
      %v834 = vpop.permute.xlu0 %833
      %836 = vset.pattern.permute.xlu0 1
      %837 = vperm.xlu0 %836, %v546
      %v838 = vpop.permute.xlu0 %837
      %840 = vset.pattern.permute.xlu0 1
      %841 = vperm.xlu0 %840, %v547
      %v842 = vpop.permute.xlu0 %841
      %844 = vset.pattern.permute.xlu0 1
      %845 = vperm.xlu0 %844, %v548
      %v846 = vpop.permute.xlu0 %845
      %848 = vset.pattern.permute.xlu0 1
      %849 = vperm.xlu0 %848, %v549
      %v850 = vpop.permute.xlu0 %849
      %v852 = vperm.slane %v550, 1
      %v853 = vmul.f32 %v734, %v852
      %v854 = vmul.f32 %v738, %v852
      %v855 = vmul.f32 %v742, %v852
      %v856 = vmul.f32 %v746, %v852
      %v857 = vmul.f32 %v750, %v852
      %v858 = vmul.f32 %v754, %v852
      %v859 = vmul.f32 %v758, %v852
      %v860 = vmul.f32 %v762, %v852
      %v861 = vmul.f32 %v766, %v852
      %v862 = vmul.f32 %v770, %v852
      %v863 = vmul.f32 %v774, %v852
      %v864 = vmul.f32 %v778, %v852
      %v865 = vmul.f32 %v782, %v852
      %v866 = vmul.f32 %v786, %v852
      %v867 = vmul.f32 %v790, %v852
      %v868 = vmul.f32 %v794, %v852
      %v869 = vmul.f32 %v798, %v852
      %v870 = vmul.f32 %v802, %v852
      %v871 = vmul.f32 %v806, %v852
      %v872 = vmul.f32 %v810, %v852
      %v873 = vmul.f32 %v814, %v852
      %v874 = vmul.f32 %v818, %v852
      %v875 = vmul.f32 %v822, %v852
      %v876 = vmul.f32 %v826, %v852
      %v877 = vmul.f32 %v830, %v852
      %v878 = vmul.f32 %v834, %v852
      %v879 = vmul.f32 %v838, %v852
      %v880 = vmul.f32 %v842, %v852
      %v881 = vmul.f32 %v846, %v852
      %v882 = vmul.f32 %v850, %v852
      %v883 = vadd.f32 %v702, %v853
      %v884 = vadd.f32 %v703, %v854
      %v885 = vadd.f32 %v704, %v855
      %v886 = vadd.f32 %v705, %v856
      %v887 = vadd.f32 %v706, %v857
      %v888 = vadd.f32 %v707, %v858
      %v889 = vadd.f32 %v708, %v859
      %v890 = vadd.f32 %v709, %v860
      %v891 = vadd.f32 %v710, %v861
      %v892 = vadd.f32 %v711, %v862
      %v893 = vadd.f32 %v712, %v863
      %v894 = vadd.f32 %v713, %v864
      %v895 = vadd.f32 %v714, %v865
      %v896 = vadd.f32 %v715, %v866
      %v897 = vadd.f32 %v716, %v867
      %v898 = vadd.f32 %v717, %v868
      %v899 = vadd.f32 %v718, %v869
      %v900 = vadd.f32 %v719, %v870
      %v901 = vadd.f32 %v720, %v871
      %v902 = vadd.f32 %v721, %v872
      %v903 = vadd.f32 %v722, %v873
      %v904 = vadd.f32 %v723, %v874
      %v905 = vadd.f32 %v724, %v875
      %v906 = vadd.f32 %v725, %v876
      %v907 = vadd.f32 %v726, %v877
      %v908 = vadd.f32 %v727, %v878
      %v909 = vadd.f32 %v728, %v879
      %v910 = vadd.f32 %v729, %v880
      %v911 = vadd.f32 %v730, %v881
      %v912 = vadd.f32 %v731, %v882
      %913 = vset.pattern.permute.xlu0 2
      %914 = vperm.xlu0 %913, %v520
      %v915 = vpop.permute.xlu0 %914
      %917 = vset.pattern.permute.xlu0 2
      %918 = vperm.xlu0 %917, %v521
      %v919 = vpop.permute.xlu0 %918
      %921 = vset.pattern.permute.xlu0 2
      %922 = vperm.xlu0 %921, %v522
      %v923 = vpop.permute.xlu0 %922
      %925 = vset.pattern.permute.xlu0 2
      %926 = vperm.xlu0 %925, %v523
      %v927 = vpop.permute.xlu0 %926
      %929 = vset.pattern.permute.xlu0 2
      %930 = vperm.xlu0 %929, %v524
      %v931 = vpop.permute.xlu0 %930
      %933 = vset.pattern.permute.xlu0 2
      %934 = vperm.xlu0 %933, %v525
      %v935 = vpop.permute.xlu0 %934
      %937 = vset.pattern.permute.xlu0 2
      %938 = vperm.xlu0 %937, %v526
      %v939 = vpop.permute.xlu0 %938
      %941 = vset.pattern.permute.xlu0 2
      %942 = vperm.xlu0 %941, %v527
      %v943 = vpop.permute.xlu0 %942
      %945 = vset.pattern.permute.xlu0 2
      %946 = vperm.xlu0 %945, %v528
      %v947 = vpop.permute.xlu0 %946
      %949 = vset.pattern.permute.xlu0 2
      %950 = vperm.xlu0 %949, %v529
      %v951 = vpop.permute.xlu0 %950
      %953 = vset.pattern.permute.xlu0 2
      %954 = vperm.xlu0 %953, %v530
      %v955 = vpop.permute.xlu0 %954
      %957 = vset.pattern.permute.xlu0 2
      %958 = vperm.xlu0 %957, %v531
      %v959 = vpop.permute.xlu0 %958
      %961 = vset.pattern.permute.xlu0 2
      %962 = vperm.xlu0 %961, %v532
      %v963 = vpop.permute.xlu0 %962
      %965 = vset.pattern.permute.xlu0 2
      %966 = vperm.xlu0 %965, %v533
      %v967 = vpop.permute.xlu0 %966
      %969 = vset.pattern.permute.xlu0 2
      %970 = vperm.xlu0 %969, %v534
      %v971 = vpop.permute.xlu0 %970
      %973 = vset.pattern.permute.xlu0 2
      %974 = vperm.xlu0 %973, %v535
      %v975 = vpop.permute.xlu0 %974
      %977 = vset.pattern.permute.xlu0 2
      %978 = vperm.xlu0 %977, %v536
      %v979 = vpop.permute.xlu0 %978
      %981 = vset.pattern.permute.xlu0 2
      %982 = vperm.xlu0 %981, %v537
      %v983 = vpop.permute.xlu0 %982
      %985 = vset.pattern.permute.xlu0 2
      %986 = vperm.xlu0 %985, %v538
      %v987 = vpop.permute.xlu0 %986
      %989 = vset.pattern.permute.xlu0 2
      %990 = vperm.xlu0 %989, %v539
      %v991 = vpop.permute.xlu0 %990
      %993 = vset.pattern.permute.xlu0 2
      %994 = vperm.xlu0 %993, %v540
      %v995 = vpop.permute.xlu0 %994
      %997 = vset.pattern.permute.xlu0 2
      %998 = vperm.xlu0 %997, %v541
      %v999 = vpop.permute.xlu0 %998
      %1001 = vset.pattern.permute.xlu0 2
      %1002 = vperm.xlu0 %1001, %v542
      %v1003 = vpop.permute.xlu0 %1002
      %1005 = vset.pattern.permute.xlu0 2
      %1006 = vperm.xlu0 %1005, %v543
      %v1007 = vpop.permute.xlu0 %1006
      %1009 = vset.pattern.permute.xlu0 2
      %1010 = vperm.xlu0 %1009, %v544
      %v1011 = vpop.permute.xlu0 %1010
      %1013 = vset.pattern.permute.xlu0 2
      %1014 = vperm.xlu0 %1013, %v545
      %v1015 = vpop.permute.xlu0 %1014
      %1017 = vset.pattern.permute.xlu0 2
      %1018 = vperm.xlu0 %1017, %v546
      %v1019 = vpop.permute.xlu0 %1018
      %1021 = vset.pattern.permute.xlu0 2
      %1022 = vperm.xlu0 %1021, %v547
      %v1023 = vpop.permute.xlu0 %1022
      %1025 = vset.pattern.permute.xlu0 2
      %1026 = vperm.xlu0 %1025, %v548
      %v1027 = vpop.permute.xlu0 %1026
      %1029 = vset.pattern.permute.xlu0 2
      %1030 = vperm.xlu0 %1029, %v549
      %v1031 = vpop.permute.xlu0 %1030
      %v1033 = vperm.slane %v550, 2
      %v1034 = vmul.f32 %v915, %v1033
      %v1035 = vmul.f32 %v919, %v1033
      %v1036 = vmul.f32 %v923, %v1033
      %v1037 = vmul.f32 %v927, %v1033
      %v1038 = vmul.f32 %v931, %v1033
      %v1039 = vmul.f32 %v935, %v1033
      %v1040 = vmul.f32 %v939, %v1033
      %v1041 = vmul.f32 %v943, %v1033
      %v1042 = vmul.f32 %v947, %v1033
      %v1043 = vmul.f32 %v951, %v1033
      %v1044 = vmul.f32 %v955, %v1033
      %v1045 = vmul.f32 %v959, %v1033
      %v1046 = vmul.f32 %v963, %v1033
      %v1047 = vmul.f32 %v967, %v1033
      %v1048 = vmul.f32 %v971, %v1033
      %v1049 = vmul.f32 %v975, %v1033
      %v1050 = vmul.f32 %v979, %v1033
      %v1051 = vmul.f32 %v983, %v1033
      %v1052 = vmul.f32 %v987, %v1033
      %v1053 = vmul.f32 %v991, %v1033
      %v1054 = vmul.f32 %v995, %v1033
      %v1055 = vmul.f32 %v999, %v1033
      %v1056 = vmul.f32 %v1003, %v1033
      %v1057 = vmul.f32 %v1007, %v1033
      %v1058 = vmul.f32 %v1011, %v1033
      %v1059 = vmul.f32 %v1015, %v1033
      %v1060 = vmul.f32 %v1019, %v1033
      %v1061 = vmul.f32 %v1023, %v1033
      %v1062 = vmul.f32 %v1027, %v1033
      %v1063 = vmul.f32 %v1031, %v1033
      %v1064 = vadd.f32 %v883, %v1034
      %v1065 = vadd.f32 %v884, %v1035
      %v1066 = vadd.f32 %v885, %v1036
      %v1067 = vadd.f32 %v886, %v1037
      %v1068 = vadd.f32 %v887, %v1038
      %v1069 = vadd.f32 %v888, %v1039
      %v1070 = vadd.f32 %v889, %v1040
      %v1071 = vadd.f32 %v890, %v1041
      %v1072 = vadd.f32 %v891, %v1042
      %v1073 = vadd.f32 %v892, %v1043
      %v1074 = vadd.f32 %v893, %v1044
      %v1075 = vadd.f32 %v894, %v1045
      %v1076 = vadd.f32 %v895, %v1046
      %v1077 = vadd.f32 %v896, %v1047
      %v1078 = vadd.f32 %v897, %v1048
      %v1079 = vadd.f32 %v898, %v1049
      %v1080 = vadd.f32 %v899, %v1050
      %v1081 = vadd.f32 %v900, %v1051
      %v1082 = vadd.f32 %v901, %v1052
      %v1083 = vadd.f32 %v902, %v1053
      %v1084 = vadd.f32 %v903, %v1054
      %v1085 = vadd.f32 %v904, %v1055
      %v1086 = vadd.f32 %v905, %v1056
      %v1087 = vadd.f32 %v906, %v1057
      %v1088 = vadd.f32 %v907, %v1058
      %v1089 = vadd.f32 %v908, %v1059
      %v1090 = vadd.f32 %v909, %v1060
      %v1091 = vadd.f32 %v910, %v1061
      %v1092 = vadd.f32 %v911, %v1062
      %v1093 = vadd.f32 %v912, %v1063
      %1094 = vset.pattern.permute.xlu0 3
      %1095 = vperm.xlu0 %1094, %v520
      %v1096 = vpop.permute.xlu0 %1095
      %1098 = vset.pattern.permute.xlu0 3
      %1099 = vperm.xlu0 %1098, %v521
      %v1100 = vpop.permute.xlu0 %1099
      %1102 = vset.pattern.permute.xlu0 3
      %1103 = vperm.xlu0 %1102, %v522
      %v1104 = vpop.permute.xlu0 %1103
      %1106 = vset.pattern.permute.xlu0 3
      %1107 = vperm.xlu0 %1106, %v523
      %v1108 = vpop.permute.xlu0 %1107
      %1110 = vset.pattern.permute.xlu0 3
      %1111 = vperm.xlu0 %1110, %v524
      %v1112 = vpop.permute.xlu0 %1111
      %1114 = vset.pattern.permute.xlu0 3
      %1115 = vperm.xlu0 %1114, %v525
      %v1116 = vpop.permute.xlu0 %1115
      %1118 = vset.pattern.permute.xlu0 3
      %1119 = vperm.xlu0 %1118, %v526
      %v1120 = vpop.permute.xlu0 %1119
      %1122 = vset.pattern.permute.xlu0 3
      %1123 = vperm.xlu0 %1122, %v527
      %v1124 = vpop.permute.xlu0 %1123
      %1126 = vset.pattern.permute.xlu0 3
      %1127 = vperm.xlu0 %1126, %v528
      %v1128 = vpop.permute.xlu0 %1127
      %1130 = vset.pattern.permute.xlu0 3
      %1131 = vperm.xlu0 %1130, %v529
      %v1132 = vpop.permute.xlu0 %1131
      %1134 = vset.pattern.permute.xlu0 3
      %1135 = vperm.xlu0 %1134, %v530
      %v1136 = vpop.permute.xlu0 %1135
      %1138 = vset.pattern.permute.xlu0 3
      %1139 = vperm.xlu0 %1138, %v531
      %v1140 = vpop.permute.xlu0 %1139
      %1142 = vset.pattern.permute.xlu0 3
      %1143 = vperm.xlu0 %1142, %v532
      %v1144 = vpop.permute.xlu0 %1143
      %1146 = vset.pattern.permute.xlu0 3
      %1147 = vperm.xlu0 %1146, %v533
      %v1148 = vpop.permute.xlu0 %1147
      %1150 = vset.pattern.permute.xlu0 3
      %1151 = vperm.xlu0 %1150, %v534
      %v1152 = vpop.permute.xlu0 %1151
      %1154 = vset.pattern.permute.xlu0 3
      %1155 = vperm.xlu0 %1154, %v535
      %v1156 = vpop.permute.xlu0 %1155
      %1158 = vset.pattern.permute.xlu0 3
      %1159 = vperm.xlu0 %1158, %v536
      %v1160 = vpop.permute.xlu0 %1159
      %1162 = vset.pattern.permute.xlu0 3
      %1163 = vperm.xlu0 %1162, %v537
      %v1164 = vpop.permute.xlu0 %1163
      %1166 = vset.pattern.permute.xlu0 3
      %1167 = vperm.xlu0 %1166, %v538
      %v1168 = vpop.permute.xlu0 %1167
      %1170 = vset.pattern.permute.xlu0 3
      %1171 = vperm.xlu0 %1170, %v539
      %v1172 = vpop.permute.xlu0 %1171
      %1174 = vset.pattern.permute.xlu0 3
      %1175 = vperm.xlu0 %1174, %v540
      %v1176 = vpop.permute.xlu0 %1175
      %1178 = vset.pattern.permute.xlu0 3
      %1179 = vperm.xlu0 %1178, %v541
      %v1180 = vpop.permute.xlu0 %1179
      %1182 = vset.pattern.permute.xlu0 3
      %1183 = vperm.xlu0 %1182, %v542
      %v1184 = vpop.permute.xlu0 %1183
      %1186 = vset.pattern.permute.xlu0 3
      %1187 = vperm.xlu0 %1186, %v543
      %v1188 = vpop.permute.xlu0 %1187
      %1190 = vset.pattern.permute.xlu0 3
      %1191 = vperm.xlu0 %1190, %v544
      %v1192 = vpop.permute.xlu0 %1191
      %1194 = vset.pattern.permute.xlu0 3
      %1195 = vperm.xlu0 %1194, %v545
      %v1196 = vpop.permute.xlu0 %1195
      %1198 = vset.pattern.permute.xlu0 3
      %1199 = vperm.xlu0 %1198, %v546
      %v1200 = vpop.permute.xlu0 %1199
      %1202 = vset.pattern.permute.xlu0 3
      %1203 = vperm.xlu0 %1202, %v547
      %v1204 = vpop.permute.xlu0 %1203
      %1206 = vset.pattern.permute.xlu0 3
      %1207 = vperm.xlu0 %1206, %v548
      %v1208 = vpop.permute.xlu0 %1207
      %1210 = vset.pattern.permute.xlu0 3
      %1211 = vperm.xlu0 %1210, %v549
      %v1212 = vpop.permute.xlu0 %1211
      %v1214 = vperm.slane %v550, 3
      %v1215 = vmul.f32 %v1096, %v1214
      %v1216 = vmul.f32 %v1100, %v1214
      %v1217 = vmul.f32 %v1104, %v1214
      %v1218 = vmul.f32 %v1108, %v1214
      %v1219 = vmul.f32 %v1112, %v1214
      %v1220 = vmul.f32 %v1116, %v1214
      %v1221 = vmul.f32 %v1120, %v1214
      %v1222 = vmul.f32 %v1124, %v1214
      %v1223 = vmul.f32 %v1128, %v1214
      %v1224 = vmul.f32 %v1132, %v1214
      %v1225 = vmul.f32 %v1136, %v1214
      %v1226 = vmul.f32 %v1140, %v1214
      %v1227 = vmul.f32 %v1144, %v1214
      %v1228 = vmul.f32 %v1148, %v1214
      %v1229 = vmul.f32 %v1152, %v1214
      %v1230 = vmul.f32 %v1156, %v1214
      %v1231 = vmul.f32 %v1160, %v1214
      %v1232 = vmul.f32 %v1164, %v1214
      %v1233 = vmul.f32 %v1168, %v1214
      %v1234 = vmul.f32 %v1172, %v1214
      %v1235 = vmul.f32 %v1176, %v1214
      %v1236 = vmul.f32 %v1180, %v1214
      %v1237 = vmul.f32 %v1184, %v1214
      %v1238 = vmul.f32 %v1188, %v1214
      %v1239 = vmul.f32 %v1192, %v1214
      %v1240 = vmul.f32 %v1196, %v1214
      %v1241 = vmul.f32 %v1200, %v1214
      %v1242 = vmul.f32 %v1204, %v1214
      %v1243 = vmul.f32 %v1208, %v1214
      %v1244 = vmul.f32 %v1212, %v1214
      %v1245 = vadd.f32 %v1064, %v1215
      %v1246 = vadd.f32 %v1065, %v1216
      %v1247 = vadd.f32 %v1066, %v1217
      %v1248 = vadd.f32 %v1067, %v1218
      %v1249 = vadd.f32 %v1068, %v1219
      %v1250 = vadd.f32 %v1069, %v1220
      %v1251 = vadd.f32 %v1070, %v1221
      %v1252 = vadd.f32 %v1071, %v1222
      %v1253 = vadd.f32 %v1072, %v1223
      %v1254 = vadd.f32 %v1073, %v1224
      %v1255 = vadd.f32 %v1074, %v1225
      %v1256 = vadd.f32 %v1075, %v1226
      %v1257 = vadd.f32 %v1076, %v1227
      %v1258 = vadd.f32 %v1077, %v1228
      %v1259 = vadd.f32 %v1078, %v1229
      %v1260 = vadd.f32 %v1079, %v1230
      %v1261 = vadd.f32 %v1080, %v1231
      %v1262 = vadd.f32 %v1081, %v1232
      %v1263 = vadd.f32 %v1082, %v1233
      %v1264 = vadd.f32 %v1083, %v1234
      %v1265 = vadd.f32 %v1084, %v1235
      %v1266 = vadd.f32 %v1085, %v1236
      %v1267 = vadd.f32 %v1086, %v1237
      %v1268 = vadd.f32 %v1087, %v1238
      %v1269 = vadd.f32 %v1088, %v1239
      %v1270 = vadd.f32 %v1089, %v1240
      %v1271 = vadd.f32 %v1090, %v1241
      %v1272 = vadd.f32 %v1091, %v1242
      %v1273 = vadd.f32 %v1092, %v1243
      %v1274 = vadd.f32 %v1093, %v1244
      %v1275 = vld [vmem:[%s3] sm:$0x1]
      %v1277 = vperm.slane %v1275, 0
      %v1279 = vmul.f32 %v1245, %v1277
      %v1280 = vmul.f32 %v1246, %v1277
      %v1281 = vmul.f32 %v1247, %v1277
      %v1282 = vmul.f32 %v1248, %v1277
      %v1283 = vmul.f32 %v1249, %v1277
      %v1284 = vmul.f32 %v1250, %v1277
      %v1285 = vmul.f32 %v1251, %v1277
      %v1286 = vmul.f32 %v1252, %v1277
      %v1287 = vmul.f32 %v1253, %v1277
      %v1288 = vmul.f32 %v1254, %v1277
      %v1289 = vmul.f32 %v1255, %v1277
      %v1290 = vmul.f32 %v1256, %v1277
      %v1291 = vmul.f32 %v1257, %v1277
      %v1292 = vmul.f32 %v1258, %v1277
      %v1293 = vmul.f32 %v1259, %v1277
      %v1294 = vmul.f32 %v1260, %v1277
      %v1295 = vmul.f32 %v1261, %v1277
      %v1296 = vmul.f32 %v1262, %v1277
      %v1297 = vmul.f32 %v1263, %v1277
      %v1298 = vmul.f32 %v1264, %v1277
      %v1299 = vmul.f32 %v1265, %v1277
      %v1300 = vmul.f32 %v1266, %v1277
      %v1301 = vmul.f32 %v1267, %v1277
      %v1302 = vmul.f32 %v1268, %v1277
      %v1303 = vmul.f32 %v1269, %v1277
      %v1304 = vmul.f32 %v1270, %v1277
      %v1305 = vmul.f32 %v1271, %v1277
      %v1306 = vmul.f32 %v1272, %v1277
      %v1307 = vmul.f32 %v1273, %v1277
      %v1308 = vmul.f32 %v1274, %v1277
      %v1309 = vld [vmem:[%s4] sm:$0x1]
      %v1311 = vperm.slane %v1309, 0
      %v1313 = vadd.f32 %v1279, %v1311
      %v1314 = vadd.f32 %v1280, %v1311
      %v1315 = vadd.f32 %v1281, %v1311
      %v1316 = vadd.f32 %v1282, %v1311
      %v1317 = vadd.f32 %v1283, %v1311
      %v1318 = vadd.f32 %v1284, %v1311
      %v1319 = vadd.f32 %v1285, %v1311
      %v1320 = vadd.f32 %v1286, %v1311
      %v1321 = vadd.f32 %v1287, %v1311
      %v1322 = vadd.f32 %v1288, %v1311
      %v1323 = vadd.f32 %v1289, %v1311
      %v1324 = vadd.f32 %v1290, %v1311
      %v1325 = vadd.f32 %v1291, %v1311
      %v1326 = vadd.f32 %v1292, %v1311
      %v1327 = vadd.f32 %v1293, %v1311
      %v1328 = vadd.f32 %v1294, %v1311
      %v1329 = vadd.f32 %v1295, %v1311
      %v1330 = vadd.f32 %v1296, %v1311
      %v1331 = vadd.f32 %v1297, %v1311
      %v1332 = vadd.f32 %v1298, %v1311
      %v1333 = vadd.f32 %v1299, %v1311
      %v1334 = vadd.f32 %v1300, %v1311
      %v1335 = vadd.f32 %v1301, %v1311
      %v1336 = vadd.f32 %v1302, %v1311
      %v1337 = vadd.f32 %v1303, %v1311
      %v1338 = vadd.f32 %v1304, %v1311
      %v1339 = vadd.f32 %v1305, %v1311
      %v1340 = vadd.f32 %v1306, %v1311
      %v1341 = vadd.f32 %v1307, %v1311
      %v1342 = vadd.f32 %v1308, %v1311
      %v1343 = vmax.f32 %v1313, 0.0
      %v1344 = vmax.f32 %v1314, 0.0
      %v1345 = vmax.f32 %v1315, 0.0
      %v1346 = vmax.f32 %v1316, 0.0
      %v1347 = vmax.f32 %v1317, 0.0
      %v1348 = vmax.f32 %v1318, 0.0
      %v1349 = vmax.f32 %v1319, 0.0
      %v1350 = vmax.f32 %v1320, 0.0
      %v1351 = vmax.f32 %v1321, 0.0
      %v1352 = vmax.f32 %v1322, 0.0
      %v1353 = vmax.f32 %v1323, 0.0
      %v1354 = vmax.f32 %v1324, 0.0
      %v1355 = vmax.f32 %v1325, 0.0
      %v1356 = vmax.f32 %v1326, 0.0
      %v1357 = vmax.f32 %v1327, 0.0
      %v1358 = vmax.f32 %v1328, 0.0
      %v1359 = vmax.f32 %v1329, 0.0
      %v1360 = vmax.f32 %v1330, 0.0
      %v1361 = vmax.f32 %v1331, 0.0
      %v1362 = vmax.f32 %v1332, 0.0
      %v1363 = vmax.f32 %v1333, 0.0
      %v1364 = vmax.f32 %v1334, 0.0
      %v1365 = vmax.f32 %v1335, 0.0
      %v1366 = vmax.f32 %v1336, 0.0
      %v1367 = vmax.f32 %v1337, 0.0
      %v1368 = vmax.f32 %v1338, 0.0
      %v1369 = vmax.f32 %v1339, 0.0
      %v1370 = vmax.f32 %v1340, 0.0
      %v1371 = vmax.f32 %v1341, 0.0
      %v1372 = vmax.f32 %v1342, 0.0
      %v1373 = vmin.f32 %v1343, 6.0
      %v1374 = vmin.f32 %v1344, 6.0
      %v1375 = vmin.f32 %v1345, 6.0
      %v1376 = vmin.f32 %v1346, 6.0
      %v1377 = vmin.f32 %v1347, 6.0
      %v1378 = vmin.f32 %v1348, 6.0
      %v1379 = vmin.f32 %v1349, 6.0
      %v1380 = vmin.f32 %v1350, 6.0
      %v1381 = vmin.f32 %v1351, 6.0
      %v1382 = vmin.f32 %v1352, 6.0
      %v1383 = vmin.f32 %v1353, 6.0
      %v1384 = vmin.f32 %v1354, 6.0
      %v1385 = vmin.f32 %v1355, 6.0
      %v1386 = vmin.f32 %v1356, 6.0
      %v1387 = vmin.f32 %v1357, 6.0
      %v1388 = vmin.f32 %v1358, 6.0
      %v1389 = vmin.f32 %v1359, 6.0
      %v1390 = vmin.f32 %v1360, 6.0
      %v1391 = vmin.f32 %v1361, 6.0
      %v1392 = vmin.f32 %v1362, 6.0
      %v1393 = vmin.f32 %v1363, 6.0
      %v1394 = vmin.f32 %v1364, 6.0
      %v1395 = vmin.f32 %v1365, 6.0
      %v1396 = vmin.f32 %v1366, 6.0
      %v1397 = vmin.f32 %v1367, 6.0
      %v1398 = vmin.f32 %v1368, 6.0
      %v1399 = vmin.f32 %v1369, 6.0
      %v1400 = vmin.f32 %v1370, 6.0
      %v1401 = vmin.f32 %v1371, 6.0
      %v1402 = vmin.f32 %v1372, 6.0
      %s1403 = smul.u32 %s26, 8
      %v1404 = vstv %s1403
      %v1405 = vadd.s32 %v1404, 1
      %v1406 = vadd.s32 %v1404, 2
      %v1407 = vadd.s32 %v1404, 3
      %v1408 = vadd.s32 %v1404, 4
      %v1409 = vadd.s32 %v1404, 5
      %v1410 = vadd.s32 %v1404, 6
      %v1411 = vadd.s32 %v1404, 7
      %v1412 = vadd.s32 %v1404, 8
      %v1413 = vadd.s32 %v1404, 9
      %v1414 = vlaneseq
      %v1415 = vshrl.u32 %v1414, 7
      %v1416 = vadd.s32 %v1415, 8
      %v1417 = vadd.s32 %v1415, 16
      %vm1418 = vcmp.ge.s32.totalorder %v1404, 1
      %vm1419 = vcmp.ge.s32.totalorder %v1405, 1
      %vm1420 = vcmp.ge.s32.totalorder %v1406, 1
      %vm1421 = vcmp.ge.s32.totalorder %v1407, 1
      %vm1422 = vcmp.ge.s32.totalorder %v1408, 1
      %vm1423 = vcmp.ge.s32.totalorder %v1409, 1
      %vm1424 = vcmp.ge.s32.totalorder %v1410, 1
      %vm1425 = vcmp.ge.s32.totalorder %v1411, 1
      %vm1426 = vcmp.ge.s32.totalorder %v1412, 1
      %vm1427 = vcmp.ge.s32.totalorder %v1413, 1
      %vm1428 = vcmp.le.s32.totalorder %v1404, 16
      %vm1429 = vcmp.le.s32.totalorder %v1405, 16
      %vm1430 = vcmp.le.s32.totalorder %v1406, 16
      %vm1431 = vcmp.le.s32.totalorder %v1407, 16
      %vm1432 = vcmp.le.s32.totalorder %v1408, 16
      %vm1433 = vcmp.le.s32.totalorder %v1409, 16
      %vm1434 = vcmp.le.s32.totalorder %v1410, 16
      %vm1435 = vcmp.le.s32.totalorder %v1411, 16
      %vm1436 = vcmp.le.s32.totalorder %v1412, 16
      %vm1437 = vcmp.le.s32.totalorder %v1413, 16
      %vm1438 = vmand %vm1418, %vm1428
      %vm1439 = vmand %vm1419, %vm1429
      %vm1440 = vmand %vm1420, %vm1430
      %vm1441 = vmand %vm1421, %vm1431
      %vm1442 = vmand %vm1422, %vm1432
      %vm1443 = vmand %vm1423, %vm1433
      %vm1444 = vmand %vm1424, %vm1434
      %vm1445 = vmand %vm1425, %vm1435
      %vm1446 = vmand %vm1426, %vm1436
      %vm1447 = vmand %vm1427, %vm1437
      %vm1448 = vcmp.ge.s32.totalorder %v1415, 1
      %vm1449 = vcmp.ge.s32.totalorder %v1416, 1
      %vm1450 = vcmp.ge.s32.totalorder %v1417, 1
      %vm1451 = vmand %vm1438, %vm1448
      %vm1452 = vmand %vm1438, %vm1449
      %vm1453 = vmand %vm1438, %vm1450
      %vm1454 = vmand %vm1439, %vm1448
      %vm1455 = vmand %vm1439, %vm1449
      %vm1456 = vmand %vm1439, %vm1450
      %vm1457 = vmand %vm1440, %vm1448
      %vm1458 = vmand %vm1440, %vm1449
      %vm1459 = vmand %vm1440, %vm1450
      %vm1460 = vmand %vm1441, %vm1448
      %vm1461 = vmand %vm1441, %vm1449
      %vm1462 = vmand %vm1441, %vm1450
      %vm1463 = vmand %vm1442, %vm1448
      %vm1464 = vmand %vm1442, %vm1449
      %vm1465 = vmand %vm1442, %vm1450
      %vm1466 = vmand %vm1443, %vm1448
      %vm1467 = vmand %vm1443, %vm1449
      %vm1468 = vmand %vm1443, %vm1450
      %vm1469 = vmand %vm1444, %vm1448
      %vm1470 = vmand %vm1444, %vm1449
      %vm1471 = vmand %vm1444, %vm1450
      %vm1472 = vmand %vm1445, %vm1448
      %vm1473 = vmand %vm1445, %vm1449
      %vm1474 = vmand %vm1445, %vm1450
      %vm1475 = vmand %vm1446, %vm1448
      %vm1476 = vmand %vm1446, %vm1449
      %vm1477 = vmand %vm1446, %vm1450
      %vm1478 = vmand %vm1447, %vm1448
      %vm1479 = vmand %vm1447, %vm1449
      %vm1480 = vmand %vm1447, %vm1450
      %vm1481 = vcmp.le.s32.totalorder %v1415, 16
      %vm1482 = vcmp.le.s32.totalorder %v1416, 16
      %vm1483 = vcmp.le.s32.totalorder %v1417, 16
      %vm1484 = vmand %vm1451, %vm1481
      %vm1485 = vmand %vm1452, %vm1482
      %vm1486 = vmand %vm1453, %vm1483
      %vm1487 = vmand %vm1454, %vm1481
      %vm1488 = vmand %vm1455, %vm1482
      %vm1489 = vmand %vm1456, %vm1483
      %vm1490 = vmand %vm1457, %vm1481
      %vm1491 = vmand %vm1458, %vm1482
      %vm1492 = vmand %vm1459, %vm1483
      %vm1493 = vmand %vm1460, %vm1481
      %vm1494 = vmand %vm1461, %vm1482
      %vm1495 = vmand %vm1462, %vm1483
      %vm1496 = vmand %vm1463, %vm1481
      %vm1497 = vmand %vm1464, %vm1482
      %vm1498 = vmand %vm1465, %vm1483
      %vm1499 = vmand %vm1466, %vm1481
      %vm1500 = vmand %vm1467, %vm1482
      %vm1501 = vmand %vm1468, %vm1483
      %vm1502 = vmand %vm1469, %vm1481
      %vm1503 = vmand %vm1470, %vm1482
      %vm1504 = vmand %vm1471, %vm1483
      %vm1505 = vmand %vm1472, %vm1481
      %vm1506 = vmand %vm1473, %vm1482
      %vm1507 = vmand %vm1474, %vm1483
      %vm1508 = vmand %vm1475, %vm1481
      %vm1509 = vmand %vm1476, %vm1482
      %vm1510 = vmand %vm1477, %vm1483
      %vm1511 = vmand %vm1478, %vm1481
      %vm1512 = vmand %vm1479, %vm1482
      %vm1513 = vmand %vm1480, %vm1483
      %v1514 = vsel %vm1484, 1, 0
      %v1515 = vsel %vm1485, 1, 0
      %v1516 = vsel %vm1486, 1, 0
      %v1517 = vsel %vm1487, 1, 0
      %v1518 = vsel %vm1488, 1, 0
      %v1519 = vsel %vm1489, 1, 0
      %v1520 = vsel %vm1490, 1, 0
      %v1521 = vsel %vm1491, 1, 0
      %v1522 = vsel %vm1492, 1, 0
      %v1523 = vsel %vm1493, 1, 0
      %v1524 = vsel %vm1494, 1, 0
      %v1525 = vsel %vm1495, 1, 0
      %v1526 = vsel %vm1496, 1, 0
      %v1527 = vsel %vm1497, 1, 0
      %v1528 = vsel %vm1498, 1, 0
      %v1529 = vsel %vm1499, 1, 0
      %v1530 = vsel %vm1500, 1, 0
      %v1531 = vsel %vm1501, 1, 0
      %v1532 = vsel %vm1502, 1, 0
      %v1533 = vsel %vm1503, 1, 0
      %v1534 = vsel %vm1504, 1, 0
      %v1535 = vsel %vm1505, 1, 0
      %v1536 = vsel %vm1506, 1, 0
      %v1537 = vsel %vm1507, 1, 0
      %v1538 = vsel %vm1508, 1, 0
      %v1539 = vsel %vm1509, 1, 0
      %v1540 = vsel %vm1510, 1, 0
      %v1541 = vsel %vm1511, 1, 0
      %v1542 = vsel %vm1512, 1, 0
      %v1543 = vsel %vm1513, 1, 0
      %vm1544 = vcmp.eq.s32.totalorder %v1514, 1
      %vm1545 = vcmp.eq.s32.totalorder %v1515, 1
      %vm1546 = vcmp.eq.s32.totalorder %v1516, 1
      %vm1547 = vcmp.eq.s32.totalorder %v1517, 1
      %vm1548 = vcmp.eq.s32.totalorder %v1518, 1
      %vm1549 = vcmp.eq.s32.totalorder %v1519, 1
      %vm1550 = vcmp.eq.s32.totalorder %v1520, 1
      %vm1551 = vcmp.eq.s32.totalorder %v1521, 1
      %vm1552 = vcmp.eq.s32.totalorder %v1522, 1
      %vm1553 = vcmp.eq.s32.totalorder %v1523, 1
      %vm1554 = vcmp.eq.s32.totalorder %v1524, 1
      %vm1555 = vcmp.eq.s32.totalorder %v1525, 1
      %vm1556 = vcmp.eq.s32.totalorder %v1526, 1
      %vm1557 = vcmp.eq.s32.totalorder %v1527, 1
      %vm1558 = vcmp.eq.s32.totalorder %v1528, 1
      %vm1559 = vcmp.eq.s32.totalorder %v1529, 1
      %vm1560 = vcmp.eq.s32.totalorder %v1530, 1
      %vm1561 = vcmp.eq.s32.totalorder %v1531, 1
      %vm1562 = vcmp.eq.s32.totalorder %v1532, 1
      %vm1563 = vcmp.eq.s32.totalorder %v1533, 1
      %vm1564 = vcmp.eq.s32.totalorder %v1534, 1
      %vm1565 = vcmp.eq.s32.totalorder %v1535, 1
      %vm1566 = vcmp.eq.s32.totalorder %v1536, 1
      %vm1567 = vcmp.eq.s32.totalorder %v1537, 1
      %vm1568 = vcmp.eq.s32.totalorder %v1538, 1
      %vm1569 = vcmp.eq.s32.totalorder %v1539, 1
      %vm1570 = vcmp.eq.s32.totalorder %v1540, 1
      %vm1571 = vcmp.eq.s32.totalorder %v1541, 1
      %vm1572 = vcmp.eq.s32.totalorder %v1542, 1
      %vm1573 = vcmp.eq.s32.totalorder %v1543, 1
      %v1574 = vsel %vm1544, %v1373, 0.0
      %v1575 = vsel %vm1545, %v1374, 0.0
      %v1576 = vsel %vm1546, %v1375, 0.0
      %v1577 = vsel %vm1547, %v1376, 0.0
      %v1578 = vsel %vm1548, %v1377, 0.0
      %v1579 = vsel %vm1549, %v1378, 0.0
      %v1580 = vsel %vm1550, %v1379, 0.0
      %v1581 = vsel %vm1551, %v1380, 0.0
      %v1582 = vsel %vm1552, %v1381, 0.0
      %v1583 = vsel %vm1553, %v1382, 0.0
      %v1584 = vsel %vm1554, %v1383, 0.0
      %v1585 = vsel %vm1555, %v1384, 0.0
      %v1586 = vsel %vm1556, %v1385, 0.0
      %v1587 = vsel %vm1557, %v1386, 0.0
      %v1588 = vsel %vm1558, %v1387, 0.0
      %v1589 = vsel %vm1559, %v1388, 0.0
      %v1590 = vsel %vm1560, %v1389, 0.0
      %v1591 = vsel %vm1561, %v1390, 0.0
      %v1592 = vsel %vm1562, %v1391, 0.0
      %v1593 = vsel %vm1563, %v1392, 0.0
      %v1594 = vsel %vm1564, %v1393, 0.0
      %v1595 = vsel %vm1565, %v1394, 0.0
      %v1596 = vsel %vm1566, %v1395, 0.0
      %v1597 = vsel %vm1567, %v1396, 0.0
      %v1598 = vsel %vm1568, %v1397, 0.0
      %v1599 = vsel %vm1569, %v1398, 0.0
      %v1600 = vsel %vm1570, %v1399, 0.0
      %v1601 = vsel %vm1571, %v1400, 0.0
      %v1602 = vsel %vm1572, %v1401, 0.0
      %v1603 = vsel %vm1573, %v1402, 0.0
      %v1604 = vld [vmem:[%s5] sm:$0x7]
      %v1605 = vld [vmem:[%s5 + $0x4] sm:$0x7]
      %v1606 = vld [vmem:[%s5 + $0x8] sm:$0x7]
      %v1607 = vperm.slane %v1604, 0
      %v1608 = vmul.f32 %v1574, %v1607
      %v1609 = vmul.f32 %v1575, %v1607
      %v1610 = vmul.f32 %v1577, %v1607
      %v1611 = vmul.f32 %v1578, %v1607
      %v1612 = vmul.f32 %v1580, %v1607
      %v1613 = vmul.f32 %v1581, %v1607
      %v1614 = vmul.f32 %v1583, %v1607
      %v1615 = vmul.f32 %v1584, %v1607
      %v1616 = vmul.f32 %v1586, %v1607
      %v1617 = vmul.f32 %v1587, %v1607
      %v1618 = vmul.f32 %v1589, %v1607
      %v1619 = vmul.f32 %v1590, %v1607
      %v1620 = vmul.f32 %v1592, %v1607
      %v1621 = vmul.f32 %v1593, %v1607
      %v1622 = vmul.f32 %v1595, %v1607
      %v1623 = vmul.f32 %v1596, %v1607
      %v1624 = vadd.f32 %v1608, 0.0
      %v1625 = vadd.f32 %v1609, 0.0
      %v1626 = vadd.f32 %v1610, 0.0
      %v1627 = vadd.f32 %v1611, 0.0
      %v1628 = vadd.f32 %v1612, 0.0
      %v1629 = vadd.f32 %v1613, 0.0
      %v1630 = vadd.f32 %v1614, 0.0
      %v1631 = vadd.f32 %v1615, 0.0
      %v1632 = vadd.f32 %v1616, 0.0
      %v1633 = vadd.f32 %v1617, 0.0
      %v1634 = vadd.f32 %v1618, 0.0
      %v1635 = vadd.f32 %v1619, 0.0
      %v1636 = vadd.f32 %v1620, 0.0
      %v1637 = vadd.f32 %v1621, 0.0
      %v1638 = vadd.f32 %v1622, 0.0
      %v1639 = vadd.f32 %v1623, 0.0
      %v1640 = vperm.slane %v1604, 1
      %v1641 = vmul.f32 %v1574, %v1640
      %v1642 = vmul.f32 %v1575, %v1640
      %v1643 = vmul.f32 %v1576, %v1640
      %v1644 = vmul.f32 %v1577, %v1640
      %v1645 = vmul.f32 %v1578, %v1640
      %v1646 = vmul.f32 %v1579, %v1640
      %v1647 = vmul.f32 %v1580, %v1640
      %v1648 = vmul.f32 %v1581, %v1640
      %v1649 = vmul.f32 %v1582, %v1640
      %v1650 = vmul.f32 %v1583, %v1640
      %v1651 = vmul.f32 %v1584, %v1640
      %v1652 = vmul.f32 %v1585, %v1640
      %v1653 = vmul.f32 %v1586, %v1640
      %v1654 = vmul.f32 %v1587, %v1640
      %v1655 = vmul.f32 %v1588, %v1640
      %v1656 = vmul.f32 %v1589, %v1640
      %v1657 = vmul.f32 %v1590, %v1640
      %v1658 = vmul.f32 %v1591, %v1640
      %v1659 = vmul.f32 %v1592, %v1640
      %v1660 = vmul.f32 %v1593, %v1640
      %v1661 = vmul.f32 %v1594, %v1640
      %v1662 = vmul.f32 %v1595, %v1640
      %v1663 = vmul.f32 %v1596, %v1640
      %v1664 = vmul.f32 %v1597, %v1640
      %vm1689 = vcmask 1046528
      %v1690 = vrot.slane %v1641, 1
      %v1691 = vrot.slane %v1642, 1
      %v1692 = vsel %vm1689, %v1690, %v1691
      %v1693 = vrot.slane %v1643, 1
      %v1694 = vsel %vm1689, %v1691, %v1693
      %v1695 = vrot.slane %v1644, 1
      %v1696 = vrot.slane %v1645, 1
      %v1697 = vsel %vm1689, %v1695, %v1696
      %v1698 = vrot.slane %v1646, 1
      %v1699 = vsel %vm1689, %v1696, %v1698
      %v1700 = vrot.slane %v1647, 1
      %v1701 = vrot.slane %v1648, 1
      %v1702 = vsel %vm1689, %v1700, %v1701
      %v1703 = vrot.slane %v1649, 1
      %v1704 = vsel %vm1689, %v1701, %v1703
      %v1705 = vrot.slane %v1650, 1
      %v1706 = vrot.slane %v1651, 1
      %v1707 = vsel %vm1689, %v1705, %v1706
      %v1708 = vrot.slane %v1652, 1
      %v1709 = vsel %vm1689, %v1706, %v1708
      %v1710 = vrot.slane %v1653, 1
      %v1711 = vrot.slane %v1654, 1
      %v1712 = vsel %vm1689, %v1710, %v1711
      %v1713 = vrot.slane %v1655, 1
      %v1714 = vsel %vm1689, %v1711, %v1713
      %v1715 = vrot.slane %v1656, 1
      %v1716 = vrot.slane %v1657, 1
      %v1717 = vsel %vm1689, %v1715, %v1716
      %v1718 = vrot.slane %v1658, 1
      %v1719 = vsel %vm1689, %v1716, %v1718
      %v1720 = vrot.slane %v1659, 1
      %v1721 = vrot.slane %v1660, 1
      %v1722 = vsel %vm1689, %v1720, %v1721
      %v1723 = vrot.slane %v1661, 1
      %v1724 = vsel %vm1689, %v1721, %v1723
      %v1725 = vrot.slane %v1662, 1
      %v1726 = vrot.slane %v1663, 1
      %v1727 = vsel %vm1689, %v1725, %v1726
      %v1728 = vrot.slane %v1664, 1
      %v1729 = vsel %vm1689, %v1726, %v1728
      %v1746 = vadd.f32 %v1624, %v1692
      %v1747 = vadd.f32 %v1625, %v1694
      %v1748 = vadd.f32 %v1626, %v1697
      %v1749 = vadd.f32 %v1627, %v1699
      %v1750 = vadd.f32 %v1628, %v1702
      %v1751 = vadd.f32 %v1629, %v1704
      %v1752 = vadd.f32 %v1630, %v1707
      %v1753 = vadd.f32 %v1631, %v1709
      %v1754 = vadd.f32 %v1632, %v1712
      %v1755 = vadd.f32 %v1633, %v1714
      %v1756 = vadd.f32 %v1634, %v1717
      %v1757 = vadd.f32 %v1635, %v1719
      %v1758 = vadd.f32 %v1636, %v1722
      %v1759 = vadd.f32 %v1637, %v1724
      %v1760 = vadd.f32 %v1638, %v1727
      %v1761 = vadd.f32 %v1639, %v1729
      %v1762 = vperm.slane %v1604, 2
      %v1763 = vmul.f32 %v1574, %v1762
      %v1764 = vmul.f32 %v1575, %v1762
      %v1765 = vmul.f32 %v1576, %v1762
      %v1766 = vmul.f32 %v1577, %v1762
      %v1767 = vmul.f32 %v1578, %v1762
      %v1768 = vmul.f32 %v1579, %v1762
      %v1769 = vmul.f32 %v1580, %v1762
      %v1770 = vmul.f32 %v1581, %v1762
      %v1771 = vmul.f32 %v1582, %v1762
      %v1772 = vmul.f32 %v1583, %v1762
      %v1773 = vmul.f32 %v1584, %v1762
      %v1774 = vmul.f32 %v1585, %v1762
      %v1775 = vmul.f32 %v1586, %v1762
      %v1776 = vmul.f32 %v1587, %v1762
      %v1777 = vmul.f32 %v1588, %v1762
      %v1778 = vmul.f32 %v1589, %v1762
      %v1779 = vmul.f32 %v1590, %v1762
      %v1780 = vmul.f32 %v1591, %v1762
      %v1781 = vmul.f32 %v1592, %v1762
      %v1782 = vmul.f32 %v1593, %v1762
      %v1783 = vmul.f32 %v1594, %v1762
      %v1784 = vmul.f32 %v1595, %v1762
      %v1785 = vmul.f32 %v1596, %v1762
      %v1786 = vmul.f32 %v1597, %v1762
      %vm1811 = vcmask 1045504
      %v1812 = vrot.slane %v1763, 2
      %v1813 = vrot.slane %v1764, 2
      %v1814 = vsel %vm1811, %v1812, %v1813
      %v1815 = vrot.slane %v1765, 2
      %v1816 = vsel %vm1811, %v1813, %v1815
      %v1817 = vrot.slane %v1766, 2
      %v1818 = vrot.slane %v1767, 2
      %v1819 = vsel %vm1811, %v1817, %v1818
      %v1820 = vrot.slane %v1768, 2
      %v1821 = vsel %vm1811, %v1818, %v1820
      %v1822 = vrot.slane %v1769, 2
      %v1823 = vrot.slane %v1770, 2
      %v1824 = vsel %vm1811, %v1822, %v1823
      %v1825 = vrot.slane %v1771, 2
      %v1826 = vsel %vm1811, %v1823, %v1825
      %v1827 = vrot.slane %v1772, 2
      %v1828 = vrot.slane %v1773, 2
      %v1829 = vsel %vm1811, %v1827, %v1828
      %v1830 = vrot.slane %v1774, 2
      %v1831 = vsel %vm1811, %v1828, %v1830
      %v1832 = vrot.slane %v1775, 2
      %v1833 = vrot.slane %v1776, 2
      %v1834 = vsel %vm1811, %v1832, %v1833
      %v1835 = vrot.slane %v1777, 2
      %v1836 = vsel %vm1811, %v1833, %v1835
      %v1837 = vrot.slane %v1778, 2
      %v1838 = vrot.slane %v1779, 2
      %v1839 = vsel %vm1811, %v1837, %v1838
      %v1840 = vrot.slane %v1780, 2
      %v1841 = vsel %vm1811, %v1838, %v1840
      %v1842 = vrot.slane %v1781, 2
      %v1843 = vrot.slane %v1782, 2
      %v1844 = vsel %vm1811, %v1842, %v1843
      %v1845 = vrot.slane %v1783, 2
      %v1846 = vsel %vm1811, %v1843, %v1845
      %v1847 = vrot.slane %v1784, 2
      %v1848 = vrot.slane %v1785, 2
      %v1849 = vsel %vm1811, %v1847, %v1848
      %v1850 = vrot.slane %v1786, 2
      %v1851 = vsel %vm1811, %v1848, %v1850
      %v1868 = vadd.f32 %v1746, %v1814
      %v1869 = vadd.f32 %v1747, %v1816
      %v1870 = vadd.f32 %v1748, %v1819
      %v1871 = vadd.f32 %v1749, %v1821
      %v1872 = vadd.f32 %v1750, %v1824
      %v1873 = vadd.f32 %v1751, %v1826
      %v1874 = vadd.f32 %v1752, %v1829
      %v1875 = vadd.f32 %v1753, %v1831
      %v1876 = vadd.f32 %v1754, %v1834
      %v1877 = vadd.f32 %v1755, %v1836
      %v1878 = vadd.f32 %v1756, %v1839
      %v1879 = vadd.f32 %v1757, %v1841
      %v1880 = vadd.f32 %v1758, %v1844
      %v1881 = vadd.f32 %v1759, %v1846
      %v1882 = vadd.f32 %v1760, %v1849
      %v1883 = vadd.f32 %v1761, %v1851
      %v1884 = vperm.slane %v1605, 0
      %v1885 = vmul.f32 %v1577, %v1884
      %v1886 = vmul.f32 %v1578, %v1884
      %v1887 = vmul.f32 %v1580, %v1884
      %v1888 = vmul.f32 %v1581, %v1884
      %v1889 = vmul.f32 %v1583, %v1884
      %v1890 = vmul.f32 %v1584, %v1884
      %v1891 = vmul.f32 %v1586, %v1884
      %v1892 = vmul.f32 %v1587, %v1884
      %v1893 = vmul.f32 %v1589, %v1884
      %v1894 = vmul.f32 %v1590, %v1884
      %v1895 = vmul.f32 %v1592, %v1884
      %v1896 = vmul.f32 %v1593, %v1884
      %v1897 = vmul.f32 %v1595, %v1884
      %v1898 = vmul.f32 %v1596, %v1884
      %v1899 = vmul.f32 %v1598, %v1884
      %v1900 = vmul.f32 %v1599, %v1884
      %v1901 = vadd.f32 %v1868, %v1885
      %v1902 = vadd.f32 %v1869, %v1886
      %v1903 = vadd.f32 %v1870, %v1887
      %v1904 = vadd.f32 %v1871, %v1888
      %v1905 = vadd.f32 %v1872, %v1889
      %v1906 = vadd.f32 %v1873, %v1890
      %v1907 = vadd.f32 %v1874, %v1891
      %v1908 = vadd.f32 %v1875, %v1892
      %v1909 = vadd.f32 %v1876, %v1893
      %v1910 = vadd.f32 %v1877, %v1894
      %v1911 = vadd.f32 %v1878, %v1895
      %v1912 = vadd.f32 %v1879, %v1896
      %v1913 = vadd.f32 %v1880, %v1897
      %v1914 = vadd.f32 %v1881, %v1898
      %v1915 = vadd.f32 %v1882, %v1899
      %v1916 = vadd.f32 %v1883, %v1900
      %v1917 = vperm.slane %v1605, 1
      %v1918 = vmul.f32 %v1577, %v1917
      %v1919 = vmul.f32 %v1578, %v1917
      %v1920 = vmul.f32 %v1579, %v1917
      %v1921 = vmul.f32 %v1580, %v1917
      %v1922 = vmul.f32 %v1581, %v1917
      %v1923 = vmul.f32 %v1582, %v1917
      %v1924 = vmul.f32 %v1583, %v1917
      %v1925 = vmul.f32 %v1584, %v1917
      %v1926 = vmul.f32 %v1585, %v1917
      %v1927 = vmul.f32 %v1586, %v1917
      %v1928 = vmul.f32 %v1587, %v1917
      %v1929 = vmul.f32 %v1588, %v1917
      %v1930 = vmul.f32 %v1589, %v1917
      %v1931 = vmul.f32 %v1590, %v1917
      %v1932 = vmul.f32 %v1591, %v1917
      %v1933 = vmul.f32 %v1592, %v1917
      %v1934 = vmul.f32 %v1593, %v1917
      %v1935 = vmul.f32 %v1594, %v1917
      %v1936 = vmul.f32 %v1595, %v1917
      %v1937 = vmul.f32 %v1596, %v1917
      %v1938 = vmul.f32 %v1597, %v1917
      %v1939 = vmul.f32 %v1598, %v1917
      %v1940 = vmul.f32 %v1599, %v1917
      %v1941 = vmul.f32 %v1600, %v1917
      %v1966 = vrot.slane %v1918, 1
      %v1967 = vrot.slane %v1919, 1
      %v1968 = vsel %vm1689, %v1966, %v1967
      %v1969 = vrot.slane %v1920, 1
      %v1970 = vsel %vm1689, %v1967, %v1969
      %v1971 = vrot.slane %v1921, 1
      %v1972 = vrot.slane %v1922, 1
      %v1973 = vsel %vm1689, %v1971, %v1972
      %v1974 = vrot.slane %v1923, 1
      %v1975 = vsel %vm1689, %v1972, %v1974
      %v1976 = vrot.slane %v1924, 1
      %v1977 = vrot.slane %v1925, 1
      %v1978 = vsel %vm1689, %v1976, %v1977
      %v1979 = vrot.slane %v1926, 1
      %v1980 = vsel %vm1689, %v1977, %v1979
      %v1981 = vrot.slane %v1927, 1
      %v1982 = vrot.slane %v1928, 1
      %v1983 = vsel %vm1689, %v1981, %v1982
      %v1984 = vrot.slane %v1929, 1
      %v1985 = vsel %vm1689, %v1982, %v1984
      %v1986 = vrot.slane %v1930, 1
      %v1987 = vrot.slane %v1931, 1
      %v1988 = vsel %vm1689, %v1986, %v1987
      %v1989 = vrot.slane %v1932, 1
      %v1990 = vsel %vm1689, %v1987, %v1989
      %v1991 = vrot.slane %v1933, 1
      %v1992 = vrot.slane %v1934, 1
      %v1993 = vsel %vm1689, %v1991, %v1992
      %v1994 = vrot.slane %v1935, 1
      %v1995 = vsel %vm1689, %v1992, %v1994
      %v1996 = vrot.slane %v1936, 1
      %v1997 = vrot.slane %v1937, 1
      %v1998 = vsel %vm1689, %v1996, %v1997
      %v1999 = vrot.slane %v1938, 1
      %v2000 = vsel %vm1689, %v1997, %v1999
      %v2001 = vrot.slane %v1939, 1
      %v2002 = vrot.slane %v1940, 1
      %v2003 = vsel %vm1689, %v2001, %v2002
      %v2004 = vrot.slane %v1941, 1
      %v2005 = vsel %vm1689, %v2002, %v2004
      %v2022 = vadd.f32 %v1901, %v1968
      %v2023 = vadd.f32 %v1902, %v1970
      %v2024 = vadd.f32 %v1903, %v1973
      %v2025 = vadd.f32 %v1904, %v1975
      %v2026 = vadd.f32 %v1905, %v1978
      %v2027 = vadd.f32 %v1906, %v1980
      %v2028 = vadd.f32 %v1907, %v1983
      %v2029 = vadd.f32 %v1908, %v1985
      %v2030 = vadd.f32 %v1909, %v1988
      %v2031 = vadd.f32 %v1910, %v1990
      %v2032 = vadd.f32 %v1911, %v1993
      %v2033 = vadd.f32 %v1912, %v1995
      %v2034 = vadd.f32 %v1913, %v1998
      %v2035 = vadd.f32 %v1914, %v2000
      %v2036 = vadd.f32 %v1915, %v2003
      %v2037 = vadd.f32 %v1916, %v2005
      %v2038 = vperm.slane %v1605, 2
      %v2039 = vmul.f32 %v1577, %v2038
      %v2040 = vmul.f32 %v1578, %v2038
      %v2041 = vmul.f32 %v1579, %v2038
      %v2042 = vmul.f32 %v1580, %v2038
      %v2043 = vmul.f32 %v1581, %v2038
      %v2044 = vmul.f32 %v1582, %v2038
      %v2045 = vmul.f32 %v1583, %v2038
      %v2046 = vmul.f32 %v1584, %v2038
      %v2047 = vmul.f32 %v1585, %v2038
      %v2048 = vmul.f32 %v1586, %v2038
      %v2049 = vmul.f32 %v1587, %v2038
      %v2050 = vmul.f32 %v1588, %v2038
      %v2051 = vmul.f32 %v1589, %v2038
      %v2052 = vmul.f32 %v1590, %v2038
      %v2053 = vmul.f32 %v1591, %v2038
      %v2054 = vmul.f32 %v1592, %v2038
      %v2055 = vmul.f32 %v1593, %v2038
      %v2056 = vmul.f32 %v1594, %v2038
      %v2057 = vmul.f32 %v1595, %v2038
      %v2058 = vmul.f32 %v1596, %v2038
      %v2059 = vmul.f32 %v1597, %v2038
      %v2060 = vmul.f32 %v1598, %v2038
      %v2061 = vmul.f32 %v1599, %v2038
      %v2062 = vmul.f32 %v1600, %v2038
      %v2087 = vrot.slane %v2039, 2
      %v2088 = vrot.slane %v2040, 2
      %v2089 = vsel %vm1811, %v2087, %v2088
      %v2090 = vrot.slane %v2041, 2
      %v2091 = vsel %vm1811, %v2088, %v2090
      %v2092 = vrot.slane %v2042, 2
      %v2093 = vrot.slane %v2043, 2
      %v2094 = vsel %vm1811, %v2092, %v2093
      %v2095 = vrot.slane %v2044, 2
      %v2096 = vsel %vm1811, %v2093, %v2095
      %v2097 = vrot.slane %v2045, 2
      %v2098 = vrot.slane %v2046, 2
      %v2099 = vsel %vm1811, %v2097, %v2098
      %v2100 = vrot.slane %v2047, 2
      %v2101 = vsel %vm1811, %v2098, %v2100
      %v2102 = vrot.slane %v2048, 2
      %v2103 = vrot.slane %v2049, 2
      %v2104 = vsel %vm1811, %v2102, %v2103
      %v2105 = vrot.slane %v2050, 2
      %v2106 = vsel %vm1811, %v2103, %v2105
      %v2107 = vrot.slane %v2051, 2
      %v2108 = vrot.slane %v2052, 2
      %v2109 = vsel %vm1811, %v2107, %v2108
      %v2110 = vrot.slane %v2053, 2
      %v2111 = vsel %vm1811, %v2108, %v2110
      %v2112 = vrot.slane %v2054, 2
      %v2113 = vrot.slane %v2055, 2
      %v2114 = vsel %vm1811, %v2112, %v2113
      %v2115 = vrot.slane %v2056, 2
      %v2116 = vsel %vm1811, %v2113, %v2115
      %v2117 = vrot.slane %v2057, 2
      %v2118 = vrot.slane %v2058, 2
      %v2119 = vsel %vm1811, %v2117, %v2118
      %v2120 = vrot.slane %v2059, 2
      %v2121 = vsel %vm1811, %v2118, %v2120
      %v2122 = vrot.slane %v2060, 2
      %v2123 = vrot.slane %v2061, 2
      %v2124 = vsel %vm1811, %v2122, %v2123
      %v2125 = vrot.slane %v2062, 2
      %v2126 = vsel %vm1811, %v2123, %v2125
      %v2143 = vadd.f32 %v2022, %v2089
      %v2144 = vadd.f32 %v2023, %v2091
      %v2145 = vadd.f32 %v2024, %v2094
      %v2146 = vadd.f32 %v2025, %v2096
      %v2147 = vadd.f32 %v2026, %v2099
      %v2148 = vadd.f32 %v2027, %v2101
      %v2149 = vadd.f32 %v2028, %v2104
      %v2150 = vadd.f32 %v2029, %v2106
      %v2151 = vadd.f32 %v2030, %v2109
      %v2152 = vadd.f32 %v2031, %v2111
      %v2153 = vadd.f32 %v2032, %v2114
      %v2154 = vadd.f32 %v2033, %v2116
      %v2155 = vadd.f32 %v2034, %v2119
      %v2156 = vadd.f32 %v2035, %v2121
      %v2157 = vadd.f32 %v2036, %v2124
      %v2158 = vadd.f32 %v2037, %v2126
      %v2159 = vperm.slane %v1606, 0
      %v2160 = vmul.f32 %v1580, %v2159
      %v2161 = vmul.f32 %v1581, %v2159
      %v2162 = vmul.f32 %v1583, %v2159
      %v2163 = vmul.f32 %v1584, %v2159
      %v2164 = vmul.f32 %v1586, %v2159
      %v2165 = vmul.f32 %v1587, %v2159
      %v2166 = vmul.f32 %v1589, %v2159
      %v2167 = vmul.f32 %v1590, %v2159
      %v2168 = vmul.f32 %v1592, %v2159
      %v2169 = vmul.f32 %v1593, %v2159
      %v2170 = vmul.f32 %v1595, %v2159
      %v2171 = vmul.f32 %v1596, %v2159
      %v2172 = vmul.f32 %v1598, %v2159
      %v2173 = vmul.f32 %v1599, %v2159
      %v2174 = vmul.f32 %v1601, %v2159
      %v2175 = vmul.f32 %v1602, %v2159
      %v2176 = vadd.f32 %v2143, %v2160
      %v2177 = vadd.f32 %v2144, %v2161
      %v2178 = vadd.f32 %v2145, %v2162
      %v2179 = vadd.f32 %v2146, %v2163
      %v2180 = vadd.f32 %v2147, %v2164
      %v2181 = vadd.f32 %v2148, %v2165
      %v2182 = vadd.f32 %v2149, %v2166
      %v2183 = vadd.f32 %v2150, %v2167
      %v2184 = vadd.f32 %v2151, %v2168
      %v2185 = vadd.f32 %v2152, %v2169
      %v2186 = vadd.f32 %v2153, %v2170
      %v2187 = vadd.f32 %v2154, %v2171
      %v2188 = vadd.f32 %v2155, %v2172
      %v2189 = vadd.f32 %v2156, %v2173
      %v2190 = vadd.f32 %v2157, %v2174
      %v2191 = vadd.f32 %v2158, %v2175
      %v2192 = vperm.slane %v1606, 1
      %v2193 = vmul.f32 %v1580, %v2192
      %v2194 = vmul.f32 %v1581, %v2192
      %v2195 = vmul.f32 %v1582, %v2192
      %v2196 = vmul.f32 %v1583, %v2192
      %v2197 = vmul.f32 %v1584, %v2192
      %v2198 = vmul.f32 %v1585, %v2192
      %v2199 = vmul.f32 %v1586, %v2192
      %v2200 = vmul.f32 %v1587, %v2192
      %v2201 = vmul.f32 %v1588, %v2192
      %v2202 = vmul.f32 %v1589, %v2192
      %v2203 = vmul.f32 %v1590, %v2192
      %v2204 = vmul.f32 %v1591, %v2192
      %v2205 = vmul.f32 %v1592, %v2192
      %v2206 = vmul.f32 %v1593, %v2192
      %v2207 = vmul.f32 %v1594, %v2192
      %v2208 = vmul.f32 %v1595, %v2192
      %v2209 = vmul.f32 %v1596, %v2192
      %v2210 = vmul.f32 %v1597, %v2192
      %v2211 = vmul.f32 %v1598, %v2192
      %v2212 = vmul.f32 %v1599, %v2192
      %v2213 = vmul.f32 %v1600, %v2192
      %v2214 = vmul.f32 %v1601, %v2192
      %v2215 = vmul.f32 %v1602, %v2192
      %v2216 = vmul.f32 %v1603, %v2192
      %v2241 = vrot.slane %v2193, 1
      %v2242 = vrot.slane %v2194, 1
      %v2243 = vsel %vm1689, %v2241, %v2242
      %v2244 = vrot.slane %v2195, 1
      %v2245 = vsel %vm1689, %v2242, %v2244
      %v2246 = vrot.slane %v2196, 1
      %v2247 = vrot.slane %v2197, 1
      %v2248 = vsel %vm1689, %v2246, %v2247
      %v2249 = vrot.slane %v2198, 1
      %v2250 = vsel %vm1689, %v2247, %v2249
      %v2251 = vrot.slane %v2199, 1
      %v2252 = vrot.slane %v2200, 1
      %v2253 = vsel %vm1689, %v2251, %v2252
      %v2254 = vrot.slane %v2201, 1
      %v2255 = vsel %vm1689, %v2252, %v2254
      %v2256 = vrot.slane %v2202, 1
      %v2257 = vrot.slane %v2203, 1
      %v2258 = vsel %vm1689, %v2256, %v2257
      %v2259 = vrot.slane %v2204, 1
      %v2260 = vsel %vm1689, %v2257, %v2259
      %v2261 = vrot.slane %v2205, 1
      %v2262 = vrot.slane %v2206, 1
      %v2263 = vsel %vm1689, %v2261, %v2262
      %v2264 = vrot.slane %v2207, 1
      %v2265 = vsel %vm1689, %v2262, %v2264
      %v2266 = vrot.slane %v2208, 1
      %v2267 = vrot.slane %v2209, 1
      %v2268 = vsel %vm1689, %v2266, %v2267
      %v2269 = vrot.slane %v2210, 1
      %v2270 = vsel %vm1689, %v2267, %v2269
      %v2271 = vrot.slane %v2211, 1
      %v2272 = vrot.slane %v2212, 1
      %v2273 = vsel %vm1689, %v2271, %v2272
      %v2274 = vrot.slane %v2213, 1
      %v2275 = vsel %vm1689, %v2272, %v2274
      %v2276 = vrot.slane %v2214, 1
      %v2277 = vrot.slane %v2215, 1
      %v2278 = vsel %vm1689, %v2276, %v2277
      %v2279 = vrot.slane %v2216, 1
      %v2280 = vsel %vm1689, %v2277, %v2279
      %v2297 = vadd.f32 %v2176, %v2243
      %v2298 = vadd.f32 %v2177, %v2245
      %v2299 = vadd.f32 %v2178, %v2248
      %v2300 = vadd.f32 %v2179, %v2250
      %v2301 = vadd.f32 %v2180, %v2253
      %v2302 = vadd.f32 %v2181, %v2255
      %v2303 = vadd.f32 %v2182, %v2258
      %v2304 = vadd.f32 %v2183, %v2260
      %v2305 = vadd.f32 %v2184, %v2263
      %v2306 = vadd.f32 %v2185, %v2265
      %v2307 = vadd.f32 %v2186, %v2268
      %v2308 = vadd.f32 %v2187, %v2270
      %v2309 = vadd.f32 %v2188, %v2273
      %v2310 = vadd.f32 %v2189, %v2275
      %v2311 = vadd.f32 %v2190, %v2278
      %v2312 = vadd.f32 %v2191, %v2280
      %v2313 = vperm.slane %v1606, 2
      %v2314 = vmul.f32 %v1580, %v2313
      %v2315 = vmul.f32 %v1581, %v2313
      %v2316 = vmul.f32 %v1582, %v2313
      %v2317 = vmul.f32 %v1583, %v2313
      %v2318 = vmul.f32 %v1584, %v2313
      %v2319 = vmul.f32 %v1585, %v2313
      %v2320 = vmul.f32 %v1586, %v2313
      %v2321 = vmul.f32 %v1587, %v2313
      %v2322 = vmul.f32 %v1588, %v2313
      %v2323 = vmul.f32 %v1589, %v2313
      %v2324 = vmul.f32 %v1590, %v2313
      %v2325 = vmul.f32 %v1591, %v2313
      %v2326 = vmul.f32 %v1592, %v2313
      %v2327 = vmul.f32 %v1593, %v2313
      %v2328 = vmul.f32 %v1594, %v2313
      %v2329 = vmul.f32 %v1595, %v2313
      %v2330 = vmul.f32 %v1596, %v2313
      %v2331 = vmul.f32 %v1597, %v2313
      %v2332 = vmul.f32 %v1598, %v2313
      %v2333 = vmul.f32 %v1599, %v2313
      %v2334 = vmul.f32 %v1600, %v2313
      %v2335 = vmul.f32 %v1601, %v2313
      %v2336 = vmul.f32 %v1602, %v2313
      %v2337 = vmul.f32 %v1603, %v2313
      %v2362 = vrot.slane %v2314, 2
      %v2363 = vrot.slane %v2315, 2
      %v2364 = vsel %vm1811, %v2362, %v2363
      %v2365 = vrot.slane %v2316, 2
      %v2366 = vsel %vm1811, %v2363, %v2365
      %v2367 = vrot.slane %v2317, 2
      %v2368 = vrot.slane %v2318, 2
      %v2369 = vsel %vm1811, %v2367, %v2368
      %v2370 = vrot.slane %v2319, 2
      %v2371 = vsel %vm1811, %v2368, %v2370
      %v2372 = vrot.slane %v2320, 2
      %v2373 = vrot.slane %v2321, 2
      %v2374 = vsel %vm1811, %v2372, %v2373
      %v2375 = vrot.slane %v2322, 2
      %v2376 = vsel %vm1811, %v2373, %v2375
      %v2377 = vrot.slane %v2323, 2
      %v2378 = vrot.slane %v2324, 2
      %v2379 = vsel %vm1811, %v2377, %v2378
      %v2380 = vrot.slane %v2325, 2
      %v2381 = vsel %vm1811, %v2378, %v2380
      %v2382 = vrot.slane %v2326, 2
      %v2383 = vrot.slane %v2327, 2
      %v2384 = vsel %vm1811, %v2382, %v2383
      %v2385 = vrot.slane %v2328, 2
      %v2386 = vsel %vm1811, %v2383, %v2385
      %v2387 = vrot.slane %v2329, 2
      %v2388 = vrot.slane %v2330, 2
      %v2389 = vsel %vm1811, %v2387, %v2388
      %v2390 = vrot.slane %v2331, 2
      %v2391 = vsel %vm1811, %v2388, %v2390
      %v2392 = vrot.slane %v2332, 2
      %v2393 = vrot.slane %v2333, 2
      %v2394 = vsel %vm1811, %v2392, %v2393
      %v2395 = vrot.slane %v2334, 2
      %v2396 = vsel %vm1811, %v2393, %v2395
      %v2397 = vrot.slane %v2335, 2
      %v2398 = vrot.slane %v2336, 2
      %v2399 = vsel %vm1811, %v2397, %v2398
      %v2400 = vrot.slane %v2337, 2
      %v2401 = vsel %vm1811, %v2398, %v2400
      %v2418 = vadd.f32 %v2297, %v2364
      %v2419 = vadd.f32 %v2298, %v2366
      %v2420 = vadd.f32 %v2299, %v2369
      %v2421 = vadd.f32 %v2300, %v2371
      %v2422 = vadd.f32 %v2301, %v2374
      %v2423 = vadd.f32 %v2302, %v2376
      %v2424 = vadd.f32 %v2303, %v2379
      %v2425 = vadd.f32 %v2304, %v2381
      %v2426 = vadd.f32 %v2305, %v2384
      %v2427 = vadd.f32 %v2306, %v2386
      %v2428 = vadd.f32 %v2307, %v2389
      %v2429 = vadd.f32 %v2308, %v2391
      %v2430 = vadd.f32 %v2309, %v2394
      %v2431 = vadd.f32 %v2310, %v2396
      %v2432 = vadd.f32 %v2311, %v2399
      %v2433 = vadd.f32 %v2312, %v2401
      %v2434 = vld [vmem:[%s6] sm:$0x1]
      %v2436 = vperm.slane %v2434, 0
      %v2438 = vadd.f32 %v2418, %v2436
      %v2439 = vadd.f32 %v2419, %v2436
      %v2440 = vadd.f32 %v2420, %v2436
      %v2441 = vadd.f32 %v2421, %v2436
      %v2442 = vadd.f32 %v2422, %v2436
      %v2443 = vadd.f32 %v2423, %v2436
      %v2444 = vadd.f32 %v2424, %v2436
      %v2445 = vadd.f32 %v2425, %v2436
      %v2446 = vadd.f32 %v2426, %v2436
      %v2447 = vadd.f32 %v2427, %v2436
      %v2448 = vadd.f32 %v2428, %v2436
      %v2449 = vadd.f32 %v2429, %v2436
      %v2450 = vadd.f32 %v2430, %v2436
      %v2451 = vadd.f32 %v2431, %v2436
      %v2452 = vadd.f32 %v2432, %v2436
      %v2453 = vadd.f32 %v2433, %v2436
      %v2454 = vmax.f32 %v2438, 0.0
      %v2455 = vmax.f32 %v2439, 0.0
      %v2456 = vmax.f32 %v2440, 0.0
      %v2457 = vmax.f32 %v2441, 0.0
      %v2458 = vmax.f32 %v2442, 0.0
      %v2459 = vmax.f32 %v2443, 0.0
      %v2460 = vmax.f32 %v2444, 0.0
      %v2461 = vmax.f32 %v2445, 0.0
      %v2462 = vmax.f32 %v2446, 0.0
      %v2463 = vmax.f32 %v2447, 0.0
      %v2464 = vmax.f32 %v2448, 0.0
      %v2465 = vmax.f32 %v2449, 0.0
      %v2466 = vmax.f32 %v2450, 0.0
      %v2467 = vmax.f32 %v2451, 0.0
      %v2468 = vmax.f32 %v2452, 0.0
      %v2469 = vmax.f32 %v2453, 0.0
      %v2470 = vmin.f32 %v2454, 6.0
      %v2471 = vmin.f32 %v2455, 6.0
      %v2472 = vmin.f32 %v2456, 6.0
      %v2473 = vmin.f32 %v2457, 6.0
      %v2474 = vmin.f32 %v2458, 6.0
      %v2475 = vmin.f32 %v2459, 6.0
      %v2476 = vmin.f32 %v2460, 6.0
      %v2477 = vmin.f32 %v2461, 6.0
      %v2478 = vmin.f32 %v2462, 6.0
      %v2479 = vmin.f32 %v2463, 6.0
      %v2480 = vmin.f32 %v2464, 6.0
      %v2481 = vmin.f32 %v2465, 6.0
      %v2482 = vmin.f32 %v2466, 6.0
      %v2483 = vmin.f32 %v2467, 6.0
      %v2484 = vmin.f32 %v2468, 6.0
      %v2485 = vmin.f32 %v2469, 6.0
      %v2486 = vld [vmem:[%s7] sm:$0xff]
      %2488 = vset.pattern.permute.xlu0 0
      %2489 = vperm.xlu0 %2488, %v2470
      %v2490 = vpop.permute.xlu0 %2489
      %2493 = vset.pattern.permute.xlu0 0
      %2494 = vperm.xlu0 %2493, %v2471
      %v2495 = vpop.permute.xlu0 %2494
      %2498 = vset.pattern.permute.xlu0 0
      %2499 = vperm.xlu0 %2498, %v2472
      %v2500 = vpop.permute.xlu0 %2499
      %2503 = vset.pattern.permute.xlu0 0
      %2504 = vperm.xlu0 %2503, %v2473
      %v2505 = vpop.permute.xlu0 %2504
      %2508 = vset.pattern.permute.xlu0 0
      %2509 = vperm.xlu0 %2508, %v2474
      %v2510 = vpop.permute.xlu0 %2509
      %2513 = vset.pattern.permute.xlu0 0
      %2514 = vperm.xlu0 %2513, %v2475
      %v2515 = vpop.permute.xlu0 %2514
      %2518 = vset.pattern.permute.xlu0 0
      %2519 = vperm.xlu0 %2518, %v2476
      %v2520 = vpop.permute.xlu0 %2519
      %2523 = vset.pattern.permute.xlu0 0
      %2524 = vperm.xlu0 %2523, %v2477
      %v2525 = vpop.permute.xlu0 %2524
      %2528 = vset.pattern.permute.xlu0 0
      %2529 = vperm.xlu0 %2528, %v2478
      %v2530 = vpop.permute.xlu0 %2529
      %2533 = vset.pattern.permute.xlu0 0
      %2534 = vperm.xlu0 %2533, %v2479
      %v2535 = vpop.permute.xlu0 %2534
      %2538 = vset.pattern.permute.xlu0 0
      %2539 = vperm.xlu0 %2538, %v2480
      %v2540 = vpop.permute.xlu0 %2539
      %2543 = vset.pattern.permute.xlu0 0
      %2544 = vperm.xlu0 %2543, %v2481
      %v2545 = vpop.permute.xlu0 %2544
      %2548 = vset.pattern.permute.xlu0 0
      %2549 = vperm.xlu0 %2548, %v2482
      %v2550 = vpop.permute.xlu0 %2549
      %2553 = vset.pattern.permute.xlu0 0
      %2554 = vperm.xlu0 %2553, %v2483
      %v2555 = vpop.permute.xlu0 %2554
      %2558 = vset.pattern.permute.xlu0 0
      %2559 = vperm.xlu0 %2558, %v2484
      %v2560 = vpop.permute.xlu0 %2559
      %2563 = vset.pattern.permute.xlu0 0
      %2564 = vperm.xlu0 %2563, %v2485
      %v2565 = vpop.permute.xlu0 %2564
      %v2567 = vperm.slane %v2486, 0
      %v2568 = vmul.f32 %v2490, %v2567
      %v2569 = vmul.f32 %v2495, %v2567
      %v2570 = vmul.f32 %v2500, %v2567
      %v2571 = vmul.f32 %v2505, %v2567
      %v2572 = vmul.f32 %v2510, %v2567
      %v2573 = vmul.f32 %v2515, %v2567
      %v2574 = vmul.f32 %v2520, %v2567
      %v2575 = vmul.f32 %v2525, %v2567
      %v2576 = vmul.f32 %v2530, %v2567
      %v2577 = vmul.f32 %v2535, %v2567
      %v2578 = vmul.f32 %v2540, %v2567
      %v2579 = vmul.f32 %v2545, %v2567
      %v2580 = vmul.f32 %v2550, %v2567
      %v2581 = vmul.f32 %v2555, %v2567
      %v2582 = vmul.f32 %v2560, %v2567
      %v2583 = vmul.f32 %v2565, %v2567
      %2584 = vset.pattern.permute.xlu0 1
      %2585 = vperm.xlu0 %2584, %v2470
      %v2586 = vpop.permute.xlu0 %2585
      %2588 = vset.pattern.permute.xlu0 1
      %2589 = vperm.xlu0 %2588, %v2471
      %v2590 = vpop.permute.xlu0 %2589
      %2592 = vset.pattern.permute.xlu0 1
      %2593 = vperm.xlu0 %2592, %v2472
      %v2594 = vpop.permute.xlu0 %2593
      %2596 = vset.pattern.permute.xlu0 1
      %2597 = vperm.xlu0 %2596, %v2473
      %v2598 = vpop.permute.xlu0 %2597
      %2600 = vset.pattern.permute.xlu0 1
      %2601 = vperm.xlu0 %2600, %v2474
      %v2602 = vpop.permute.xlu0 %2601
      %2604 = vset.pattern.permute.xlu0 1
      %2605 = vperm.xlu0 %2604, %v2475
      %v2606 = vpop.permute.xlu0 %2605
      %2608 = vset.pattern.permute.xlu0 1
      %2609 = vperm.xlu0 %2608, %v2476
      %v2610 = vpop.permute.xlu0 %2609
      %2612 = vset.pattern.permute.xlu0 1
      %2613 = vperm.xlu0 %2612, %v2477
      %v2614 = vpop.permute.xlu0 %2613
      %2616 = vset.pattern.permute.xlu0 1
      %2617 = vperm.xlu0 %2616, %v2478
      %v2618 = vpop.permute.xlu0 %2617
      %2620 = vset.pattern.permute.xlu0 1
      %2621 = vperm.xlu0 %2620, %v2479
      %v2622 = vpop.permute.xlu0 %2621
      %2624 = vset.pattern.permute.xlu0 1
      %2625 = vperm.xlu0 %2624, %v2480
      %v2626 = vpop.permute.xlu0 %2625
      %2628 = vset.pattern.permute.xlu0 1
      %2629 = vperm.xlu0 %2628, %v2481
      %v2630 = vpop.permute.xlu0 %2629
      %2632 = vset.pattern.permute.xlu0 1
      %2633 = vperm.xlu0 %2632, %v2482
      %v2634 = vpop.permute.xlu0 %2633
      %2636 = vset.pattern.permute.xlu0 1
      %2637 = vperm.xlu0 %2636, %v2483
      %v2638 = vpop.permute.xlu0 %2637
      %2640 = vset.pattern.permute.xlu0 1
      %2641 = vperm.xlu0 %2640, %v2484
      %v2642 = vpop.permute.xlu0 %2641
      %2644 = vset.pattern.permute.xlu0 1
      %2645 = vperm.xlu0 %2644, %v2485
      %v2646 = vpop.permute.xlu0 %2645
      %v2648 = vperm.slane %v2486, 1
      %v2649 = vmul.f32 %v2586, %v2648
      %v2650 = vmul.f32 %v2590, %v2648
      %v2651 = vmul.f32 %v2594, %v2648
      %v2652 = vmul.f32 %v2598, %v2648
      %v2653 = vmul.f32 %v2602, %v2648
      %v2654 = vmul.f32 %v2606, %v2648
      %v2655 = vmul.f32 %v2610, %v2648
      %v2656 = vmul.f32 %v2614, %v2648
      %v2657 = vmul.f32 %v2618, %v2648
      %v2658 = vmul.f32 %v2622, %v2648
      %v2659 = vmul.f32 %v2626, %v2648
      %v2660 = vmul.f32 %v2630, %v2648
      %v2661 = vmul.f32 %v2634, %v2648
      %v2662 = vmul.f32 %v2638, %v2648
      %v2663 = vmul.f32 %v2642, %v2648
      %v2664 = vmul.f32 %v2646, %v2648
      %v2665 = vadd.f32 %v2568, %v2649
      %v2666 = vadd.f32 %v2569, %v2650
      %v2667 = vadd.f32 %v2570, %v2651
      %v2668 = vadd.f32 %v2571, %v2652
      %v2669 = vadd.f32 %v2572, %v2653
      %v2670 = vadd.f32 %v2573, %v2654
      %v2671 = vadd.f32 %v2574, %v2655
      %v2672 = vadd.f32 %v2575, %v2656
      %v2673 = vadd.f32 %v2576, %v2657
      %v2674 = vadd.f32 %v2577, %v2658
      %v2675 = vadd.f32 %v2578, %v2659
      %v2676 = vadd.f32 %v2579, %v2660
      %v2677 = vadd.f32 %v2580, %v2661
      %v2678 = vadd.f32 %v2581, %v2662
      %v2679 = vadd.f32 %v2582, %v2663
      %v2680 = vadd.f32 %v2583, %v2664
      %2681 = vset.pattern.permute.xlu0 2
      %2682 = vperm.xlu0 %2681, %v2470
      %v2683 = vpop.permute.xlu0 %2682
      %2685 = vset.pattern.permute.xlu0 2
      %2686 = vperm.xlu0 %2685, %v2471
      %v2687 = vpop.permute.xlu0 %2686
      %2689 = vset.pattern.permute.xlu0 2
      %2690 = vperm.xlu0 %2689, %v2472
      %v2691 = vpop.permute.xlu0 %2690
      %2693 = vset.pattern.permute.xlu0 2
      %2694 = vperm.xlu0 %2693, %v2473
      %v2695 = vpop.permute.xlu0 %2694
      %2697 = vset.pattern.permute.xlu0 2
      %2698 = vperm.xlu0 %2697, %v2474
      %v2699 = vpop.permute.xlu0 %2698
      %2701 = vset.pattern.permute.xlu0 2
      %2702 = vperm.xlu0 %2701, %v2475
      %v2703 = vpop.permute.xlu0 %2702
      %2705 = vset.pattern.permute.xlu0 2
      %2706 = vperm.xlu0 %2705, %v2476
      %v2707 = vpop.permute.xlu0 %2706
      %2709 = vset.pattern.permute.xlu0 2
      %2710 = vperm.xlu0 %2709, %v2477
      %v2711 = vpop.permute.xlu0 %2710
      %2713 = vset.pattern.permute.xlu0 2
      %2714 = vperm.xlu0 %2713, %v2478
      %v2715 = vpop.permute.xlu0 %2714
      %2717 = vset.pattern.permute.xlu0 2
      %2718 = vperm.xlu0 %2717, %v2479
      %v2719 = vpop.permute.xlu0 %2718
      %2721 = vset.pattern.permute.xlu0 2
      %2722 = vperm.xlu0 %2721, %v2480
      %v2723 = vpop.permute.xlu0 %2722
      %2725 = vset.pattern.permute.xlu0 2
      %2726 = vperm.xlu0 %2725, %v2481
      %v2727 = vpop.permute.xlu0 %2726
      %2729 = vset.pattern.permute.xlu0 2
      %2730 = vperm.xlu0 %2729, %v2482
      %v2731 = vpop.permute.xlu0 %2730
      %2733 = vset.pattern.permute.xlu0 2
      %2734 = vperm.xlu0 %2733, %v2483
      %v2735 = vpop.permute.xlu0 %2734
      %2737 = vset.pattern.permute.xlu0 2
      %2738 = vperm.xlu0 %2737, %v2484
      %v2739 = vpop.permute.xlu0 %2738
      %2741 = vset.pattern.permute.xlu0 2
      %2742 = vperm.xlu0 %2741, %v2485
      %v2743 = vpop.permute.xlu0 %2742
      %v2745 = vperm.slane %v2486, 2
      %v2746 = vmul.f32 %v2683, %v2745
      %v2747 = vmul.f32 %v2687, %v2745
      %v2748 = vmul.f32 %v2691, %v2745
      %v2749 = vmul.f32 %v2695, %v2745
      %v2750 = vmul.f32 %v2699, %v2745
      %v2751 = vmul.f32 %v2703, %v2745
      %v2752 = vmul.f32 %v2707, %v2745
      %v2753 = vmul.f32 %v2711, %v2745
      %v2754 = vmul.f32 %v2715, %v2745
      %v2755 = vmul.f32 %v2719, %v2745
      %v2756 = vmul.f32 %v2723, %v2745
      %v2757 = vmul.f32 %v2727, %v2745
      %v2758 = vmul.f32 %v2731, %v2745
      %v2759 = vmul.f32 %v2735, %v2745
      %v2760 = vmul.f32 %v2739, %v2745
      %v2761 = vmul.f32 %v2743, %v2745
      %v2762 = vadd.f32 %v2665, %v2746
      %v2763 = vadd.f32 %v2666, %v2747
      %v2764 = vadd.f32 %v2667, %v2748
      %v2765 = vadd.f32 %v2668, %v2749
      %v2766 = vadd.f32 %v2669, %v2750
      %v2767 = vadd.f32 %v2670, %v2751
      %v2768 = vadd.f32 %v2671, %v2752
      %v2769 = vadd.f32 %v2672, %v2753
      %v2770 = vadd.f32 %v2673, %v2754
      %v2771 = vadd.f32 %v2674, %v2755
      %v2772 = vadd.f32 %v2675, %v2756
      %v2773 = vadd.f32 %v2676, %v2757
      %v2774 = vadd.f32 %v2677, %v2758
      %v2775 = vadd.f32 %v2678, %v2759
      %v2776 = vadd.f32 %v2679, %v2760
      %v2777 = vadd.f32 %v2680, %v2761
      %2778 = vset.pattern.permute.xlu0 3
      %2779 = vperm.xlu0 %2778, %v2470
      %v2780 = vpop.permute.xlu0 %2779
      %2782 = vset.pattern.permute.xlu0 3
      %2783 = vperm.xlu0 %2782, %v2471
      %v2784 = vpop.permute.xlu0 %2783
      %2786 = vset.pattern.permute.xlu0 3
      %2787 = vperm.xlu0 %2786, %v2472
      %v2788 = vpop.permute.xlu0 %2787
      %2790 = vset.pattern.permute.xlu0 3
      %2791 = vperm.xlu0 %2790, %v2473
      %v2792 = vpop.permute.xlu0 %2791
      %2794 = vset.pattern.permute.xlu0 3
      %2795 = vperm.xlu0 %2794, %v2474
      %v2796 = vpop.permute.xlu0 %2795
      %2798 = vset.pattern.permute.xlu0 3
      %2799 = vperm.xlu0 %2798, %v2475
      %v2800 = vpop.permute.xlu0 %2799
      %2802 = vset.pattern.permute.xlu0 3
      %2803 = vperm.xlu0 %2802, %v2476
      %v2804 = vpop.permute.xlu0 %2803
      %2806 = vset.pattern.permute.xlu0 3
      %2807 = vperm.xlu0 %2806, %v2477
      %v2808 = vpop.permute.xlu0 %2807
      %2810 = vset.pattern.permute.xlu0 3
      %2811 = vperm.xlu0 %2810, %v2478
      %v2812 = vpop.permute.xlu0 %2811
      %2814 = vset.pattern.permute.xlu0 3
      %2815 = vperm.xlu0 %2814, %v2479
      %v2816 = vpop.permute.xlu0 %2815
      %2818 = vset.pattern.permute.xlu0 3
      %2819 = vperm.xlu0 %2818, %v2480
      %v2820 = vpop.permute.xlu0 %2819
      %2822 = vset.pattern.permute.xlu0 3
      %2823 = vperm.xlu0 %2822, %v2481
      %v2824 = vpop.permute.xlu0 %2823
      %2826 = vset.pattern.permute.xlu0 3
      %2827 = vperm.xlu0 %2826, %v2482
      %v2828 = vpop.permute.xlu0 %2827
      %2830 = vset.pattern.permute.xlu0 3
      %2831 = vperm.xlu0 %2830, %v2483
      %v2832 = vpop.permute.xlu0 %2831
      %2834 = vset.pattern.permute.xlu0 3
      %2835 = vperm.xlu0 %2834, %v2484
      %v2836 = vpop.permute.xlu0 %2835
      %2838 = vset.pattern.permute.xlu0 3
      %2839 = vperm.xlu0 %2838, %v2485
      %v2840 = vpop.permute.xlu0 %2839
      %v2842 = vperm.slane %v2486, 3
      %v2843 = vmul.f32 %v2780, %v2842
      %v2844 = vmul.f32 %v2784, %v2842
      %v2845 = vmul.f32 %v2788, %v2842
      %v2846 = vmul.f32 %v2792, %v2842
      %v2847 = vmul.f32 %v2796, %v2842
      %v2848 = vmul.f32 %v2800, %v2842
      %v2849 = vmul.f32 %v2804, %v2842
      %v2850 = vmul.f32 %v2808, %v2842
      %v2851 = vmul.f32 %v2812, %v2842
      %v2852 = vmul.f32 %v2816, %v2842
      %v2853 = vmul.f32 %v2820, %v2842
      %v2854 = vmul.f32 %v2824, %v2842
      %v2855 = vmul.f32 %v2828, %v2842
      %v2856 = vmul.f32 %v2832, %v2842
      %v2857 = vmul.f32 %v2836, %v2842
      %v2858 = vmul.f32 %v2840, %v2842
      %v2859 = vadd.f32 %v2762, %v2843
      %v2860 = vadd.f32 %v2763, %v2844
      %v2861 = vadd.f32 %v2764, %v2845
      %v2862 = vadd.f32 %v2765, %v2846
      %v2863 = vadd.f32 %v2766, %v2847
      %v2864 = vadd.f32 %v2767, %v2848
      %v2865 = vadd.f32 %v2768, %v2849
      %v2866 = vadd.f32 %v2769, %v2850
      %v2867 = vadd.f32 %v2770, %v2851
      %v2868 = vadd.f32 %v2771, %v2852
      %v2869 = vadd.f32 %v2772, %v2853
      %v2870 = vadd.f32 %v2773, %v2854
      %v2871 = vadd.f32 %v2774, %v2855
      %v2872 = vadd.f32 %v2775, %v2856
      %v2873 = vadd.f32 %v2776, %v2857
      %v2874 = vadd.f32 %v2777, %v2858
      %2875 = vset.pattern.permute.xlu0 4
      %2876 = vperm.xlu0 %2875, %v2470
      %v2877 = vpop.permute.xlu0 %2876
      %2879 = vset.pattern.permute.xlu0 4
      %2880 = vperm.xlu0 %2879, %v2471
      %v2881 = vpop.permute.xlu0 %2880
      %2883 = vset.pattern.permute.xlu0 4
      %2884 = vperm.xlu0 %2883, %v2472
      %v2885 = vpop.permute.xlu0 %2884
      %2887 = vset.pattern.permute.xlu0 4
      %2888 = vperm.xlu0 %2887, %v2473
      %v2889 = vpop.permute.xlu0 %2888
      %2891 = vset.pattern.permute.xlu0 4
      %2892 = vperm.xlu0 %2891, %v2474
      %v2893 = vpop.permute.xlu0 %2892
      %2895 = vset.pattern.permute.xlu0 4
      %2896 = vperm.xlu0 %2895, %v2475
      %v2897 = vpop.permute.xlu0 %2896
      %2899 = vset.pattern.permute.xlu0 4
      %2900 = vperm.xlu0 %2899, %v2476
      %v2901 = vpop.permute.xlu0 %2900
      %2903 = vset.pattern.permute.xlu0 4
      %2904 = vperm.xlu0 %2903, %v2477
      %v2905 = vpop.permute.xlu0 %2904
      %2907 = vset.pattern.permute.xlu0 4
      %2908 = vperm.xlu0 %2907, %v2478
      %v2909 = vpop.permute.xlu0 %2908
      %2911 = vset.pattern.permute.xlu0 4
      %2912 = vperm.xlu0 %2911, %v2479
      %v2913 = vpop.permute.xlu0 %2912
      %2915 = vset.pattern.permute.xlu0 4
      %2916 = vperm.xlu0 %2915, %v2480
      %v2917 = vpop.permute.xlu0 %2916
      %2919 = vset.pattern.permute.xlu0 4
      %2920 = vperm.xlu0 %2919, %v2481
      %v2921 = vpop.permute.xlu0 %2920
      %2923 = vset.pattern.permute.xlu0 4
      %2924 = vperm.xlu0 %2923, %v2482
      %v2925 = vpop.permute.xlu0 %2924
      %2927 = vset.pattern.permute.xlu0 4
      %2928 = vperm.xlu0 %2927, %v2483
      %v2929 = vpop.permute.xlu0 %2928
      %2931 = vset.pattern.permute.xlu0 4
      %2932 = vperm.xlu0 %2931, %v2484
      %v2933 = vpop.permute.xlu0 %2932
      %2935 = vset.pattern.permute.xlu0 4
      %2936 = vperm.xlu0 %2935, %v2485
      %v2937 = vpop.permute.xlu0 %2936
      %v2939 = vperm.slane %v2486, 4
      %v2940 = vmul.f32 %v2877, %v2939
      %v2941 = vmul.f32 %v2881, %v2939
      %v2942 = vmul.f32 %v2885, %v2939
      %v2943 = vmul.f32 %v2889, %v2939
      %v2944 = vmul.f32 %v2893, %v2939
      %v2945 = vmul.f32 %v2897, %v2939
      %v2946 = vmul.f32 %v2901, %v2939
      %v2947 = vmul.f32 %v2905, %v2939
      %v2948 = vmul.f32 %v2909, %v2939
      %v2949 = vmul.f32 %v2913, %v2939
      %v2950 = vmul.f32 %v2917, %v2939
      %v2951 = vmul.f32 %v2921, %v2939
      %v2952 = vmul.f32 %v2925, %v2939
      %v2953 = vmul.f32 %v2929, %v2939
      %v2954 = vmul.f32 %v2933, %v2939
      %v2955 = vmul.f32 %v2937, %v2939
      %v2956 = vadd.f32 %v2859, %v2940
      %v2957 = vadd.f32 %v2860, %v2941
      %v2958 = vadd.f32 %v2861, %v2942
      %v2959 = vadd.f32 %v2862, %v2943
      %v2960 = vadd.f32 %v2863, %v2944
      %v2961 = vadd.f32 %v2864, %v2945
      %v2962 = vadd.f32 %v2865, %v2946
      %v2963 = vadd.f32 %v2866, %v2947
      %v2964 = vadd.f32 %v2867, %v2948
      %v2965 = vadd.f32 %v2868, %v2949
      %v2966 = vadd.f32 %v2869, %v2950
      %v2967 = vadd.f32 %v2870, %v2951
      %v2968 = vadd.f32 %v2871, %v2952
      %v2969 = vadd.f32 %v2872, %v2953
      %v2970 = vadd.f32 %v2873, %v2954
      %v2971 = vadd.f32 %v2874, %v2955
      %2972 = vset.pattern.permute.xlu0 5
      %2973 = vperm.xlu0 %2972, %v2470
      %v2974 = vpop.permute.xlu0 %2973
      %2976 = vset.pattern.permute.xlu0 5
      %2977 = vperm.xlu0 %2976, %v2471
      %v2978 = vpop.permute.xlu0 %2977
      %2980 = vset.pattern.permute.xlu0 5
      %2981 = vperm.xlu0 %2980, %v2472
      %v2982 = vpop.permute.xlu0 %2981
      %2984 = vset.pattern.permute.xlu0 5
      %2985 = vperm.xlu0 %2984, %v2473
      %v2986 = vpop.permute.xlu0 %2985
      %2988 = vset.pattern.permute.xlu0 5
      %2989 = vperm.xlu0 %2988, %v2474
      %v2990 = vpop.permute.xlu0 %2989
      %2992 = vset.pattern.permute.xlu0 5
      %2993 = vperm.xlu0 %2992, %v2475
      %v2994 = vpop.permute.xlu0 %2993
      %2996 = vset.pattern.permute.xlu0 5
      %2997 = vperm.xlu0 %2996, %v2476
      %v2998 = vpop.permute.xlu0 %2997
      %3000 = vset.pattern.permute.xlu0 5
      %3001 = vperm.xlu0 %3000, %v2477
      %v3002 = vpop.permute.xlu0 %3001
      %3004 = vset.pattern.permute.xlu0 5
      %3005 = vperm.xlu0 %3004, %v2478
      %v3006 = vpop.permute.xlu0 %3005
      %3008 = vset.pattern.permute.xlu0 5
      %3009 = vperm.xlu0 %3008, %v2479
      %v3010 = vpop.permute.xlu0 %3009
      %3012 = vset.pattern.permute.xlu0 5
      %3013 = vperm.xlu0 %3012, %v2480
      %v3014 = vpop.permute.xlu0 %3013
      %3016 = vset.pattern.permute.xlu0 5
      %3017 = vperm.xlu0 %3016, %v2481
      %v3018 = vpop.permute.xlu0 %3017
      %3020 = vset.pattern.permute.xlu0 5
      %3021 = vperm.xlu0 %3020, %v2482
      %v3022 = vpop.permute.xlu0 %3021
      %3024 = vset.pattern.permute.xlu0 5
      %3025 = vperm.xlu0 %3024, %v2483
      %v3026 = vpop.permute.xlu0 %3025
      %3028 = vset.pattern.permute.xlu0 5
      %3029 = vperm.xlu0 %3028, %v2484
      %v3030 = vpop.permute.xlu0 %3029
      %3032 = vset.pattern.permute.xlu0 5
      %3033 = vperm.xlu0 %3032, %v2485
      %v3034 = vpop.permute.xlu0 %3033
      %v3036 = vperm.slane %v2486, 5
      %v3037 = vmul.f32 %v2974, %v3036
      %v3038 = vmul.f32 %v2978, %v3036
      %v3039 = vmul.f32 %v2982, %v3036
      %v3040 = vmul.f32 %v2986, %v3036
      %v3041 = vmul.f32 %v2990, %v3036
      %v3042 = vmul.f32 %v2994, %v3036
      %v3043 = vmul.f32 %v2998, %v3036
      %v3044 = vmul.f32 %v3002, %v3036
      %v3045 = vmul.f32 %v3006, %v3036
      %v3046 = vmul.f32 %v3010, %v3036
      %v3047 = vmul.f32 %v3014, %v3036
      %v3048 = vmul.f32 %v3018, %v3036
      %v3049 = vmul.f32 %v3022, %v3036
      %v3050 = vmul.f32 %v3026, %v3036
      %v3051 = vmul.f32 %v3030, %v3036
      %v3052 = vmul.f32 %v3034, %v3036
      %v3053 = vadd.f32 %v2956, %v3037
      %v3054 = vadd.f32 %v2957, %v3038
      %v3055 = vadd.f32 %v2958, %v3039
      %v3056 = vadd.f32 %v2959, %v3040
      %v3057 = vadd.f32 %v2960, %v3041
      %v3058 = vadd.f32 %v2961, %v3042
      %v3059 = vadd.f32 %v2962, %v3043
      %v3060 = vadd.f32 %v2963, %v3044
      %v3061 = vadd.f32 %v2964, %v3045
      %v3062 = vadd.f32 %v2965, %v3046
      %v3063 = vadd.f32 %v2966, %v3047
      %v3064 = vadd.f32 %v2967, %v3048
      %v3065 = vadd.f32 %v2968, %v3049
      %v3066 = vadd.f32 %v2969, %v3050
      %v3067 = vadd.f32 %v2970, %v3051
      %v3068 = vadd.f32 %v2971, %v3052
      %3069 = vset.pattern.permute.xlu0 6
      %3070 = vperm.xlu0 %3069, %v2470
      %v3071 = vpop.permute.xlu0 %3070
      %3073 = vset.pattern.permute.xlu0 6
      %3074 = vperm.xlu0 %3073, %v2471
      %v3075 = vpop.permute.xlu0 %3074
      %3077 = vset.pattern.permute.xlu0 6
      %3078 = vperm.xlu0 %3077, %v2472
      %v3079 = vpop.permute.xlu0 %3078
      %3081 = vset.pattern.permute.xlu0 6
      %3082 = vperm.xlu0 %3081, %v2473
      %v3083 = vpop.permute.xlu0 %3082
      %3085 = vset.pattern.permute.xlu0 6
      %3086 = vperm.xlu0 %3085, %v2474
      %v3087 = vpop.permute.xlu0 %3086
      %3089 = vset.pattern.permute.xlu0 6
      %3090 = vperm.xlu0 %3089, %v2475
      %v3091 = vpop.permute.xlu0 %3090
      %3093 = vset.pattern.permute.xlu0 6
      %3094 = vperm.xlu0 %3093, %v2476
      %v3095 = vpop.permute.xlu0 %3094
      %3097 = vset.pattern.permute.xlu0 6
      %3098 = vperm.xlu0 %3097, %v2477
      %v3099 = vpop.permute.xlu0 %3098
      %3101 = vset.pattern.permute.xlu0 6
      %3102 = vperm.xlu0 %3101, %v2478
      %v3103 = vpop.permute.xlu0 %3102
      %3105 = vset.pattern.permute.xlu0 6
      %3106 = vperm.xlu0 %3105, %v2479
      %v3107 = vpop.permute.xlu0 %3106
      %3109 = vset.pattern.permute.xlu0 6
      %3110 = vperm.xlu0 %3109, %v2480
      %v3111 = vpop.permute.xlu0 %3110
      %3113 = vset.pattern.permute.xlu0 6
      %3114 = vperm.xlu0 %3113, %v2481
      %v3115 = vpop.permute.xlu0 %3114
      %3117 = vset.pattern.permute.xlu0 6
      %3118 = vperm.xlu0 %3117, %v2482
      %v3119 = vpop.permute.xlu0 %3118
      %3121 = vset.pattern.permute.xlu0 6
      %3122 = vperm.xlu0 %3121, %v2483
      %v3123 = vpop.permute.xlu0 %3122
      %3125 = vset.pattern.permute.xlu0 6
      %3126 = vperm.xlu0 %3125, %v2484
      %v3127 = vpop.permute.xlu0 %3126
      %3129 = vset.pattern.permute.xlu0 6
      %3130 = vperm.xlu0 %3129, %v2485
      %v3131 = vpop.permute.xlu0 %3130
      %v3133 = vperm.slane %v2486, 6
      %v3134 = vmul.f32 %v3071, %v3133
      %v3135 = vmul.f32 %v3075, %v3133
      %v3136 = vmul.f32 %v3079, %v3133
      %v3137 = vmul.f32 %v3083, %v3133
      %v3138 = vmul.f32 %v3087, %v3133
      %v3139 = vmul.f32 %v3091, %v3133
      %v3140 = vmul.f32 %v3095, %v3133
      %v3141 = vmul.f32 %v3099, %v3133
      %v3142 = vmul.f32 %v3103, %v3133
      %v3143 = vmul.f32 %v3107, %v3133
      %v3144 = vmul.f32 %v3111, %v3133
      %v3145 = vmul.f32 %v3115, %v3133
      %v3146 = vmul.f32 %v3119, %v3133
      %v3147 = vmul.f32 %v3123, %v3133
      %v3148 = vmul.f32 %v3127, %v3133
      %v3149 = vmul.f32 %v3131, %v3133
      %v3150 = vadd.f32 %v3053, %v3134
      %v3151 = vadd.f32 %v3054, %v3135
      %v3152 = vadd.f32 %v3055, %v3136
      %v3153 = vadd.f32 %v3056, %v3137
      %v3154 = vadd.f32 %v3057, %v3138
      %v3155 = vadd.f32 %v3058, %v3139
      %v3156 = vadd.f32 %v3059, %v3140
      %v3157 = vadd.f32 %v3060, %v3141
      %v3158 = vadd.f32 %v3061, %v3142
      %v3159 = vadd.f32 %v3062, %v3143
      %v3160 = vadd.f32 %v3063, %v3144
      %v3161 = vadd.f32 %v3064, %v3145
      %v3162 = vadd.f32 %v3065, %v3146
      %v3163 = vadd.f32 %v3066, %v3147
      %v3164 = vadd.f32 %v3067, %v3148
      %v3165 = vadd.f32 %v3068, %v3149
      %3166 = vset.pattern.permute.xlu0 7
      %3167 = vperm.xlu0 %3166, %v2470
      %v3168 = vpop.permute.xlu0 %3167
      %3170 = vset.pattern.permute.xlu0 7
      %3171 = vperm.xlu0 %3170, %v2471
      %v3172 = vpop.permute.xlu0 %3171
      %3174 = vset.pattern.permute.xlu0 7
      %3175 = vperm.xlu0 %3174, %v2472
      %v3176 = vpop.permute.xlu0 %3175
      %3178 = vset.pattern.permute.xlu0 7
      %3179 = vperm.xlu0 %3178, %v2473
      %v3180 = vpop.permute.xlu0 %3179
      %3182 = vset.pattern.permute.xlu0 7
      %3183 = vperm.xlu0 %3182, %v2474
      %v3184 = vpop.permute.xlu0 %3183
      %3186 = vset.pattern.permute.xlu0 7
      %3187 = vperm.xlu0 %3186, %v2475
      %v3188 = vpop.permute.xlu0 %3187
      %3190 = vset.pattern.permute.xlu0 7
      %3191 = vperm.xlu0 %3190, %v2476
      %v3192 = vpop.permute.xlu0 %3191
      %3194 = vset.pattern.permute.xlu0 7
      %3195 = vperm.xlu0 %3194, %v2477
      %v3196 = vpop.permute.xlu0 %3195
      %3198 = vset.pattern.permute.xlu0 7
      %3199 = vperm.xlu0 %3198, %v2478
      %v3200 = vpop.permute.xlu0 %3199
      %3202 = vset.pattern.permute.xlu0 7
      %3203 = vperm.xlu0 %3202, %v2479
      %v3204 = vpop.permute.xlu0 %3203
      %3206 = vset.pattern.permute.xlu0 7
      %3207 = vperm.xlu0 %3206, %v2480
      %v3208 = vpop.permute.xlu0 %3207
      %3210 = vset.pattern.permute.xlu0 7
      %3211 = vperm.xlu0 %3210, %v2481
      %v3212 = vpop.permute.xlu0 %3211
      %3214 = vset.pattern.permute.xlu0 7
      %3215 = vperm.xlu0 %3214, %v2482
      %v3216 = vpop.permute.xlu0 %3215
      %3218 = vset.pattern.permute.xlu0 7
      %3219 = vperm.xlu0 %3218, %v2483
      %v3220 = vpop.permute.xlu0 %3219
      %3222 = vset.pattern.permute.xlu0 7
      %3223 = vperm.xlu0 %3222, %v2484
      %v3224 = vpop.permute.xlu0 %3223
      %3226 = vset.pattern.permute.xlu0 7
      %3227 = vperm.xlu0 %3226, %v2485
      %v3228 = vpop.permute.xlu0 %3227
      %v3230 = vperm.slane %v2486, 7
      %v3231 = vmul.f32 %v3168, %v3230
      %v3232 = vmul.f32 %v3172, %v3230
      %v3233 = vmul.f32 %v3176, %v3230
      %v3234 = vmul.f32 %v3180, %v3230
      %v3235 = vmul.f32 %v3184, %v3230
      %v3236 = vmul.f32 %v3188, %v3230
      %v3237 = vmul.f32 %v3192, %v3230
      %v3238 = vmul.f32 %v3196, %v3230
      %v3239 = vmul.f32 %v3200, %v3230
      %v3240 = vmul.f32 %v3204, %v3230
      %v3241 = vmul.f32 %v3208, %v3230
      %v3242 = vmul.f32 %v3212, %v3230
      %v3243 = vmul.f32 %v3216, %v3230
      %v3244 = vmul.f32 %v3220, %v3230
      %v3245 = vmul.f32 %v3224, %v3230
      %v3246 = vmul.f32 %v3228, %v3230
      %v3247 = vadd.f32 %v3150, %v3231
      %v3248 = vadd.f32 %v3151, %v3232
      %v3249 = vadd.f32 %v3152, %v3233
      %v3250 = vadd.f32 %v3153, %v3234
      %v3251 = vadd.f32 %v3154, %v3235
      %v3252 = vadd.f32 %v3155, %v3236
      %v3253 = vadd.f32 %v3156, %v3237
      %v3254 = vadd.f32 %v3157, %v3238
      %v3255 = vadd.f32 %v3158, %v3239
      %v3256 = vadd.f32 %v3159, %v3240
      %v3257 = vadd.f32 %v3160, %v3241
      %v3258 = vadd.f32 %v3161, %v3242
      %v3259 = vadd.f32 %v3162, %v3243
      %v3260 = vadd.f32 %v3163, %v3244
      %v3261 = vadd.f32 %v3164, %v3245
      %v3262 = vadd.f32 %v3165, %v3246
      %v3263 = vld [vmem:[%s8] sm:$0x1]
      %v3265 = vperm.slane %v3263, 0
      %v3267 = vmul.f32 %v3247, %v3265
      %v3268 = vmul.f32 %v3248, %v3265
      %v3269 = vmul.f32 %v3249, %v3265
      %v3270 = vmul.f32 %v3250, %v3265
      %v3271 = vmul.f32 %v3251, %v3265
      %v3272 = vmul.f32 %v3252, %v3265
      %v3273 = vmul.f32 %v3253, %v3265
      %v3274 = vmul.f32 %v3254, %v3265
      %v3275 = vmul.f32 %v3255, %v3265
      %v3276 = vmul.f32 %v3256, %v3265
      %v3277 = vmul.f32 %v3257, %v3265
      %v3278 = vmul.f32 %v3258, %v3265
      %v3279 = vmul.f32 %v3259, %v3265
      %v3280 = vmul.f32 %v3260, %v3265
      %v3281 = vmul.f32 %v3261, %v3265
      %v3282 = vmul.f32 %v3262, %v3265
      %v3283 = vld [vmem:[%s9] sm:$0x1]
      %v3285 = vperm.slane %v3283, 0
      %v3287 = vadd.f32 %v3267, %v3285
      %v3288 = vadd.f32 %v3268, %v3285
      %v3289 = vadd.f32 %v3269, %v3285
      %v3290 = vadd.f32 %v3270, %v3285
      %v3291 = vadd.f32 %v3271, %v3285
      %v3292 = vadd.f32 %v3272, %v3285
      %v3293 = vadd.f32 %v3273, %v3285
      %v3294 = vadd.f32 %v3274, %v3285
      %v3295 = vadd.f32 %v3275, %v3285
      %v3296 = vadd.f32 %v3276, %v3285
      %v3297 = vadd.f32 %v3277, %v3285
      %v3298 = vadd.f32 %v3278, %v3285
      %v3299 = vadd.f32 %v3279, %v3285
      %v3300 = vadd.f32 %v3280, %v3285
      %v3301 = vadd.f32 %v3281, %v3285
      %v3302 = vadd.f32 %v3282, %v3285
      %v3303 = vrot.slane %v523, 1
      %v3304 = vrot.slane %v524, 1
      %v3305 = vsel %vm1689, %v3303, %v3304
      %v3306 = vrot.slane %v525, 1
      %v3307 = vsel %vm1689, %v3304, %v3306
      %v3308 = vrot.slane %v526, 1
      %v3309 = vrot.slane %v527, 1
      %v3310 = vsel %vm1689, %v3308, %v3309
      %v3311 = vrot.slane %v528, 1
      %v3312 = vsel %vm1689, %v3309, %v3311
      %v3313 = vrot.slane %v529, 1
      %v3314 = vrot.slane %v530, 1
      %v3315 = vsel %vm1689, %v3313, %v3314
      %v3316 = vrot.slane %v531, 1
      %v3317 = vsel %vm1689, %v3314, %v3316
      %v3318 = vrot.slane %v532, 1
      %v3319 = vrot.slane %v533, 1
      %v3320 = vsel %vm1689, %v3318, %v3319
      %v3321 = vrot.slane %v534, 1
      %v3322 = vsel %vm1689, %v3319, %v3321
      %v3323 = vrot.slane %v535, 1
      %v3324 = vrot.slane %v536, 1
      %v3325 = vsel %vm1689, %v3323, %v3324
      %v3326 = vrot.slane %v537, 1
      %v3327 = vsel %vm1689, %v3324, %v3326
      %v3328 = vrot.slane %v538, 1
      %v3329 = vrot.slane %v539, 1
      %v3330 = vsel %vm1689, %v3328, %v3329
      %v3331 = vrot.slane %v540, 1
      %v3332 = vsel %vm1689, %v3329, %v3331
      %v3333 = vrot.slane %v541, 1
      %v3334 = vrot.slane %v542, 1
      %v3335 = vsel %vm1689, %v3333, %v3334
      %v3336 = vrot.slane %v543, 1
      %v3337 = vsel %vm1689, %v3334, %v3336
      %v3338 = vrot.slane %v544, 1
      %v3339 = vrot.slane %v545, 1
      %v3340 = vsel %vm1689, %v3338, %v3339
      %v3341 = vrot.slane %v546, 1
      %v3342 = vsel %vm1689, %v3339, %v3341
      %v3359 = vadd.f32 %v3287, %v3305
      %v3360 = vadd.f32 %v3288, %v3307
      %v3361 = vadd.f32 %v3289, %v3310
      %v3362 = vadd.f32 %v3290, %v3312
      %v3363 = vadd.f32 %v3291, %v3315
      %v3364 = vadd.f32 %v3292, %v3317
      %v3365 = vadd.f32 %v3293, %v3320
      %v3366 = vadd.f32 %v3294, %v3322
      %v3367 = vadd.f32 %v3295, %v3325
      %v3368 = vadd.f32 %v3296, %v3327
      %v3369 = vadd.f32 %v3297, %v3330
      %v3370 = vadd.f32 %v3298, %v3332
      %v3371 = vadd.f32 %v3299, %v3335
      %v3372 = vadd.f32 %v3300, %v3337
      %v3373 = vadd.f32 %v3301, %v3340
      %v3374 = vadd.f32 %v3302, %v3342
      %3375 = vst.msk [vmem:[%s455] sm:$0xff] %vm481, %v3359
      %3376 = vst.msk [vmem:[%s455 + $0x8] sm:$0xff] %vm481, %v3360
      %3377 = vst.msk [vmem:[%s455 + $0x10] sm:$0xff] %vm481, %v3361
      %3378 = vst.msk [vmem:[%s455 + $0x18] sm:$0xff] %vm481, %v3362
      %3379 = vst.msk [vmem:[%s455 + $0x20] sm:$0xff] %vm481, %v3363
      %3380 = vst.msk [vmem:[%s455 + $0x28] sm:$0xff] %vm481, %v3364
      %3381 = vst.msk [vmem:[%s455 + $0x30] sm:$0xff] %vm481, %v3365
      %3382 = vst.msk [vmem:[%s455 + $0x38] sm:$0xff] %vm481, %v3366
      %3383 = vst.msk [vmem:[%s455 + $0x40] sm:$0xff] %vm481, %v3367
      %3384 = vst.msk [vmem:[%s455 + $0x48] sm:$0xff] %vm481, %v3368
      %3385 = vst.msk [vmem:[%s455 + $0x50] sm:$0xff] %vm481, %v3369
      %3386 = vst.msk [vmem:[%s455 + $0x58] sm:$0xff] %vm481, %v3370
      %3387 = vst.msk [vmem:[%s455 + $0x60] sm:$0xff] %vm481, %v3371
      %3388 = vst.msk [vmem:[%s455 + $0x68] sm:$0xff] %vm481, %v3372
      %3389 = vst.msk [vmem:[%s455 + $0x70] sm:$0xff] %vm481, %v3373
      %3390 = vst.msk [vmem:[%s455 + $0x78] sm:$0xff] %vm481, %v3374
      %s3391 = smul.u32 8, %s26
      %p3392 = scmp.lt.s32.totalorder %s25, 1
      %s3393 = scalar_select %p3392, %s25, 1
      %p3394 = scmp.lt.s32.totalorder %s3391, 15
      %s3395 = scalar_select %p3394, %s3391, 15
      %s3396 = smul.addr %s3395, 2
      %s3397 = smul.addr %s3393, 32
      %s3398 = sadd.s32 %s3396, %s3397
      %s3399 = smul.addr %s3398, 8
      %s3400 = scalar_lea.vmem %s10, %s3399
      // Predicated region
      $region61: #{inverted_residual_forward.1} parent=59 // pred_check
        %p3401 = pneg %p281
      $region62: #{inverted_residual_forward.1} parent=59 // pred_check_branch
        %3403 = sbr.rel (%p3401) target = $region64
      $region63: #{inverted_residual_forward.1} parent=59 // pred_region
        %s3404 = smul.u32 8, %s26
      $region64: #{inverted_residual_forward.1} parent=59 // pred_fallthru
        _
    $region60: #{inverted_residual_forward.1} parent=5 // pred_fallthru
      _
    %p3405 = scmp.le.s32.totalorder 2, %s16
    // Predicated region
    $region65: #{inverted_residual_forward.1} parent=5 // pred_check
      %p3406 = pneg %p3405
    $region66: #{inverted_residual_forward.1} parent=5 // pred_check_branch
      %3408 = sbr.rel (%p3406) target = $region68
    $region67: #{inverted_residual_forward.1} parent=5 // pred_region
      %s3409 = ssub.s32 %s16, 2
      // Predicated region
      $region69: #{inverted_residual_forward.1} parent=67 // pred_check
        %p3410 = pneg %p287
      $region70: #{inverted_residual_forward.1} parent=67 // pred_check_branch
        %3412 = sbr.rel (%p3410) target = $region72
      $region71: #{inverted_residual_forward.1} parent=67 // pred_region
        %s3413 = smul.u32 8, %s28
        %p3414 = scmp.lt.s32.totalorder %s27, 1
        %s3415 = scalar_select %p3414, %s27, 1
        %p3416 = scmp.lt.s32.totalorder %s3413, 15
        %s3417 = scalar_select %p3416, %s3413, 15
        %s3418 = smul.addr %s3417, 2
        %s3419 = smul.addr %s3415, 32
        %s3420 = sadd.s32 %s3418, %s3419
        %s3421 = smul.addr %s3420, 8
        %s3422 = scalar_lea.vmem %s10, %s3421
      $region72: #{inverted_residual_forward.1} parent=67 // pred_fallthru
        _
    $region68: #{inverted_residual_forward.1} parent=5 // pred_fallthru
      _
  $region6: #{inverted_residual_forward.1} parent=0 // loop_footer
    %s20 = sadd.s32 1, %s16
  $region7: #{inverted_residual_forward.1} parent=0 // loop_footer_branch
    %15 = sbr.rel target = $region3
  $region8: #{inverted_residual_forward.1} parent=0 // loop_exit
    _

</llo_original>
